<compile_context>
chip_gen: v7x
topology: tpu7x:2x2x1
jax: 0.10.0
libtpu: 0.0.40
codegen_flags: <defaults>
</compile_context>

<pallas_src>
import functools

import jax
import jax.numpy as jnp
from jax.experimental import pallas as pl
from jax.experimental.pallas import tpu as pltpu


def _round_up(v, m):
    return ((v + m - 1) // m) * m


def _pc_rnn_gc_kernel(x_ref, h_init_ref, w_r_ref, b_r_ref, w_o_ref, b_o_ref,
                      err_ref,
                      h_post_sc, h_prime_sc,
                      *, alpha_h_prime, alpha_x, tau, with_h_inference, t_blk):
    t_block = pl.program_id(1)

    # Initialize the recurrent carry on the first time block of each batch tile.
    @pl.when(t_block == 0)
    def _():
        h_post_sc[...] = h_init_ref[...]
        h_prime_sc[...] = jnp.zeros_like(h_prime_sc)

    w_r = w_r_ref[...]                     # (S_p, S_p)
    w_o = w_o_ref[...]                     # (O_p, S_p)
    tb, s_p = h_post_sc.shape
    o_p = w_o.shape[0]

    # Hoist bias broadcasts out of the per-timestep loop (JAX does not CSE
    # broadcast_in_dim inside a traced loop body).
    b_r = jnp.broadcast_to(b_r_ref[...], (tb, s_p))
    b_o = jnp.broadcast_to(b_o_ref[...], (tb, o_p))

    inv_tau = 1.0 / tau
    ahp_over_tau = alpha_h_prime / tau

    # Contract last dim of a with last dim of b  ==  a @ b.T (no explicit
    # transposed weight copy needed; MXU handles the transposed operand).
    trans_b = (((1,), (1,)), ((), ()))

    def step(i, carry):
        h_post, h_prime = carry                         # (TB, S_p) each
        tanh_old = jnp.tanh(h_post)

        # error_h_prime = h_prime - 1/tau * (tanh(h_post) @ w_r.T + b_r - h_post)
        rec = jax.lax.dot_general(tanh_old, w_r, trans_b,
                                  preferred_element_type=jnp.float32)
        error_h_prime = h_prime - inv_tau * (rec + b_r - h_post)

        # h_prime update
        h_prime = h_prime - alpha_h_prime * error_h_prime

        # h_prior
        h_prior = h_post + h_prime
        if with_h_inference:
            corr = (1.0 - tanh_old * tanh_old) * jnp.dot(
                error_h_prime, w_r, preferred_element_type=jnp.float32)
            h_prior = h_prior + ahp_over_tau * (corr - error_h_prime)

        # readout: x_pred = tanh(h_prior) @ w_o.T + b_o
        tanh_prior = jnp.tanh(h_prior)
        x_pred = jax.lax.dot_general(tanh_prior, w_o, trans_b,
                                     preferred_element_type=jnp.float32) + b_o

        error = x_pred - x_ref[i]                       # (TB, O_p)
        err_ref[i] = error

        # posterior state
        if alpha_x > 0:
            h_post_new = h_prior - alpha_x * (1.0 - tanh_prior * tanh_prior) * jnp.dot(
                error, w_o, preferred_element_type=jnp.float32)
        else:
            h_post_new = h_prior
        return h_post_new, h_prime

    h_post, h_prime = jax.lax.fori_loop(
        0, t_blk, step, (h_post_sc[...], h_prime_sc[...]), unroll=True)

    h_post_sc[...] = h_post
    h_prime_sc[...] = h_prime


def pc_rnn_gc_forward(x, h_init, w_r, b_r, w_o, b_o, *,
                      alpha_h_prime, alpha_x, tau, with_h_inference=True,
                      t_blk=16):
    """Returns errors of shape (seq_len, batch, output_dim)."""
    seq_len, batch, output_dim = x.shape
    states_dim = w_r.shape[0]
    f32 = jnp.float32

    # --- Padding to hardware-friendly tiles (lane=128, sublane=8). -----------
    s_p = _round_up(states_dim, 128)
    o_p = _round_up(output_dim, 128)
    b_p = _round_up(batch, 8)
    if b_p > 128:
        b_p = _round_up(b_p, 128)
        tb = 128                       # batch tile (parallel grid axis)
    else:
        tb = b_p
    num_b_tiles = b_p // tb

    # Time blocking: several timesteps per grid step to amortize per-step
    # pipeline overhead.  Padded trailing timesteps only pollute state *after*
    # the real sequence, and their outputs are sliced off, so no masking needed.
    t_blk = max(1, min(int(t_blk), seq_len))
    seq_p = _round_up(seq_len, t_blk)
    num_t_blocks = seq_p // t_blk

    # Zero-padded operands (zeros are mathematically inert here).
    # TODO(synk): for large states_dim, cast weights to bf16 (f32 accumulate)
    # to halve weight DMA/VMEM; kept f32 here for exactness at small shapes.
    x_p = jnp.zeros((seq_p, b_p, o_p), f32).at[
        :seq_len, :batch, :output_dim].set(x.astype(f32))
    h0_p = jnp.zeros((b_p, s_p), f32).at[
        :batch, :states_dim].set(h_init.astype(f32))
    w_r_p = jnp.zeros((s_p, s_p), f32).at[
        :states_dim, :states_dim].set(w_r.astype(f32))
    b_r_p = jnp.zeros((1, s_p), f32).at[0, :states_dim].set(b_r.astype(f32))
    w_o_p = jnp.zeros((o_p, s_p), f32).at[
        :output_dim, :states_dim].set(w_o.astype(f32))
    b_o_p = jnp.zeros((1, o_p), f32).at[0, :output_dim].set(b_o.astype(f32))

    kernel = functools.partial(
        _pc_rnn_gc_kernel,
        alpha_h_prime=float(alpha_h_prime),
        alpha_x=float(alpha_x),
        tau=float(tau),
        with_h_inference=bool(with_h_inference),
        t_blk=t_blk,
    )

    grid_spec = pltpu.PrefetchScalarGridSpec(
        num_scalar_prefetch=0,
        grid=(num_b_tiles, num_t_blocks),
        in_specs=[
            pl.BlockSpec((t_blk, tb, o_p), lambda b, t: (t, b, 0)),   # x block
            pl.BlockSpec((tb, s_p), lambda b, t: (b, 0)),             # h_init
            pl.BlockSpec((s_p, s_p), lambda b, t: (0, 0)),            # w_r
            pl.BlockSpec((1, s_p), lambda b, t: (0, 0)),              # b_r
            pl.BlockSpec((o_p, s_p), lambda b, t: (0, 0)),            # w_o
            pl.BlockSpec((1, o_p), lambda b, t: (0, 0)),              # b_o
        ],
        out_specs=pl.BlockSpec((t_blk, tb, o_p), lambda b, t: (t, b, 0)),
        scratch_shapes=[
            pltpu.VMEM((tb, s_p), f32),    # h_post carry
            pltpu.VMEM((tb, s_p), f32),    # h_prime carry
        ],
    )

    # Explicit VMEM budget; capped at 64 MiB so the same code is valid on v7x.
    blk_bytes = t_blk * tb * o_p * 4
    weight_bytes = (s_p * s_p + o_p * s_p + s_p + o_p + tb * s_p) * 4
    needed = 2 * (2 * blk_bytes) + 2 * weight_bytes + 2 * tb * s_p * 4
    vmem_limit = int(min(64 * 2 ** 20, max(2 * needed, 16 * 2 ** 20)))

    errors_p = pl.pallas_call(
        kernel,
        out_shape=jax.ShapeDtypeStruct((seq_p, b_p, o_p), f32),
        grid_spec=grid_spec,
        compiler_params=pltpu.CompilerParams(
            dimension_semantics=("parallel", "arbitrary"),  # batch ∥, time seq.
            vmem_limit_bytes=vmem_limit),
    )(x_p, h0_p, w_r_p, b_r_p, w_o_p, b_o_p)

    return errors_p[:seq_len, :batch, :output_dim]


def pc_rnn_gc_reference(x, h_init, w_r, b_r, w_o, b_o, *,
                        alpha_h_prime, alpha_x, tau, with_h_inference=True):
    """Pure-JAX reference mirroring the PyTorch loop."""
    seq_len = x.shape[0]
    old_h_post = h_init
    h_prime = jnp.zeros_like(h_init)
    errs = []
    for t in range(seq_len):
        ehp = h_prime - (1.0 / tau) * (
            jnp.tanh(old_h_post) @ w_r.T + b_r[None, :] - old_h_post)
        h_prime = h_prime - alpha_h_prime * ehp
        h_prior = old_h_post + h_prime
        if with_h_inference:
            h_prior = h_prior + (alpha_h_prime / tau) * (
                (1.0 - jnp.tanh(old_h_post) ** 2) * (ehp @ w_r) - ehp)
        x_pred = jnp.tanh(h_prior) @ w_o.T + b_o[None, :]
        error = x_pred - x[t]
        errs.append(error)
        if alpha_x > 0:
            old_h_post = h_prior - alpha_x * (
                1.0 - jnp.tanh(h_prior) ** 2) * (error @ w_o)
        else:
            old_h_post = h_prior
    return jnp.stack(errs)


if __name__ == "__main__":
    # Small shapes consistent with the module's forward.
    seq_len, batch, states_dim, output_dim = 8, 4, 32, 16
    alpha_h_prime, alpha_x, tau = 0.1, 0.05, 2.0

    key = jax.random.PRNGKey(0)
    k_wo, k_bo, k_wr, k_br, k_x = jax.random.split(key, 5)

    # Deterministic parameter init (matches shapes / scaling in __init__).
    w_o = jax.random.normal(k_wo, (output_dim, states_dim), jnp.float32) / states_dim
    b_o = jax.random.normal(k_bo, (output_dim,), jnp.float32) / 10.0
    w_r = jax.random.normal(k_wr, (states_dim, states_dim), jnp.float32) / states_dim
    b_r = jax.random.normal(k_br, (states_dim,), jnp.float32) / 10.0

    x = jax.random.normal(k_x, (seq_len, batch, output_dim), jnp.float32)
    h_init = jnp.zeros((batch, states_dim), jnp.float32)   # h_init=0 in PyTorch

    errors = pc_rnn_gc_forward(
        x, h_init, w_r, b_r, w_o, b_o,
        alpha_h_prime=alpha_h_prime, alpha_x=alpha_x, tau=tau,
        with_h_inference=True)
    errors = jax.block_until_ready(errors)

    ref = pc_rnn_gc_reference(
        x, h_init, w_r, b_r, w_o, b_o,
        alpha_h_prime=alpha_h_prime, alpha_x=alpha_x, tau=tau,
        with_h_inference=True)

    assert errors.shape == (seq_len, batch, output_dim)
    assert jnp.allclose(errors, ref, atol=1e-5, rtol=1e-5), (
        float(jnp.max(jnp.abs(errors - ref))))

    print("KERNEL_OK")
</pallas_src>

<mosaic_0001>
module attributes {stable_mosaic.version = 11 : i64} {
  func.func @_pc_rnn_gc_kernel(%arg0: i32, %arg1: i32, %arg2: memref<8x8x128xf32, #tpu.memory_space<vmem>>, %arg3: memref<8x128xf32, #tpu.memory_space<vmem>>, %arg4: memref<128x128xf32, #tpu.memory_space<vmem>>, %arg5: memref<1x128xf32, #tpu.memory_space<vmem>>, %arg6: memref<128x128xf32, #tpu.memory_space<vmem>>, %arg7: memref<1x128xf32, #tpu.memory_space<vmem>>, %arg8: memref<8x8x128xf32, #tpu.memory_space<vmem>>, %arg9: memref<8x128xf32, #tpu.memory_space<vmem>>, %arg10: memref<8x128xf32, #tpu.memory_space<vmem>>) attributes {dimension_semantics = [#tpu.dimension_semantics<parallel>, #tpu.dimension_semantics<arbitrary>], iteration_bounds = array<i64: 1, 1>, scalar_prefetch = 0 : i64, scratch_operands = 2 : i64, tpu.core_type = #tpu.core_type<tc>, window_params = [{transform_indices = @transform_0, window_bounds = array<i64: 8, 8, 128>}, {transform_indices = @transform_1, window_bounds = array<i64: 8, 128>}, {pipeline_mode = #tpu.pipeline_mode<synchronous>, transform_indices = @transform_2, window_bounds = array<i64: 128, 128>}, {pipeline_mode = #tpu.pipeline_mode<synchronous>, transform_indices = @transform_3, window_bounds = array<i64: 1, 128>}, {pipeline_mode = #tpu.pipeline_mode<synchronous>, transform_indices = @transform_4, window_bounds = array<i64: 128, 128>}, {pipeline_mode = #tpu.pipeline_mode<synchronous>, transform_indices = @transform_5, window_bounds = array<i64: 1, 128>}, {transform_indices = @transform_6, window_bounds = array<i64: 8, 8, 128>}]} {
    %c0_i32 = arith.constant 0 : i32
    %0 = arith.cmpi eq, %arg1, %c0_i32 : i32
    %1 = arith.extui %0 : i1 to i32
    %c0_i32_0 = arith.constant 0 : i32
    %2 = arith.cmpi ne, %1, %c0_i32_0 : i32
    scf.if %2 {
      %c0_128 = arith.constant 0 : index
      %c0_129 = arith.constant 0 : index
      %327 = vector.load %arg3[%c0_128, %c0_129] : memref<8x128xf32, #tpu.memory_space<vmem>>, vector<8x128xf32>
      %c0_130 = arith.constant 0 : index
      %c0_131 = arith.constant 0 : index
      %328 = vector.load %arg9[%c0_130, %c0_131] : memref<8x128xf32, #tpu.memory_space<vmem>>, vector<8x128xf32>
      tpu.vector_store %arg9[%c0_130, %c0_131], %327 {strides = array<i32>} : memref<8x128xf32, #tpu.memory_space<vmem>>, vector<8x128xf32>,
      %cst_132 = arith.constant 0.000000e+00 : f32
      %329 = vector.broadcast %cst_132 : f32 to vector<8x128xf32>
      %c0_133 = arith.constant 0 : index
      %c0_134 = arith.constant 0 : index
      %330 = vector.load %arg10[%c0_133, %c0_134] : memref<8x128xf32, #tpu.memory_space<vmem>>, vector<8x128xf32>
      tpu.vector_store %arg10[%c0_133, %c0_134], %329 {strides = array<i32>} : memref<8x128xf32, #tpu.memory_space<vmem>>, vector<8x128xf32>,
    } else {
    }
    %c0 = arith.constant 0 : index
    %c0_1 = arith.constant 0 : index
    %3 = vector.load %arg4[%c0, %c0_1] : memref<128x128xf32, #tpu.memory_space<vmem>>, vector<128x128xf32>
    %c0_2 = arith.constant 0 : index
    %c0_3 = arith.constant 0 : index
    %4 = vector.load %arg6[%c0_2, %c0_3] : memref<128x128xf32, #tpu.memory_space<vmem>>, vector<128x128xf32>
    %c0_4 = arith.constant 0 : index
    %c0_5 = arith.constant 0 : index
    %5 = vector.load %arg5[%c0_4, %c0_5] : memref<1x128xf32, #tpu.memory_space<vmem>>, vector<1x128xf32>
    %6 = vector.shape_cast %5 : vector<1x128xf32> to vector<1x128xf32>
    %7 = vector.broadcast %6 : vector<1x128xf32> to vector<8x128xf32>
    %c0_6 = arith.constant 0 : index
    %c0_7 = arith.constant 0 : index
    %8 = vector.load %arg7[%c0_6, %c0_7] : memref<1x128xf32, #tpu.memory_space<vmem>>, vector<1x128xf32>
    %9 = vector.shape_cast %8 : vector<1x128xf32> to vector<1x128xf32>
    %10 = vector.broadcast %9 : vector<1x128xf32> to vector<8x128xf32>
    %c0_8 = arith.constant 0 : index
    %c0_9 = arith.constant 0 : index
    %11 = vector.load %arg9[%c0_8, %c0_9] : memref<8x128xf32, #tpu.memory_space<vmem>>, vector<8x128xf32>
    %c0_10 = arith.constant 0 : index
    %c0_11 = arith.constant 0 : index
    %12 = vector.load %arg10[%c0_10, %c0_11] : memref<8x128xf32, #tpu.memory_space<vmem>>, vector<8x128xf32>
    %c0_i32_12 = arith.constant 0 : i32
    %13 = math.tanh %11 : vector<8x128xf32>
    %cst = arith.constant dense<0.000000e+00> : vector<8x128xf32>
    %14 = tpu.matmul %13, %3, %cst {dimension_numbers = #tpu.dot_dimension_numbers<[1], [1], [0], [0], [0, 0, 1, 0], [], []>} : vector<8x128xf32>, vector<128x128xf32>, vector<8x128xf32> -> vector<8x128xf32>
    %15 = arith.addf %14, %7 : vector<8x128xf32>
    %16 = arith.subf %15, %11 : vector<8x128xf32>
    %cst_13 = arith.constant 5.000000e-01 : f32
    %17 = vector.broadcast %cst_13 : f32 to vector<8x128xf32>
    %18 = arith.mulf %17, %16 : vector<8x128xf32>
    %19 = arith.subf %12, %18 : vector<8x128xf32>
    %cst_14 = arith.constant 1.000000e-01 : f32
    %20 = vector.broadcast %cst_14 : f32 to vector<8x128xf32>
    %21 = arith.mulf %20, %19 : vector<8x128xf32>
    %22 = arith.subf %12, %21 : vector<8x128xf32>
    %23 = arith.addf %11, %22 : vector<8x128xf32>
    %24 = arith.mulf %13, %13 : vector<8x128xf32>
    %cst_15 = arith.constant 1.000000e+00 : f32
    %25 = vector.broadcast %cst_15 : f32 to vector<8x128xf32>
    %26 = arith.subf %25, %24 : vector<8x128xf32>
    %cst_16 = arith.constant dense<0.000000e+00> : vector<8x128xf32>
    %27 = tpu.matmul %19, %3, %cst_16 {dimension_numbers = #tpu.dot_dimension_numbers<[1], [0], [0], [1], [0, 0, 1, 1], [], []>} : vector<8x128xf32>, vector<128x128xf32>, vector<8x128xf32> -> vector<8x128xf32>
    %28 = arith.mulf %26, %27 : vector<8x128xf32>
    %29 = arith.subf %28, %19 : vector<8x128xf32>
    %cst_17 = arith.constant 5.000000e-02 : f32
    %30 = vector.broadcast %cst_17 : f32 to vector<8x128xf32>
    %31 = arith.mulf %30, %29 : vector<8x128xf32>
    %32 = arith.addf %23, %31 : vector<8x128xf32>
    %33 = math.tanh %32 : vector<8x128xf32>
    %cst_18 = arith.constant dense<0.000000e+00> : vector<8x128xf32>
    %34 = tpu.matmul %33, %4, %cst_18 {dimension_numbers = #tpu.dot_dimension_numbers<[1], [1], [0], [0], [0, 0, 1, 0], [], []>} : vector<8x128xf32>, vector<128x128xf32>, vector<8x128xf32> -> vector<8x128xf32>
    %35 = arith.addf %34, %10 : vector<8x128xf32>
    %36 = arith.index_cast %c0_i32_12 : i32 to index
    %c0_19 = arith.constant 0 : index
    %c0_20 = arith.constant 0 : index
    %37 = vector.load %arg2[%36, %c0_19, %c0_20] : memref<8x8x128xf32, #tpu.memory_space<vmem>>, vector<1x8x128xf32>
    %38 = vector.shape_cast %37 : vector<1x8x128xf32> to vector<8x128xf32>
    %39 = arith.subf %35, %38 : vector<8x128xf32>
    %40 = arith.index_cast %c0_i32_12 : i32 to index
    %c0_21 = arith.constant 0 : index
    %c0_22 = arith.constant 0 : index
    %41 = vector.load %arg8[%40, %c0_21, %c0_22] : memref<8x8x128xf32, #tpu.memory_space<vmem>>, vector<1x8x128xf32>
    %42 = vector.shape_cast %41 : vector<1x8x128xf32> to vector<8x128xf32>
    %43 = vector.shape_cast %39 : vector<8x128xf32> to vector<1x8x128xf32>
    tpu.vector_store %arg8[%40, %c0_21, %c0_22], %43 {strides = array<i32>} : memref<8x8x128xf32, #tpu.memory_space<vmem>>, vector<1x8x128xf32>,
    %44 = arith.mulf %33, %33 : vector<8x128xf32>
    %cst_23 = arith.constant 1.000000e+00 : f32
    %45 = vector.broadcast %cst_23 : f32 to vector<8x128xf32>
    %46 = arith.subf %45, %44 : vector<8x128xf32>
    %cst_24 = arith.constant 5.000000e-02 : f32
    %47 = vector.broadcast %cst_24 : f32 to vector<8x128xf32>
    %48 = arith.mulf %47, %46 : vector<8x128xf32>
    %cst_25 = arith.constant dense<0.000000e+00> : vector<8x128xf32>
    %49 = tpu.matmul %39, %4, %cst_25 {dimension_numbers = #tpu.dot_dimension_numbers<[1], [0], [0], [1], [0, 0, 1, 1], [], []>} : vector<8x128xf32>, vector<128x128xf32>, vector<8x128xf32> -> vector<8x128xf32>
    %50 = arith.mulf %48, %49 : vector<8x128xf32>
    %51 = arith.subf %32, %50 : vector<8x128xf32>
    %c1_i32 = arith.constant 1 : i32
    %52 = math.tanh %51 : vector<8x128xf32>
    %cst_26 = arith.constant dense<0.000000e+00> : vector<8x128xf32>
    %53 = tpu.matmul %52, %3, %cst_26 {dimension_numbers = #tpu.dot_dimension_numbers<[1], [1], [0], [0], [0, 0, 1, 0], [], []>} : vector<8x128xf32>, vector<128x128xf32>, vector<8x128xf32> -> vector<8x128xf32>
    %54 = arith.addf %53, %7 : vector<8x128xf32>
    %55 = arith.subf %54, %51 : vector<8x128xf32>
    %cst_27 = arith.constant 5.000000e-01 : f32
    %56 = vector.broadcast %cst_27 : f32 to vector<8x128xf32>
    %57 = arith.mulf %56, %55 : vector<8x128xf32>
    %58 = arith.subf %22, %57 : vector<8x128xf32>
    %cst_28 = arith.constant 1.000000e-01 : f32
    %59 = vector.broadcast %cst_28 : f32 to vector<8x128xf32>
    %60 = arith.mulf %59, %58 : vector<8x128xf32>
    %61 = arith.subf %22, %60 : vector<8x128xf32>
    %62 = arith.addf %51, %61 : vector<8x128xf32>
    %63 = arith.mulf %52, %52 : vector<8x128xf32>
    %cst_29 = arith.constant 1.000000e+00 : f32
    %64 = vector.broadcast %cst_29 : f32 to vector<8x128xf32>
    %65 = arith.subf %64, %63 : vector<8x128xf32>
    %cst_30 = arith.constant dense<0.000000e+00> : vector<8x128xf32>
    %66 = tpu.matmul %58, %3, %cst_30 {dimension_numbers = #tpu.dot_dimension_numbers<[1], [0], [0], [1], [0, 0, 1, 1], [], []>} : vector<8x128xf32>, vector<128x128xf32>, vector<8x128xf32> -> vector<8x128xf32>
    %67 = arith.mulf %65, %66 : vector<8x128xf32>
    %68 = arith.subf %67, %58 : vector<8x128xf32>
    %cst_31 = arith.constant 5.000000e-02 : f32
    %69 = vector.broadcast %cst_31 : f32 to vector<8x128xf32>
    %70 = arith.mulf %69, %68 : vector<8x128xf32>
    %71 = arith.addf %62, %70 : vector<8x128xf32>
    %72 = math.tanh %71 : vector<8x128xf32>
    %cst_32 = arith.constant dense<0.000000e+00> : vector<8x128xf32>
    %73 = tpu.matmul %72, %4, %cst_32 {dimension_numbers = #tpu.dot_dimension_numbers<[1], [1], [0], [0], [0, 0, 1, 0], [], []>} : vector<8x128xf32>, vector<128x128xf32>, vector<8x128xf32> -> vector<8x128xf32>
    %74 = arith.addf %73, %10 : vector<8x128xf32>
    %75 = arith.index_cast %c1_i32 : i32 to index
    %c0_33 = arith.constant 0 : index
    %c0_34 = arith.constant 0 : index
    %76 = vector.load %arg2[%75, %c0_33, %c0_34] : memref<8x8x128xf32, #tpu.memory_space<vmem>>, vector<1x8x128xf32>
    %77 = vector.shape_cast %76 : vector<1x8x128xf32> to vector<8x128xf32>
    %78 = arith.subf %74, %77 : vector<8x128xf32>
    %79 = arith.index_cast %c1_i32 : i32 to index
    %c0_35 = arith.constant 0 : index
    %c0_36 = arith.constant 0 : index
    %80 = vector.load %arg8[%79, %c0_35, %c0_36] : memref<8x8x128xf32, #tpu.memory_space<vmem>>, vector<1x8x128xf32>
    %81 = vector.shape_cast %80 : vector<1x8x128xf32> to vector<8x128xf32>
    %82 = vector.shape_cast %78 : vector<8x128xf32> to vector<1x8x128xf32>
    tpu.vector_store %arg8[%79, %c0_35, %c0_36], %82 {strides = array<i32>} : memref<8x8x128xf32, #tpu.memory_space<vmem>>, vector<1x8x128xf32>,
    %83 = arith.mulf %72, %72 : vector<8x128xf32>
    %cst_37 = arith.constant 1.000000e+00 : f32
    %84 = vector.broadcast %cst_37 : f32 to vector<8x128xf32>
    %85 = arith.subf %84, %83 : vector<8x128xf32>
    %cst_38 = arith.constant 5.000000e-02 : f32
    %86 = vector.broadcast %cst_38 : f32 to vector<8x128xf32>
    %87 = arith.mulf %86, %85 : vector<8x128xf32>
    %cst_39 = arith.constant dense<0.000000e+00> : vector<8x128xf32>
    %88 = tpu.matmul %78, %4, %cst_39 {dimension_numbers = #tpu.dot_dimension_numbers<[1], [0], [0], [1], [0, 0, 1, 1], [], []>} : vector<8x128xf32>, vector<128x128xf32>, vector<8x128xf32> -> vector<8x128xf32>
    %89 = arith.mulf %87, %88 : vector<8x128xf32>
    %90 = arith.subf %71, %89 : vector<8x128xf32>
    %c2_i32 = arith.constant 2 : i32
    %91 = math.tanh %90 : vector<8x128xf32>
    %cst_40 = arith.constant dense<0.000000e+00> : vector<8x128xf32>
    %92 = tpu.matmul %91, %3, %cst_40 {dimension_numbers = #tpu.dot_dimension_numbers<[1], [1], [0], [0], [0, 0, 1, 0], [], []>} : vector<8x128xf32>, vector<128x128xf32>, vector<8x128xf32> -> vector<8x128xf32>
    %93 = arith.addf %92, %7 : vector<8x128xf32>
    %94 = arith.subf %93, %90 : vector<8x128xf32>
    %cst_41 = arith.constant 5.000000e-01 : f32
    %95 = vector.broadcast %cst_41 : f32 to vector<8x128xf32>
    %96 = arith.mulf %95, %94 : vector<8x128xf32>
    %97 = arith.subf %61, %96 : vector<8x128xf32>
    %cst_42 = arith.constant 1.000000e-01 : f32
    %98 = vector.broadcast %cst_42 : f32 to vector<8x128xf32>
    %99 = arith.mulf %98, %97 : vector<8x128xf32>
    %100 = arith.subf %61, %99 : vector<8x128xf32>
    %101 = arith.addf %90, %100 : vector<8x128xf32>
    %102 = arith.mulf %91, %91 : vector<8x128xf32>
    %cst_43 = arith.constant 1.000000e+00 : f32
    %103 = vector.broadcast %cst_43 : f32 to vector<8x128xf32>
    %104 = arith.subf %103, %102 : vector<8x128xf32>
    %cst_44 = arith.constant dense<0.000000e+00> : vector<8x128xf32>
    %105 = tpu.matmul %97, %3, %cst_44 {dimension_numbers = #tpu.dot_dimension_numbers<[1], [0], [0], [1], [0, 0, 1, 1], [], []>} : vector<8x128xf32>, vector<128x128xf32>, vector<8x128xf32> -> vector<8x128xf32>
    %106 = arith.mulf %104, %105 : vector<8x128xf32>
    %107 = arith.subf %106, %97 : vector<8x128xf32>
    %cst_45 = arith.constant 5.000000e-02 : f32
    %108 = vector.broadcast %cst_45 : f32 to vector<8x128xf32>
    %109 = arith.mulf %108, %107 : vector<8x128xf32>
    %110 = arith.addf %101, %109 : vector<8x128xf32>
    %111 = math.tanh %110 : vector<8x128xf32>
    %cst_46 = arith.constant dense<0.000000e+00> : vector<8x128xf32>
    %112 = tpu.matmul %111, %4, %cst_46 {dimension_numbers = #tpu.dot_dimension_numbers<[1], [1], [0], [0], [0, 0, 1, 0], [], []>} : vector<8x128xf32>, vector<128x128xf32>, vector<8x128xf32> -> vector<8x128xf32>
    %113 = arith.addf %112, %10 : vector<8x128xf32>
    %114 = arith.index_cast %c2_i32 : i32 to index
    %c0_47 = arith.constant 0 : index
    %c0_48 = arith.constant 0 : index
    %115 = vector.load %arg2[%114, %c0_47, %c0_48] : memref<8x8x128xf32, #tpu.memory_space<vmem>>, vector<1x8x128xf32>
    %116 = vector.shape_cast %115 : vector<1x8x128xf32> to vector<8x128xf32>
    %117 = arith.subf %113, %116 : vector<8x128xf32>
    %118 = arith.index_cast %c2_i32 : i32 to index
    %c0_49 = arith.constant 0 : index
    %c0_50 = arith.constant 0 : index
    %119 = vector.load %arg8[%118, %c0_49, %c0_50] : memref<8x8x128xf32, #tpu.memory_space<vmem>>, vector<1x8x128xf32>
    %120 = vector.shape_cast %119 : vector<1x8x128xf32> to vector<8x128xf32>
    %121 = vector.shape_cast %117 : vector<8x128xf32> to vector<1x8x128xf32>
    tpu.vector_store %arg8[%118, %c0_49, %c0_50], %121 {strides = array<i32>} : memref<8x8x128xf32, #tpu.memory_space<vmem>>, vector<1x8x128xf32>,
    %122 = arith.mulf %111, %111 : vector<8x128xf32>
    %cst_51 = arith.constant 1.000000e+00 : f32
    %123 = vector.broadcast %cst_51 : f32 to vector<8x128xf32>
    %124 = arith.subf %123, %122 : vector<8x128xf32>
    %cst_52 = arith.constant 5.000000e-02 : f32
    %125 = vector.broadcast %cst_52 : f32 to vector<8x128xf32>
    %126 = arith.mulf %125, %124 : vector<8x128xf32>
    %cst_53 = arith.constant dense<0.000000e+00> : vector<8x128xf32>
    %127 = tpu.matmul %117, %4, %cst_53 {dimension_numbers = #tpu.dot_dimension_numbers<[1], [0], [0], [1], [0, 0, 1, 1], [], []>} : vector<8x128xf32>, vector<128x128xf32>, vector<8x128xf32> -> vector<8x128xf32>
    %128 = arith.mulf %126, %127 : vector<8x128xf32>
    %129 = arith.subf %110, %128 : vector<8x128xf32>
    %c3_i32 = arith.constant 3 : i32
    %130 = math.tanh %129 : vector<8x128xf32>
    %cst_54 = arith.constant dense<0.000000e+00> : vector<8x128xf32>
    %131 = tpu.matmul %130, %3, %cst_54 {dimension_numbers = #tpu.dot_dimension_numbers<[1], [1], [0], [0], [0, 0, 1, 0], [], []>} : vector<8x128xf32>, vector<128x128xf32>, vector<8x128xf32> -> vector<8x128xf32>
    %132 = arith.addf %131, %7 : vector<8x128xf32>
    %133 = arith.subf %132, %129 : vector<8x128xf32>
    %cst_55 = arith.constant 5.000000e-01 : f32
    %134 = vector.broadcast %cst_55 : f32 to vector<8x128xf32>
    %135 = arith.mulf %134, %133 : vector<8x128xf32>
    %136 = arith.subf %100, %135 : vector<8x128xf32>
    %cst_56 = arith.constant 1.000000e-01 : f32
    %137 = vector.broadcast %cst_56 : f32 to vector<8x128xf32>
    %138 = arith.mulf %137, %136 : vector<8x128xf32>
    %139 = arith.subf %100, %138 : vector<8x128xf32>
    %140 = arith.addf %129, %139 : vector<8x128xf32>
    %141 = arith.mulf %130, %130 : vector<8x128xf32>
    %cst_57 = arith.constant 1.000000e+00 : f32
    %142 = vector.broadcast %cst_57 : f32 to vector<8x128xf32>
    %143 = arith.subf %142, %141 : vector<8x128xf32>
    %cst_58 = arith.constant dense<0.000000e+00> : vector<8x128xf32>
    %144 = tpu.matmul %136, %3, %cst_58 {dimension_numbers = #tpu.dot_dimension_numbers<[1], [0], [0], [1], [0, 0, 1, 1], [], []>} : vector<8x128xf32>, vector<128x128xf32>, vector<8x128xf32> -> vector<8x128xf32>
    %145 = arith.mulf %143, %144 : vector<8x128xf32>
    %146 = arith.subf %145, %136 : vector<8x128xf32>
    %cst_59 = arith.constant 5.000000e-02 : f32
    %147 = vector.broadcast %cst_59 : f32 to vector<8x128xf32>
    %148 = arith.mulf %147, %146 : vector<8x128xf32>
    %149 = arith.addf %140, %148 : vector<8x128xf32>
    %150 = math.tanh %149 : vector<8x128xf32>
    %cst_60 = arith.constant dense<0.000000e+00> : vector<8x128xf32>
    %151 = tpu.matmul %150, %4, %cst_60 {dimension_numbers = #tpu.dot_dimension_numbers<[1], [1], [0], [0], [0, 0, 1, 0], [], []>} : vector<8x128xf32>, vector<128x128xf32>, vector<8x128xf32> -> vector<8x128xf32>
    %152 = arith.addf %151, %10 : vector<8x128xf32>
    %153 = arith.index_cast %c3_i32 : i32 to index
    %c0_61 = arith.constant 0 : index
    %c0_62 = arith.constant 0 : index
    %154 = vector.load %arg2[%153, %c0_61, %c0_62] : memref<8x8x128xf32, #tpu.memory_space<vmem>>, vector<1x8x128xf32>
    %155 = vector.shape_cast %154 : vector<1x8x128xf32> to vector<8x128xf32>
    %156 = arith.subf %152, %155 : vector<8x128xf32>
    %157 = arith.index_cast %c3_i32 : i32 to index
    %c0_63 = arith.constant 0 : index
    %c0_64 = arith.constant 0 : index
    %158 = vector.load %arg8[%157, %c0_63, %c0_64] : memref<8x8x128xf32, #tpu.memory_space<vmem>>, vector<1x8x128xf32>
    %159 = vector.shape_cast %158 : vector<1x8x128xf32> to vector<8x128xf32>
    %160 = vector.shape_cast %156 : vector<8x128xf32> to vector<1x8x128xf32>
    tpu.vector_store %arg8[%157, %c0_63, %c0_64], %160 {strides = array<i32>} : memref<8x8x128xf32, #tpu.memory_space<vmem>>, vector<1x8x128xf32>,
    %161 = arith.mulf %150, %150 : vector<8x128xf32>
    %cst_65 = arith.constant 1.000000e+00 : f32
    %162 = vector.broadcast %cst_65 : f32 to vector<8x128xf32>
    %163 = arith.subf %162, %161 : vector<8x128xf32>
    %cst_66 = arith.constant 5.000000e-02 : f32
    %164 = vector.broadcast %cst_66 : f32 to vector<8x128xf32>
    %165 = arith.mulf %164, %163 : vector<8x128xf32>
    %cst_67 = arith.constant dense<0.000000e+00> : vector<8x128xf32>
    %166 = tpu.matmul %156, %4, %cst_67 {dimension_numbers = #tpu.dot_dimension_numbers<[1], [0], [0], [1], [0, 0, 1, 1], [], []>} : vector<8x128xf32>, vector<128x128xf32>, vector<8x128xf32> -> vector<8x128xf32>
    %167 = arith.mulf %165, %166 : vector<8x128xf32>
    %168 = arith.subf %149, %167 : vector<8x128xf32>
    %c4_i32 = arith.constant 4 : i32
    %169 = math.tanh %168 : vector<8x128xf32>
    %cst_68 = arith.constant dense<0.000000e+00> : vector<8x128xf32>
    %170 = tpu.matmul %169, %3, %cst_68 {dimension_numbers = #tpu.dot_dimension_numbers<[1], [1], [0], [0], [0, 0, 1, 0], [], []>} : vector<8x128xf32>, vector<128x128xf32>, vector<8x128xf32> -> vector<8x128xf32>
    %171 = arith.addf %170, %7 : vector<8x128xf32>
    %172 = arith.subf %171, %168 : vector<8x128xf32>
    %cst_69 = arith.constant 5.000000e-01 : f32
    %173 = vector.broadcast %cst_69 : f32 to vector<8x128xf32>
    %174 = arith.mulf %173, %172 : vector<8x128xf32>
    %175 = arith.subf %139, %174 : vector<8x128xf32>
    %cst_70 = arith.constant 1.000000e-01 : f32
    %176 = vector.broadcast %cst_70 : f32 to vector<8x128xf32>
    %177 = arith.mulf %176, %175 : vector<8x128xf32>
    %178 = arith.subf %139, %177 : vector<8x128xf32>
    %179 = arith.addf %168, %178 : vector<8x128xf32>
    %180 = arith.mulf %169, %169 : vector<8x128xf32>
    %cst_71 = arith.constant 1.000000e+00 : f32
    %181 = vector.broadcast %cst_71 : f32 to vector<8x128xf32>
    %182 = arith.subf %181, %180 : vector<8x128xf32>
    %cst_72 = arith.constant dense<0.000000e+00> : vector<8x128xf32>
    %183 = tpu.matmul %175, %3, %cst_72 {dimension_numbers = #tpu.dot_dimension_numbers<[1], [0], [0], [1], [0, 0, 1, 1], [], []>} : vector<8x128xf32>, vector<128x128xf32>, vector<8x128xf32> -> vector<8x128xf32>
    %184 = arith.mulf %182, %183 : vector<8x128xf32>
    %185 = arith.subf %184, %175 : vector<8x128xf32>
    %cst_73 = arith.constant 5.000000e-02 : f32
    %186 = vector.broadcast %cst_73 : f32 to vector<8x128xf32>
    %187 = arith.mulf %186, %185 : vector<8x128xf32>
    %188 = arith.addf %179, %187 : vector<8x128xf32>
    %189 = math.tanh %188 : vector<8x128xf32>
    %cst_74 = arith.constant dense<0.000000e+00> : vector<8x128xf32>
    %190 = tpu.matmul %189, %4, %cst_74 {dimension_numbers = #tpu.dot_dimension_numbers<[1], [1], [0], [0], [0, 0, 1, 0], [], []>} : vector<8x128xf32>, vector<128x128xf32>, vector<8x128xf32> -> vector<8x128xf32>
    %191 = arith.addf %190, %10 : vector<8x128xf32>
    %192 = arith.index_cast %c4_i32 : i32 to index
    %c0_75 = arith.constant 0 : index
    %c0_76 = arith.constant 0 : index
    %193 = vector.load %arg2[%192, %c0_75, %c0_76] : memref<8x8x128xf32, #tpu.memory_space<vmem>>, vector<1x8x128xf32>
    %194 = vector.shape_cast %193 : vector<1x8x128xf32> to vector<8x128xf32>
    %195 = arith.subf %191, %194 : vector<8x128xf32>
    %196 = arith.index_cast %c4_i32 : i32 to index
    %c0_77 = arith.constant 0 : index
    %c0_78 = arith.constant 0 : index
    %197 = vector.load %arg8[%196, %c0_77, %c0_78] : memref<8x8x128xf32, #tpu.memory_space<vmem>>, vector<1x8x128xf32>
    %198 = vector.shape_cast %197 : vector<1x8x128xf32> to vector<8x128xf32>
    %199 = vector.shape_cast %195 : vector<8x128xf32> to vector<1x8x128xf32>
    tpu.vector_store %arg8[%196, %c0_77, %c0_78], %199 {strides = array<i32>} : memref<8x8x128xf32, #tpu.memory_space<vmem>>, vector<1x8x128xf32>,
    %200 = arith.mulf %189, %189 : vector<8x128xf32>
    %cst_79 = arith.constant 1.000000e+00 : f32
    %201 = vector.broadcast %cst_79 : f32 to vector<8x128xf32>
    %202 = arith.subf %201, %200 : vector<8x128xf32>
    %cst_80 = arith.constant 5.000000e-02 : f32
    %203 = vector.broadcast %cst_80 : f32 to vector<8x128xf32>
    %204 = arith.mulf %203, %202 : vector<8x128xf32>
    %cst_81 = arith.constant dense<0.000000e+00> : vector<8x128xf32>
    %205 = tpu.matmul %195, %4, %cst_81 {dimension_numbers = #tpu.dot_dimension_numbers<[1], [0], [0], [1], [0, 0, 1, 1], [], []>} : vector<8x128xf32>, vector<128x128xf32>, vector<8x128xf32> -> vector<8x128xf32>
    %206 = arith.mulf %204, %205 : vector<8x128xf32>
    %207 = arith.subf %188, %206 : vector<8x128xf32>
    %c5_i32 = arith.constant 5 : i32
    %208 = math.tanh %207 : vector<8x128xf32>
    %cst_82 = arith.constant dense<0.000000e+00> : vector<8x128xf32>
    %209 = tpu.matmul %208, %3, %cst_82 {dimension_numbers = #tpu.dot_dimension_numbers<[1], [1], [0], [0], [0, 0, 1, 0], [], []>} : vector<8x128xf32>, vector<128x128xf32>, vector<8x128xf32> -> vector<8x128xf32>
    %210 = arith.addf %209, %7 : vector<8x128xf32>
    %211 = arith.subf %210, %207 : vector<8x128xf32>
    %cst_83 = arith.constant 5.000000e-01 : f32
    %212 = vector.broadcast %cst_83 : f32 to vector<8x128xf32>
    %213 = arith.mulf %212, %211 : vector<8x128xf32>
    %214 = arith.subf %178, %213 : vector<8x128xf32>
    %cst_84 = arith.constant 1.000000e-01 : f32
    %215 = vector.broadcast %cst_84 : f32 to vector<8x128xf32>
    %216 = arith.mulf %215, %214 : vector<8x128xf32>
    %217 = arith.subf %178, %216 : vector<8x128xf32>
    %218 = arith.addf %207, %217 : vector<8x128xf32>
    %219 = arith.mulf %208, %208 : vector<8x128xf32>
    %cst_85 = arith.constant 1.000000e+00 : f32
    %220 = vector.broadcast %cst_85 : f32 to vector<8x128xf32>
    %221 = arith.subf %220, %219 : vector<8x128xf32>
    %cst_86 = arith.constant dense<0.000000e+00> : vector<8x128xf32>
    %222 = tpu.matmul %214, %3, %cst_86 {dimension_numbers = #tpu.dot_dimension_numbers<[1], [0], [0], [1], [0, 0, 1, 1], [], []>} : vector<8x128xf32>, vector<128x128xf32>, vector<8x128xf32> -> vector<8x128xf32>
    %223 = arith.mulf %221, %222 : vector<8x128xf32>
    %224 = arith.subf %223, %214 : vector<8x128xf32>
    %cst_87 = arith.constant 5.000000e-02 : f32
    %225 = vector.broadcast %cst_87 : f32 to vector<8x128xf32>
    %226 = arith.mulf %225, %224 : vector<8x128xf32>
    %227 = arith.addf %218, %226 : vector<8x128xf32>
    %228 = math.tanh %227 : vector<8x128xf32>
    %cst_88 = arith.constant dense<0.000000e+00> : vector<8x128xf32>
    %229 = tpu.matmul %228, %4, %cst_88 {dimension_numbers = #tpu.dot_dimension_numbers<[1], [1], [0], [0], [0, 0, 1, 0], [], []>} : vector<8x128xf32>, vector<128x128xf32>, vector<8x128xf32> -> vector<8x128xf32>
    %230 = arith.addf %229, %10 : vector<8x128xf32>
    %231 = arith.index_cast %c5_i32 : i32 to index
    %c0_89 = arith.constant 0 : index
    %c0_90 = arith.constant 0 : index
    %232 = vector.load %arg2[%231, %c0_89, %c0_90] : memref<8x8x128xf32, #tpu.memory_space<vmem>>, vector<1x8x128xf32>
    %233 = vector.shape_cast %232 : vector<1x8x128xf32> to vector<8x128xf32>
    %234 = arith.subf %230, %233 : vector<8x128xf32>
    %235 = arith.index_cast %c5_i32 : i32 to index
    %c0_91 = arith.constant 0 : index
    %c0_92 = arith.constant 0 : index
    %236 = vector.load %arg8[%235, %c0_91, %c0_92] : memref<8x8x128xf32, #tpu.memory_space<vmem>>, vector<1x8x128xf32>
    %237 = vector.shape_cast %236 : vector<1x8x128xf32> to vector<8x128xf32>
    %238 = vector.shape_cast %234 : vector<8x128xf32> to vector<1x8x128xf32>
    tpu.vector_store %arg8[%235, %c0_91, %c0_92], %238 {strides = array<i32>} : memref<8x8x128xf32, #tpu.memory_space<vmem>>, vector<1x8x128xf32>,
    %239 = arith.mulf %228, %228 : vector<8x128xf32>
    %cst_93 = arith.constant 1.000000e+00 : f32
    %240 = vector.broadcast %cst_93 : f32 to vector<8x128xf32>
    %241 = arith.subf %240, %239 : vector<8x128xf32>
    %cst_94 = arith.constant 5.000000e-02 : f32
    %242 = vector.broadcast %cst_94 : f32 to vector<8x128xf32>
    %243 = arith.mulf %242, %241 : vector<8x128xf32>
    %cst_95 = arith.constant dense<0.000000e+00> : vector<8x128xf32>
    %244 = tpu.matmul %234, %4, %cst_95 {dimension_numbers = #tpu.dot_dimension_numbers<[1], [0], [0], [1], [0, 0, 1, 1], [], []>} : vector<8x128xf32>, vector<128x128xf32>, vector<8x128xf32> -> vector<8x128xf32>
    %245 = arith.mulf %243, %244 : vector<8x128xf32>
    %246 = arith.subf %227, %245 : vector<8x128xf32>
    %c6_i32 = arith.constant 6 : i32
    %247 = math.tanh %246 : vector<8x128xf32>
    %cst_96 = arith.constant dense<0.000000e+00> : vector<8x128xf32>
    %248 = tpu.matmul %247, %3, %cst_96 {dimension_numbers = #tpu.dot_dimension_numbers<[1], [1], [0], [0], [0, 0, 1, 0], [], []>} : vector<8x128xf32>, vector<128x128xf32>, vector<8x128xf32> -> vector<8x128xf32>
    %249 = arith.addf %248, %7 : vector<8x128xf32>
    %250 = arith.subf %249, %246 : vector<8x128xf32>
    %cst_97 = arith.constant 5.000000e-01 : f32
    %251 = vector.broadcast %cst_97 : f32 to vector<8x128xf32>
    %252 = arith.mulf %251, %250 : vector<8x128xf32>
    %253 = arith.subf %217, %252 : vector<8x128xf32>
    %cst_98 = arith.constant 1.000000e-01 : f32
    %254 = vector.broadcast %cst_98 : f32 to vector<8x128xf32>
    %255 = arith.mulf %254, %253 : vector<8x128xf32>
    %256 = arith.subf %217, %255 : vector<8x128xf32>
    %257 = arith.addf %246, %256 : vector<8x128xf32>
    %258 = arith.mulf %247, %247 : vector<8x128xf32>
    %cst_99 = arith.constant 1.000000e+00 : f32
    %259 = vector.broadcast %cst_99 : f32 to vector<8x128xf32>
    %260 = arith.subf %259, %258 : vector<8x128xf32>
    %cst_100 = arith.constant dense<0.000000e+00> : vector<8x128xf32>
    %261 = tpu.matmul %253, %3, %cst_100 {dimension_numbers = #tpu.dot_dimension_numbers<[1], [0], [0], [1], [0, 0, 1, 1], [], []>} : vector<8x128xf32>, vector<128x128xf32>, vector<8x128xf32> -> vector<8x128xf32>
    %262 = arith.mulf %260, %261 : vector<8x128xf32>
    %263 = arith.subf %262, %253 : vector<8x128xf32>
    %cst_101 = arith.constant 5.000000e-02 : f32
    %264 = vector.broadcast %cst_101 : f32 to vector<8x128xf32>
    %265 = arith.mulf %264, %263 : vector<8x128xf32>
    %266 = arith.addf %257, %265 : vector<8x128xf32>
    %267 = math.tanh %266 : vector<8x128xf32>
    %cst_102 = arith.constant dense<0.000000e+00> : vector<8x128xf32>
    %268 = tpu.matmul %267, %4, %cst_102 {dimension_numbers = #tpu.dot_dimension_numbers<[1], [1], [0], [0], [0, 0, 1, 0], [], []>} : vector<8x128xf32>, vector<128x128xf32>, vector<8x128xf32> -> vector<8x128xf32>
    %269 = arith.addf %268, %10 : vector<8x128xf32>
    %270 = arith.index_cast %c6_i32 : i32 to index
    %c0_103 = arith.constant 0 : index
    %c0_104 = arith.constant 0 : index
    %271 = vector.load %arg2[%270, %c0_103, %c0_104] : memref<8x8x128xf32, #tpu.memory_space<vmem>>, vector<1x8x128xf32>
    %272 = vector.shape_cast %271 : vector<1x8x128xf32> to vector<8x128xf32>
    %273 = arith.subf %269, %272 : vector<8x128xf32>
    %274 = arith.index_cast %c6_i32 : i32 to index
    %c0_105 = arith.constant 0 : index
    %c0_106 = arith.constant 0 : index
    %275 = vector.load %arg8[%274, %c0_105, %c0_106] : memref<8x8x128xf32, #tpu.memory_space<vmem>>, vector<1x8x128xf32>
    %276 = vector.shape_cast %275 : vector<1x8x128xf32> to vector<8x128xf32>
    %277 = vector.shape_cast %273 : vector<8x128xf32> to vector<1x8x128xf32>
    tpu.vector_store %arg8[%274, %c0_105, %c0_106], %277 {strides = array<i32>} : memref<8x8x128xf32, #tpu.memory_space<vmem>>, vector<1x8x128xf32>,
    %278 = arith.mulf %267, %267 : vector<8x128xf32>
    %cst_107 = arith.constant 1.000000e+00 : f32
    %279 = vector.broadcast %cst_107 : f32 to vector<8x128xf32>
    %280 = arith.subf %279, %278 : vector<8x128xf32>
    %cst_108 = arith.constant 5.000000e-02 : f32
    %281 = vector.broadcast %cst_108 : f32 to vector<8x128xf32>
    %282 = arith.mulf %281, %280 : vector<8x128xf32>
    %cst_109 = arith.constant dense<0.000000e+00> : vector<8x128xf32>
    %283 = tpu.matmul %273, %4, %cst_109 {dimension_numbers = #tpu.dot_dimension_numbers<[1], [0], [0], [1], [0, 0, 1, 1], [], []>} : vector<8x128xf32>, vector<128x128xf32>, vector<8x128xf32> -> vector<8x128xf32>
    %284 = arith.mulf %282, %283 : vector<8x128xf32>
    %285 = arith.subf %266, %284 : vector<8x128xf32>
    %c7_i32 = arith.constant 7 : i32
    %286 = math.tanh %285 : vector<8x128xf32>
    %cst_110 = arith.constant dense<0.000000e+00> : vector<8x128xf32>
    %287 = tpu.matmul %286, %3, %cst_110 {dimension_numbers = #tpu.dot_dimension_numbers<[1], [1], [0], [0], [0, 0, 1, 0], [], []>} : vector<8x128xf32>, vector<128x128xf32>, vector<8x128xf32> -> vector<8x128xf32>
    %288 = arith.addf %287, %7 : vector<8x128xf32>
    %289 = arith.subf %288, %285 : vector<8x128xf32>
    %cst_111 = arith.constant 5.000000e-01 : f32
    %290 = vector.broadcast %cst_111 : f32 to vector<8x128xf32>
    %291 = arith.mulf %290, %289 : vector<8x128xf32>
    %292 = arith.subf %256, %291 : vector<8x128xf32>
    %cst_112 = arith.constant 1.000000e-01 : f32
    %293 = vector.broadcast %cst_112 : f32 to vector<8x128xf32>
    %294 = arith.mulf %293, %292 : vector<8x128xf32>
    %295 = arith.subf %256, %294 : vector<8x128xf32>
    %296 = arith.addf %285, %295 : vector<8x128xf32>
    %297 = arith.mulf %286, %286 : vector<8x128xf32>
    %cst_113 = arith.constant 1.000000e+00 : f32
    %298 = vector.broadcast %cst_113 : f32 to vector<8x128xf32>
    %299 = arith.subf %298, %297 : vector<8x128xf32>
    %cst_114 = arith.constant dense<0.000000e+00> : vector<8x128xf32>
    %300 = tpu.matmul %292, %3, %cst_114 {dimension_numbers = #tpu.dot_dimension_numbers<[1], [0], [0], [1], [0, 0, 1, 1], [], []>} : vector<8x128xf32>, vector<128x128xf32>, vector<8x128xf32> -> vector<8x128xf32>
    %301 = arith.mulf %299, %300 : vector<8x128xf32>
    %302 = arith.subf %301, %292 : vector<8x128xf32>
    %cst_115 = arith.constant 5.000000e-02 : f32
    %303 = vector.broadcast %cst_115 : f32 to vector<8x128xf32>
    %304 = arith.mulf %303, %302 : vector<8x128xf32>
    %305 = arith.addf %296, %304 : vector<8x128xf32>
    %306 = math.tanh %305 : vector<8x128xf32>
    %cst_116 = arith.constant dense<0.000000e+00> : vector<8x128xf32>
    %307 = tpu.matmul %306, %4, %cst_116 {dimension_numbers = #tpu.dot_dimension_numbers<[1], [1], [0], [0], [0, 0, 1, 0], [], []>} : vector<8x128xf32>, vector<128x128xf32>, vector<8x128xf32> -> vector<8x128xf32>
    %308 = arith.addf %307, %10 : vector<8x128xf32>
    %309 = arith.index_cast %c7_i32 : i32 to index
    %c0_117 = arith.constant 0 : index
    %c0_118 = arith.constant 0 : index
    %310 = vector.load %arg2[%309, %c0_117, %c0_118] : memref<8x8x128xf32, #tpu.memory_space<vmem>>, vector<1x8x128xf32>
    %311 = vector.shape_cast %310 : vector<1x8x128xf32> to vector<8x128xf32>
    %312 = arith.subf %308, %311 : vector<8x128xf32>
    %313 = arith.index_cast %c7_i32 : i32 to index
    %c0_119 = arith.constant 0 : index
    %c0_120 = arith.constant 0 : index
    %314 = vector.load %arg8[%313, %c0_119, %c0_120] : memref<8x8x128xf32, #tpu.memory_space<vmem>>, vector<1x8x128xf32>
    %315 = vector.shape_cast %314 : vector<1x8x128xf32> to vector<8x128xf32>
    %316 = vector.shape_cast %312 : vector<8x128xf32> to vector<1x8x128xf32>
    tpu.vector_store %arg8[%313, %c0_119, %c0_120], %316 {strides = array<i32>} : memref<8x8x128xf32, #tpu.memory_space<vmem>>, vector<1x8x128xf32>,
    %317 = arith.mulf %306, %306 : vector<8x128xf32>
    %cst_121 = arith.constant 1.000000e+00 : f32
    %318 = vector.broadcast %cst_121 : f32 to vector<8x128xf32>
    %319 = arith.subf %318, %317 : vector<8x128xf32>
    %cst_122 = arith.constant 5.000000e-02 : f32
    %320 = vector.broadcast %cst_122 : f32 to vector<8x128xf32>
    %321 = arith.mulf %320, %319 : vector<8x128xf32>
    %cst_123 = arith.constant dense<0.000000e+00> : vector<8x128xf32>
    %322 = tpu.matmul %312, %4, %cst_123 {dimension_numbers = #tpu.dot_dimension_numbers<[1], [0], [0], [1], [0, 0, 1, 1], [], []>} : vector<8x128xf32>, vector<128x128xf32>, vector<8x128xf32> -> vector<8x128xf32>
    %323 = arith.mulf %321, %322 : vector<8x128xf32>
    %324 = arith.subf %305, %323 : vector<8x128xf32>
    %c8_i32 = arith.constant 8 : i32
    %c0_124 = arith.constant 0 : index
    %c0_125 = arith.constant 0 : index
    %325 = vector.load %arg9[%c0_124, %c0_125] : memref<8x128xf32, #tpu.memory_space<vmem>>, vector<8x128xf32>
    tpu.vector_store %arg9[%c0_124, %c0_125], %324 {strides = array<i32>} : memref<8x128xf32, #tpu.memory_space<vmem>>, vector<8x128xf32>,
    %c0_126 = arith.constant 0 : index
    %c0_127 = arith.constant 0 : index
    %326 = vector.load %arg10[%c0_126, %c0_127] : memref<8x128xf32, #tpu.memory_space<vmem>>, vector<8x128xf32>
    tpu.vector_store %arg10[%c0_126, %c0_127], %295 {strides = array<i32>} : memref<8x128xf32, #tpu.memory_space<vmem>>, vector<8x128xf32>,
    return
  }
  func.func @transform_0(%arg0: i32, %arg1: i32) -> (i32, i32, i32) {
    %c0_i32 = arith.constant 0 : i32
    %c0_i32_0 = arith.constant 0 : i32
    return %arg1, %arg0, %c0_i32 : i32, i32, i32
  }
  func.func @transform_1(%arg0: i32, %arg1: i32) -> (i32, i32) {
    %c0_i32 = arith.constant 0 : i32
    %c0_i32_0 = arith.constant 0 : i32
    return %arg0, %c0_i32 : i32, i32
  }
  func.func @transform_2(%arg0: i32, %arg1: i32) -> (i32, i32) {
    %c0_i32 = arith.constant 0 : i32
    %c0_i32_0 = arith.constant 0 : i32
    %c0_i32_1 = arith.constant 0 : i32
    return %c0_i32, %c0_i32_0 : i32, i32
  }
  func.func @transform_3(%arg0: i32, %arg1: i32) -> (i32, i32) {
    %c0_i32 = arith.constant 0 : i32
    %c0_i32_0 = arith.constant 0 : i32
    %c0_i32_1 = arith.constant 0 : i32
    return %c0_i32, %c0_i32_0 : i32, i32
  }
  func.func @transform_4(%arg0: i32, %arg1: i32) -> (i32, i32) {
    %c0_i32 = arith.constant 0 : i32
    %c0_i32_0 = arith.constant 0 : i32
    %c0_i32_1 = arith.constant 0 : i32
    return %c0_i32, %c0_i32_0 : i32, i32
  }
  func.func @transform_5(%arg0: i32, %arg1: i32) -> (i32, i32) {
    %c0_i32 = arith.constant 0 : i32
    %c0_i32_0 = arith.constant 0 : i32
    %c0_i32_1 = arith.constant 0 : i32
    return %c0_i32, %c0_i32_0 : i32, i32
  }
  func.func @transform_6(%arg0: i32, %arg1: i32) -> (i32, i32, i32) {
    %c0_i32 = arith.constant 0 : i32
    %c0_i32_0 = arith.constant 0 : i32
    return %arg1, %arg0, %c0_i32 : i32, i32, i32
  }
}

</mosaic_0001>

<llo_original>
// kernel: tpu_custom_call.1
$region0: #{tpu_custom_call.1}
  #allocation0 [shape = 'u32[]', space=smem, size = 0x4, offset = 0x4, fixed_abs, tag = 'smem constant byte address 0x4 - core index']
  #allocation1 [shape = 'u32[144,128]{1,0:T(1,128)}', space=vmem, size = 0x12000, scoped, tag = 'internal scratch']
  #allocation2 [shape = 'f32[8,128]{1,0:T(8,128)}', space=vmem, size = 0x1000, scoped, tag = 'scratch operand']
  #allocation3 [shape = 'f32[8,128]{1,0:T(8,128)}', space=vmem, size = 0x1000, scoped, tag = 'scratch operand']
  %s0 = inlined_call_operand.hbm [shape: f32[8,8,128], index: 0, kind: input, shape index: {}]
  %s1 = inlined_call_operand.hbm [shape: f32[8,128], index: 1, kind: input, shape index: {}]
  %s2 = inlined_call_operand.hbm [shape: f32[128,128], index: 2, kind: input, shape index: {}]
  %s3 = inlined_call_operand.vmem [shape: f32[1,128], index: 3, kind: input, shape index: {}]
  %s4 = inlined_call_operand.hbm [shape: f32[128,128], index: 4, kind: input, shape index: {}]
  %s5 = inlined_call_operand.vmem [shape: f32[1,128], index: 5, kind: input, shape index: {}]
  %s6 = inlined_call_operand.hbm [shape: f32[8,8,128], index: 6, kind: output, shape index: {}]
  %s7 = sld [smem:[#allocation0]]
  $region54: #{tpu_custom_call.1} parent=0
    _
  %s9 = ssub.s32 1, %s7
  %s10 = scalar_select 0, %s9, %s7
  $region1: #{tpu_custom_call.1} parent=0
    #allocation4 [shape = 'u8[32768]{0}', space=vmem, size = 0x8000, scoped, tag = 'input window, operand 0, single buffered']
    #allocation5 [shape = 's32[1]{0}', space=sflag, size = 0x4, scoped, tag = 'scoped memory for tpu_custom_call.1']
    #allocation6 [shape = 's32[1]{0}', space=sflag, size = 0x4, scoped, tag = 'scoped memory for tpu_custom_call.1']
    #allocation7 [shape = 'u8[4096]{0}', space=vmem, size = 0x1000, scoped, tag = 'input window, operand 1, single buffered']
    #allocation8 [shape = 's32[1]{0}', space=sflag, size = 0x4, scoped, tag = 'scoped memory for tpu_custom_call.1']
    #allocation9 [shape = 'u8[65536]{0}', space=vmem, size = 0x10000, scoped, tag = 'input window, operand 2, single buffered']
    #allocation10 [shape = 'u8[65536]{0}', space=vmem, size = 0x10000, scoped, tag = 'input window, operand 4, single buffered']
    #allocation11 [shape = 's32[1]{0}', space=sflag, size = 0x4, scoped, tag = 'scoped memory for tpu_custom_call.1']
    #allocation12 [shape = 'u8[32768]{0}', space=vmem, size = 0x8000, scoped, tag = 'output window, operand 0, single buffered']
    %11 = vsyncpa [#allocation5], 0
    %12 = vsyncpa [#allocation8], 0
    %13 = vsyncpa [#allocation11], 0
    %14 = vsyncpa [#allocation6], 0
    // Predicated region
    $region2: #{tpu_custom_call.1} parent=1 // pred_check
      _
    $region3: #{tpu_custom_call.1} parent=1 // pred_check_branch
      %16 = sbr.rel (0) target = $region5
    $region4: #{tpu_custom_call.1} parent=1 // pred_region
      %s18 = ssub.s32 1024, 1024
      %19 = vsyncadd [#allocation5], %s18
      %s20 = sshll.u32 [#allocation4], 4
      %s21 = int_to_ptr.vmem [resolvable:$true] %s20
      %26 = dma.hbm_to_vmem [thread:$0]  %s0, 1024, %s21, [#allocation5], 128, 128, 8
    $region5: #{tpu_custom_call.1} parent=1 // pred_fallthru
      _
    // Predicated region
    $region6: #{tpu_custom_call.1} parent=1 // pred_check
      _
    $region7: #{tpu_custom_call.1} parent=1 // pred_check_branch
      %28 = sbr.rel (0) target = $region9
    $region8: #{tpu_custom_call.1} parent=1 // pred_region
      %s30 = ssub.s32 128, 128
      %31 = vsyncadd [#allocation8], %s30
      %s33 = sshll.u32 [#allocation7], 4
      %s34 = int_to_ptr.vmem [resolvable:$true] %s33
      %36 = dma.hbm_to_vmem [thread:$0]  %s1, 128, %s34, [#allocation8]
    $region9: #{tpu_custom_call.1} parent=1 // pred_fallthru
      _
    // Predicated region
    $region10: #{tpu_custom_call.1} parent=1 // pred_check
      _
    $region11: #{tpu_custom_call.1} parent=1 // pred_check_branch
      %38 = sbr.rel (0) target = $region13
    $region12: #{tpu_custom_call.1} parent=1 // pred_region
      %s40 = ssub.s32 2048, 2048
      %41 = vsyncadd [#allocation8], %s40
      %s42 = sshll.u32 [#allocation9], 4
      %s43 = int_to_ptr.vmem [resolvable:$true] %s42
      %48 = dma.hbm_to_vmem [thread:$0]  %s2, 2048, %s43, [#allocation8], 128, 128, 8
    $region13: #{tpu_custom_call.1} parent=1 // pred_fallthru
      _
    // Predicated region
    $region14: #{tpu_custom_call.1} parent=1 // pred_check
      _
    $region15: #{tpu_custom_call.1} parent=1 // pred_check_branch
      %50 = sbr.rel (0) target = $region17
    $region16: #{tpu_custom_call.1} parent=1 // pred_region
      _
    $region17: #{tpu_custom_call.1} parent=1 // pred_fallthru
      _
    // Predicated region
    $region18: #{tpu_custom_call.1} parent=1 // pred_check
      _
    $region19: #{tpu_custom_call.1} parent=1 // pred_check_branch
      %52 = sbr.rel (0) target = $region21
    $region20: #{tpu_custom_call.1} parent=1 // pred_region
      %s54 = ssub.s32 2048, 2048
      %55 = vsyncadd [#allocation11], %s54
      %s56 = sshll.u32 [#allocation10], 4
      %s57 = int_to_ptr.vmem [resolvable:$true] %s56
      %62 = dma.hbm_to_vmem [thread:$0]  %s4, 2048, %s57, [#allocation11], 128, 128, 8
    $region21: #{tpu_custom_call.1} parent=1 // pred_fallthru
      _
    // Predicated region
    $region22: #{tpu_custom_call.1} parent=1 // pred_check
      _
    $region23: #{tpu_custom_call.1} parent=1 // pred_check_branch
      %64 = sbr.rel (0) target = $region25
    $region24: #{tpu_custom_call.1} parent=1 // pred_region
      _
    $region25: #{tpu_custom_call.1} parent=1 // pred_fallthru
      _
    // Predicated region
    $region26: #{tpu_custom_call.1} parent=1 // pred_check
      _
    $region27: #{tpu_custom_call.1} parent=1 // pred_check_branch
      %66 = sbr.rel (0) target = $region29
    $region28: #{tpu_custom_call.1} parent=1 // pred_region
      %67 = dma.done [#allocation5], 1024
    $region29: #{tpu_custom_call.1} parent=1 // pred_fallthru
      _
    // Predicated region
    $region30: #{tpu_custom_call.1} parent=1 // pred_check
      _
    $region31: #{tpu_custom_call.1} parent=1 // pred_check_branch
      %69 = sbr.rel (0) target = $region33
    $region32: #{tpu_custom_call.1} parent=1 // pred_region
      %70 = dma.done [#allocation8], 128
    $region33: #{tpu_custom_call.1} parent=1 // pred_fallthru
      _
    // Predicated region
    $region34: #{tpu_custom_call.1} parent=1 // pred_check
      _
    $region35: #{tpu_custom_call.1} parent=1 // pred_check_branch
      %72 = sbr.rel (0) target = $region37
    $region36: #{tpu_custom_call.1} parent=1 // pred_region
      %73 = dma.done [#allocation8], 2048
    $region37: #{tpu_custom_call.1} parent=1 // pred_fallthru
      _
    // Predicated region
    $region38: #{tpu_custom_call.1} parent=1 // pred_check
      _
    $region39: #{tpu_custom_call.1} parent=1 // pred_check_branch
      %75 = sbr.rel (0) target = $region41
    $region40: #{tpu_custom_call.1} parent=1 // pred_region
      %76 = dma.done [#allocation11], 2048
    $region41: #{tpu_custom_call.1} parent=1 // pred_fallthru
      _
    %p77 = scmp.eq.s32.totalorder 0, 0
    // Predicated region
    $region42: #{tpu_custom_call.1} parent=1 // pred_check
      %p78 = pneg %p77
    $region43: #{tpu_custom_call.1} parent=1 // pred_check_branch
      %80 = sbr.rel (%p78) target = $region45
    $region44: #{tpu_custom_call.1} parent=1 // pred_region
      %v81 = vld [vmem:[#allocation7] sm:$0xff]
      %82 = vst [vmem:[#allocation2] sm:$0xff] %v81
      %83 = vst [vmem:[#allocation3] sm:$0xff] 0.0
    $region45: #{tpu_custom_call.1} parent=1 // pred_fallthru
      _
    %v84 = vld [vmem:[#allocation9] sm:$0xff]
    %v85 = vld [vmem:[#allocation9 + $0x8] sm:$0xff]
    %v86 = vld [vmem:[#allocation9 + $0x10] sm:$0xff]
    %v87 = vld [vmem:[#allocation9 + $0x18] sm:$0xff]
    %v88 = vld [vmem:[#allocation9 + $0x20] sm:$0xff]
    %v89 = vld [vmem:[#allocation9 + $0x28] sm:$0xff]
    %v90 = vld [vmem:[#allocation9 + $0x30] sm:$0xff]
    %v91 = vld [vmem:[#allocation9 + $0x38] sm:$0xff]
    %v92 = vld [vmem:[#allocation9 + $0x40] sm:$0xff]
    %v93 = vld [vmem:[#allocation9 + $0x48] sm:$0xff]
    %v94 = vld [vmem:[#allocation9 + $0x50] sm:$0xff]
    %v95 = vld [vmem:[#allocation9 + $0x58] sm:$0xff]
    %v96 = vld [vmem:[#allocation9 + $0x60] sm:$0xff]
    %v97 = vld [vmem:[#allocation9 + $0x68] sm:$0xff]
    %v98 = vld [vmem:[#allocation9 + $0x70] sm:$0xff]
    %v99 = vld [vmem:[#allocation9 + $0x78] sm:$0xff]
    %v100 = vld [vmem:[#allocation10] sm:$0xff]
    %v101 = vld [vmem:[#allocation10 + $0x8] sm:$0xff]
    %v102 = vld [vmem:[#allocation10 + $0x10] sm:$0xff]
    %v103 = vld [vmem:[#allocation10 + $0x18] sm:$0xff]
    %v104 = vld [vmem:[#allocation10 + $0x20] sm:$0xff]
    %v105 = vld [vmem:[#allocation10 + $0x28] sm:$0xff]
    %v106 = vld [vmem:[#allocation10 + $0x30] sm:$0xff]
    %v107 = vld [vmem:[#allocation10 + $0x38] sm:$0xff]
    %v108 = vld [vmem:[#allocation10 + $0x40] sm:$0xff]
    %v109 = vld [vmem:[#allocation10 + $0x48] sm:$0xff]
    %v110 = vld [vmem:[#allocation10 + $0x50] sm:$0xff]
    %v111 = vld [vmem:[#allocation10 + $0x58] sm:$0xff]
    %v112 = vld [vmem:[#allocation10 + $0x60] sm:$0xff]
    %v113 = vld [vmem:[#allocation10 + $0x68] sm:$0xff]
    %v114 = vld [vmem:[#allocation10 + $0x70] sm:$0xff]
    %v115 = vld [vmem:[#allocation10 + $0x78] sm:$0xff]
    %v116 = vld [vmem:[%s3] sm:$0x1]
    %v118 = vlaneseq
    %v119 = vshrl.u32 %v118, 7
    %v120 = vsub.s32 0, %v119
    %v121 = vrot.slane %v116, %v120
    %v123 = vld [vmem:[%s5] sm:$0x1]
    %v125 = vlaneseq
    %v126 = vshrl.u32 %v125, 7
    %v127 = vsub.s32 0, %v126
    %v128 = vrot.slane %v123, %v127
    %v130 = vld [vmem:[#allocation2] sm:$0xff]
    %v131 = vld [vmem:[#allocation3] sm:$0xff]
    %v132 = vtanh.pop %v130
    %133 = vmatprep.subr.mxu0 0.0
    %134 = vmatpush1.xpose.msra.mxu0 %v84
    %135 = vmatprep.subr.mxu0 0.0
    %136 = vmatpush1.xpose.msra.mxu0 %v85
    %137 = vmatprep.subr.mxu0 0.0
    %138 = vmatpush1.xpose.msra.mxu0 %v86
    %139 = vmatprep.subr.mxu0 0.0
    %140 = vmatpush1.xpose.msra.mxu0 %v87
    %141 = vmatprep.subr.mxu0 0.0
    %142 = vmatpush1.xpose.msra.mxu0 %v88
    %143 = vmatprep.subr.mxu0 0.0
    %144 = vmatpush1.xpose.msra.mxu0 %v89
    %145 = vmatprep.subr.mxu0 0.0
    %146 = vmatpush1.xpose.msra.mxu0 %v90
    %147 = vmatprep.subr.mxu0 0.0
    %148 = vmatpush1.xpose.msra.mxu0 %v91
    %149 = vmatprep.subr.mxu0 0.0
    %150 = vmatpush1.xpose.msra.mxu0 %v92
    %151 = vmatprep.subr.mxu0 0.0
    %152 = vmatpush1.xpose.msra.mxu0 %v93
    %153 = vmatprep.subr.mxu0 0.0
    %154 = vmatpush1.xpose.msra.mxu0 %v94
    %155 = vmatprep.subr.mxu0 0.0
    %156 = vmatpush1.xpose.msra.mxu0 %v95
    %157 = vmatprep.subr.mxu0 0.0
    %158 = vmatpush1.xpose.msra.mxu0 %v96
    %159 = vmatprep.subr.mxu0 0.0
    %160 = vmatpush1.xpose.msra.mxu0 %v97
    %161 = vmatprep.subr.mxu0 0.0
    %162 = vmatpush1.xpose.msra.mxu0 %v98
    %163 = vmatprep.subr.mxu0 0.0
    %164 = vmatpush1.xpose.msra.mxu0 %v99
    %165 = vmatprep.subr.mxu0 0.0
    %166 = vmatpush1.xpose.msra.mxu0 0.0
    %167 = vmatprep.subr.mxu0 0.0
    %168 = vmatpush1.xpose.msra.mxu0 0.0
    %169 = vmatprep.subr.mxu0 0.0
    %170 = vmatpush1.xpose.msra.mxu0 0.0
    %171 = vmatprep.subr.mxu0 0.0
    %172 = vmatpush1.xpose.msra.mxu0 0.0
    %173 = vmatprep.subr.mxu0 0.0
    %174 = vmatpush1.xpose.msra.mxu0 0.0
    %175 = vmatprep.subr.mxu0 0.0
    %176 = vmatpush1.xpose.msra.mxu0 0.0
    %177 = vmatprep.subr.mxu0 0.0
    %178 = vmatpush1.xpose.msra.mxu0 0.0
    %179 = vmatprep.subr.mxu0 0.0
    %180 = vmatpush1.xpose.msra.mxu0 0.0
    %181 = vmatprep.subr.mxu0 0.0
    %182 = vmatpush1.xpose.msra.mxu0 0.0
    %183 = vmatprep.subr.mxu0 0.0
    %184 = vmatpush1.xpose.msra.mxu0 0.0
    %185 = vmatprep.subr.mxu0 0.0
    %186 = vmatpush1.xpose.msra.mxu0 0.0
    %187 = vmatprep.subr.mxu0 0.0
    %188 = vmatpush1.xpose.msra.mxu0 0.0
    %189 = vmatprep.subr.mxu0 0.0
    %190 = vmatpush1.xpose.msra.mxu0 0.0
    %191 = vmatprep.subr.mxu0 0.0
    %192 = vmatpush1.xpose.msra.mxu0 0.0
    %193 = vmatprep.subr.mxu0 0.0
    %194 = vmatpush1.xpose.msra.mxu0 0.0
    %195 = vmatprep.subr.mxu0 0.0
    %196 = vmatpush1.xpose.msra.mxu0 0.0
    %197 = vmatprep.mubr.f32.mxu0 0.0
    %198 = vmatmul.mubr.f32.gmra.mrb[0].mxu0 %v132
    %v199 = vpop.f32.mrb[0].mxu0
    %v200 = vadd.f32 %v121, %v199
    %v201 = vpop.f32.mrb[0].mxu0
    %202 = vdwg.mxu0
    %v203 = vsub.f32 %v200, %v130
    %v204 = vmul.f32 %v203, 0.5
    %v205 = vsub.f32 %v131, %v204
    %v206 = vmul.f32 %v205, 0.1
    %v207 = vsub.f32 %v131, %v206
    %v208 = vadd.f32 %v130, %v207
    %v209 = vmul.f32 %v132, %v132
    %v210 = vsub.f32 1.0, %v209
    %211 = vmatprep.subr.mxu0 0.0
    %212 = vmatpush1.msra.mxu0 %v84
    %213 = vmatprep.subr.mxu0 0.0
    %214 = vmatpush1.msra.mxu0 %v85
    %215 = vmatprep.subr.mxu0 0.0
    %216 = vmatpush1.msra.mxu0 %v86
    %217 = vmatprep.subr.mxu0 0.0
    %218 = vmatpush1.msra.mxu0 %v87
    %219 = vmatprep.subr.mxu0 0.0
    %220 = vmatpush1.msra.mxu0 %v88
    %221 = vmatprep.subr.mxu0 0.0
    %222 = vmatpush1.msra.mxu0 %v89
    %223 = vmatprep.subr.mxu0 0.0
    %224 = vmatpush1.msra.mxu0 %v90
    %225 = vmatprep.subr.mxu0 0.0
    %226 = vmatpush1.msra.mxu0 %v91
    %227 = vmatprep.subr.mxu0 0.0
    %228 = vmatpush1.msra.mxu0 %v92
    %229 = vmatprep.subr.mxu0 0.0
    %230 = vmatpush1.msra.mxu0 %v93
    %231 = vmatprep.subr.mxu0 0.0
    %232 = vmatpush1.msra.mxu0 %v94
    %233 = vmatprep.subr.mxu0 0.0
    %234 = vmatpush1.msra.mxu0 %v95
    %235 = vmatprep.subr.mxu0 0.0
    %236 = vmatpush1.msra.mxu0 %v96
    %237 = vmatprep.subr.mxu0 0.0
    %238 = vmatpush1.msra.mxu0 %v97
    %239 = vmatprep.subr.mxu0 0.0
    %240 = vmatpush1.msra.mxu0 %v98
    %241 = vmatprep.subr.mxu0 0.0
    %242 = vmatpush1.msra.mxu0 %v99
    %243 = vmatprep.subr.mxu0 0.0
    %244 = vmatpush1.msra.mxu0 0.0
    %245 = vmatprep.subr.mxu0 0.0
    %246 = vmatpush1.msra.mxu0 0.0
    %247 = vmatprep.subr.mxu0 0.0
    %248 = vmatpush1.msra.mxu0 0.0
    %249 = vmatprep.subr.mxu0 0.0
    %250 = vmatpush1.msra.mxu0 0.0
    %251 = vmatprep.subr.mxu0 0.0
    %252 = vmatpush1.msra.mxu0 0.0
    %253 = vmatprep.subr.mxu0 0.0
    %254 = vmatpush1.msra.mxu0 0.0
    %255 = vmatprep.subr.mxu0 0.0
    %256 = vmatpush1.msra.mxu0 0.0
    %257 = vmatprep.subr.mxu0 0.0
    %258 = vmatpush1.msra.mxu0 0.0
    %259 = vmatprep.subr.mxu0 0.0
    %260 = vmatpush1.msra.mxu0 0.0
    %261 = vmatprep.subr.mxu0 0.0
    %262 = vmatpush1.msra.mxu0 0.0
    %263 = vmatprep.subr.mxu0 0.0
    %264 = vmatpush1.msra.mxu0 0.0
    %265 = vmatprep.subr.mxu0 0.0
    %266 = vmatpush1.msra.mxu0 0.0
    %267 = vmatprep.subr.mxu0 0.0
    %268 = vmatpush1.msra.mxu0 0.0
    %269 = vmatprep.subr.mxu0 0.0
    %270 = vmatpush1.msra.mxu0 0.0
    %271 = vmatprep.subr.mxu0 0.0
    %272 = vmatpush1.msra.mxu0 0.0
    %273 = vmatprep.subr.mxu0 0.0
    %274 = vmatpush1.msra.mxu0 0.0
    %275 = vmatprep.mubr.f32.mxu0 0.0
    %276 = vmatmul.mubr.f32.gmra.mrb[0].mxu0 %v205
    %v277 = vpop.f32.mrb[0].mxu0
    %v278 = vadd.f32 0.0, %v277
    %v279 = vpop.f32.mrb[0].mxu0
    %280 = vdwg.mxu0
    %v281 = vmul.f32 %v210, %v278
    %v282 = vsub.f32 %v281, %v205
    %v283 = vmul.f32 %v282, 0.05
    %v284 = vadd.f32 %v208, %v283
    %v285 = vtanh.pop %v284
    %286 = vmatprep.subr.mxu0 0.0
    %287 = vmatpush1.xpose.msra.mxu0 %v100
    %288 = vmatprep.subr.mxu0 0.0
    %289 = vmatpush1.xpose.msra.mxu0 %v101
    %290 = vmatprep.subr.mxu0 0.0
    %291 = vmatpush1.xpose.msra.mxu0 %v102
    %292 = vmatprep.subr.mxu0 0.0
    %293 = vmatpush1.xpose.msra.mxu0 %v103
    %294 = vmatprep.subr.mxu0 0.0
    %295 = vmatpush1.xpose.msra.mxu0 %v104
    %296 = vmatprep.subr.mxu0 0.0
    %297 = vmatpush1.xpose.msra.mxu0 %v105
    %298 = vmatprep.subr.mxu0 0.0
    %299 = vmatpush1.xpose.msra.mxu0 %v106
    %300 = vmatprep.subr.mxu0 0.0
    %301 = vmatpush1.xpose.msra.mxu0 %v107
    %302 = vmatprep.subr.mxu0 0.0
    %303 = vmatpush1.xpose.msra.mxu0 %v108
    %304 = vmatprep.subr.mxu0 0.0
    %305 = vmatpush1.xpose.msra.mxu0 %v109
    %306 = vmatprep.subr.mxu0 0.0
    %307 = vmatpush1.xpose.msra.mxu0 %v110
    %308 = vmatprep.subr.mxu0 0.0
    %309 = vmatpush1.xpose.msra.mxu0 %v111
    %310 = vmatprep.subr.mxu0 0.0
    %311 = vmatpush1.xpose.msra.mxu0 %v112
    %312 = vmatprep.subr.mxu0 0.0
    %313 = vmatpush1.xpose.msra.mxu0 %v113
    %314 = vmatprep.subr.mxu0 0.0
    %315 = vmatpush1.xpose.msra.mxu0 %v114
    %316 = vmatprep.subr.mxu0 0.0
    %317 = vmatpush1.xpose.msra.mxu0 %v115
    %318 = vmatprep.subr.mxu0 0.0
    %319 = vmatpush1.xpose.msra.mxu0 0.0
    %320 = vmatprep.subr.mxu0 0.0
    %321 = vmatpush1.xpose.msra.mxu0 0.0
    %322 = vmatprep.subr.mxu0 0.0
    %323 = vmatpush1.xpose.msra.mxu0 0.0
    %324 = vmatprep.subr.mxu0 0.0
    %325 = vmatpush1.xpose.msra.mxu0 0.0
    %326 = vmatprep.subr.mxu0 0.0
    %327 = vmatpush1.xpose.msra.mxu0 0.0
    %328 = vmatprep.subr.mxu0 0.0
    %329 = vmatpush1.xpose.msra.mxu0 0.0
    %330 = vmatprep.subr.mxu0 0.0
    %331 = vmatpush1.xpose.msra.mxu0 0.0
    %332 = vmatprep.subr.mxu0 0.0
    %333 = vmatpush1.xpose.msra.mxu0 0.0
    %334 = vmatprep.subr.mxu0 0.0
    %335 = vmatpush1.xpose.msra.mxu0 0.0
    %336 = vmatprep.subr.mxu0 0.0
    %337 = vmatpush1.xpose.msra.mxu0 0.0
    %338 = vmatprep.subr.mxu0 0.0
    %339 = vmatpush1.xpose.msra.mxu0 0.0
    %340 = vmatprep.subr.mxu0 0.0
    %341 = vmatpush1.xpose.msra.mxu0 0.0
    %342 = vmatprep.subr.mxu0 0.0
    %343 = vmatpush1.xpose.msra.mxu0 0.0
    %344 = vmatprep.subr.mxu0 0.0
    %345 = vmatpush1.xpose.msra.mxu0 0.0
    %346 = vmatprep.subr.mxu0 0.0
    %347 = vmatpush1.xpose.msra.mxu0 0.0
    %348 = vmatprep.subr.mxu0 0.0
    %349 = vmatpush1.xpose.msra.mxu0 0.0
    %350 = vmatprep.mubr.f32.mxu0 0.0
    %351 = vmatmul.mubr.f32.gmra.mrb[0].mxu0 %v285
    %v352 = vpop.f32.mrb[0].mxu0
    %v353 = vadd.f32 %v128, %v352
    %v354 = vpop.f32.mrb[0].mxu0
    %355 = vdwg.mxu0
    %v356 = vld [vmem:[#allocation4] sm:$0xff]
    %v357 = vsub.f32 %v353, %v356
    %358 = vst [vmem:[#allocation12] sm:$0xff] %v357
    %v359 = vmul.f32 %v285, %v285
    %v360 = vsub.f32 1.0, %v359
    %v361 = vmul.f32 %v360, 0.05
    %362 = vmatprep.subr.mxu0 0.0
    %363 = vmatpush1.msra.mxu0 %v100
    %364 = vmatprep.subr.mxu0 0.0
    %365 = vmatpush1.msra.mxu0 %v101
    %366 = vmatprep.subr.mxu0 0.0
    %367 = vmatpush1.msra.mxu0 %v102
    %368 = vmatprep.subr.mxu0 0.0
    %369 = vmatpush1.msra.mxu0 %v103
    %370 = vmatprep.subr.mxu0 0.0
    %371 = vmatpush1.msra.mxu0 %v104
    %372 = vmatprep.subr.mxu0 0.0
    %373 = vmatpush1.msra.mxu0 %v105
    %374 = vmatprep.subr.mxu0 0.0
    %375 = vmatpush1.msra.mxu0 %v106
    %376 = vmatprep.subr.mxu0 0.0
    %377 = vmatpush1.msra.mxu0 %v107
    %378 = vmatprep.subr.mxu0 0.0
    %379 = vmatpush1.msra.mxu0 %v108
    %380 = vmatprep.subr.mxu0 0.0
    %381 = vmatpush1.msra.mxu0 %v109
    %382 = vmatprep.subr.mxu0 0.0
    %383 = vmatpush1.msra.mxu0 %v110
    %384 = vmatprep.subr.mxu0 0.0
    %385 = vmatpush1.msra.mxu0 %v111
    %386 = vmatprep.subr.mxu0 0.0
    %387 = vmatpush1.msra.mxu0 %v112
    %388 = vmatprep.subr.mxu0 0.0
    %389 = vmatpush1.msra.mxu0 %v113
    %390 = vmatprep.subr.mxu0 0.0
    %391 = vmatpush1.msra.mxu0 %v114
    %392 = vmatprep.subr.mxu0 0.0
    %393 = vmatpush1.msra.mxu0 %v115
    %394 = vmatprep.subr.mxu0 0.0
    %395 = vmatpush1.msra.mxu0 0.0
    %396 = vmatprep.subr.mxu0 0.0
    %397 = vmatpush1.msra.mxu0 0.0
    %398 = vmatprep.subr.mxu0 0.0
    %399 = vmatpush1.msra.mxu0 0.0
    %400 = vmatprep.subr.mxu0 0.0
    %401 = vmatpush1.msra.mxu0 0.0
    %402 = vmatprep.subr.mxu0 0.0
    %403 = vmatpush1.msra.mxu0 0.0
    %404 = vmatprep.subr.mxu0 0.0
    %405 = vmatpush1.msra.mxu0 0.0
    %406 = vmatprep.subr.mxu0 0.0
    %407 = vmatpush1.msra.mxu0 0.0
    %408 = vmatprep.subr.mxu0 0.0
    %409 = vmatpush1.msra.mxu0 0.0
    %410 = vmatprep.subr.mxu0 0.0
    %411 = vmatpush1.msra.mxu0 0.0
    %412 = vmatprep.subr.mxu0 0.0
    %413 = vmatpush1.msra.mxu0 0.0
    %414 = vmatprep.subr.mxu0 0.0
    %415 = vmatpush1.msra.mxu0 0.0
    %416 = vmatprep.subr.mxu0 0.0
    %417 = vmatpush1.msra.mxu0 0.0
    %418 = vmatprep.subr.mxu0 0.0
    %419 = vmatpush1.msra.mxu0 0.0
    %420 = vmatprep.subr.mxu0 0.0
    %421 = vmatpush1.msra.mxu0 0.0
    %422 = vmatprep.subr.mxu0 0.0
    %423 = vmatpush1.msra.mxu0 0.0
    %424 = vmatprep.subr.mxu0 0.0
    %425 = vmatpush1.msra.mxu0 0.0
    %426 = vmatprep.mubr.f32.mxu0 0.0
    %427 = vmatmul.mubr.f32.gmra.mrb[0].mxu0 %v357
    %v428 = vpop.f32.mrb[0].mxu0
    %v429 = vadd.f32 0.0, %v428
    %v430 = vpop.f32.mrb[0].mxu0
    %431 = vdwg.mxu0
    %v432 = vmul.f32 %v361, %v429
    %v433 = vsub.f32 %v284, %v432
    %v434 = vtanh.pop %v433
    %435 = vmatprep.subr.mxu0 0.0
    %436 = vmatpush1.xpose.msra.mxu0 %v84
    %437 = vmatprep.subr.mxu0 0.0
    %438 = vmatpush1.xpose.msra.mxu0 %v85
    %439 = vmatprep.subr.mxu0 0.0
    %440 = vmatpush1.xpose.msra.mxu0 %v86
    %441 = vmatprep.subr.mxu0 0.0
    %442 = vmatpush1.xpose.msra.mxu0 %v87
    %443 = vmatprep.subr.mxu0 0.0
    %444 = vmatpush1.xpose.msra.mxu0 %v88
    %445 = vmatprep.subr.mxu0 0.0
    %446 = vmatpush1.xpose.msra.mxu0 %v89
    %447 = vmatprep.subr.mxu0 0.0
    %448 = vmatpush1.xpose.msra.mxu0 %v90
    %449 = vmatprep.subr.mxu0 0.0
    %450 = vmatpush1.xpose.msra.mxu0 %v91
    %451 = vmatprep.subr.mxu0 0.0
    %452 = vmatpush1.xpose.msra.mxu0 %v92
    %453 = vmatprep.subr.mxu0 0.0
    %454 = vmatpush1.xpose.msra.mxu0 %v93
    %455 = vmatprep.subr.mxu0 0.0
    %456 = vmatpush1.xpose.msra.mxu0 %v94
    %457 = vmatprep.subr.mxu0 0.0
    %458 = vmatpush1.xpose.msra.mxu0 %v95
    %459 = vmatprep.subr.mxu0 0.0
    %460 = vmatpush1.xpose.msra.mxu0 %v96
    %461 = vmatprep.subr.mxu0 0.0
    %462 = vmatpush1.xpose.msra.mxu0 %v97
    %463 = vmatprep.subr.mxu0 0.0
    %464 = vmatpush1.xpose.msra.mxu0 %v98
    %465 = vmatprep.subr.mxu0 0.0
    %466 = vmatpush1.xpose.msra.mxu0 %v99
    %467 = vmatprep.subr.mxu0 0.0
    %468 = vmatpush1.xpose.msra.mxu0 0.0
    %469 = vmatprep.subr.mxu0 0.0
    %470 = vmatpush1.xpose.msra.mxu0 0.0
    %471 = vmatprep.subr.mxu0 0.0
    %472 = vmatpush1.xpose.msra.mxu0 0.0
    %473 = vmatprep.subr.mxu0 0.0
    %474 = vmatpush1.xpose.msra.mxu0 0.0
    %475 = vmatprep.subr.mxu0 0.0
    %476 = vmatpush1.xpose.msra.mxu0 0.0
    %477 = vmatprep.subr.mxu0 0.0
    %478 = vmatpush1.xpose.msra.mxu0 0.0
    %479 = vmatprep.subr.mxu0 0.0
    %480 = vmatpush1.xpose.msra.mxu0 0.0
    %481 = vmatprep.subr.mxu0 0.0
    %482 = vmatpush1.xpose.msra.mxu0 0.0
    %483 = vmatprep.subr.mxu0 0.0
    %484 = vmatpush1.xpose.msra.mxu0 0.0
    %485 = vmatprep.subr.mxu0 0.0
    %486 = vmatpush1.xpose.msra.mxu0 0.0
    %487 = vmatprep.subr.mxu0 0.0
    %488 = vmatpush1.xpose.msra.mxu0 0.0
    %489 = vmatprep.subr.mxu0 0.0
    %490 = vmatpush1.xpose.msra.mxu0 0.0
    %491 = vmatprep.subr.mxu0 0.0
    %492 = vmatpush1.xpose.msra.mxu0 0.0
    %493 = vmatprep.subr.mxu0 0.0
    %494 = vmatpush1.xpose.msra.mxu0 0.0
    %495 = vmatprep.subr.mxu0 0.0
    %496 = vmatpush1.xpose.msra.mxu0 0.0
    %497 = vmatprep.subr.mxu0 0.0
    %498 = vmatpush1.xpose.msra.mxu0 0.0
    %499 = vmatprep.mubr.f32.mxu0 0.0
    %500 = vmatmul.mubr.f32.gmra.mrb[0].mxu0 %v434
    %v501 = vpop.f32.mrb[0].mxu0
    %v502 = vadd.f32 %v121, %v501
    %v503 = vpop.f32.mrb[0].mxu0
    %504 = vdwg.mxu0
    %v505 = vsub.f32 %v502, %v433
    %v506 = vmul.f32 %v505, 0.5
    %v507 = vsub.f32 %v207, %v506
    %v508 = vmul.f32 %v507, 0.1
    %v509 = vsub.f32 %v207, %v508
    %v510 = vadd.f32 %v433, %v509
    %v511 = vmul.f32 %v434, %v434
    %v512 = vsub.f32 1.0, %v511
    %513 = vmatprep.subr.mxu0 0.0
    %514 = vmatpush1.msra.mxu0 %v84
    %515 = vmatprep.subr.mxu0 0.0
    %516 = vmatpush1.msra.mxu0 %v85
    %517 = vmatprep.subr.mxu0 0.0
    %518 = vmatpush1.msra.mxu0 %v86
    %519 = vmatprep.subr.mxu0 0.0
    %520 = vmatpush1.msra.mxu0 %v87
    %521 = vmatprep.subr.mxu0 0.0
    %522 = vmatpush1.msra.mxu0 %v88
    %523 = vmatprep.subr.mxu0 0.0
    %524 = vmatpush1.msra.mxu0 %v89
    %525 = vmatprep.subr.mxu0 0.0
    %526 = vmatpush1.msra.mxu0 %v90
    %527 = vmatprep.subr.mxu0 0.0
    %528 = vmatpush1.msra.mxu0 %v91
    %529 = vmatprep.subr.mxu0 0.0
    %530 = vmatpush1.msra.mxu0 %v92
    %531 = vmatprep.subr.mxu0 0.0
    %532 = vmatpush1.msra.mxu0 %v93
    %533 = vmatprep.subr.mxu0 0.0
    %534 = vmatpush1.msra.mxu0 %v94
    %535 = vmatprep.subr.mxu0 0.0
    %536 = vmatpush1.msra.mxu0 %v95
    %537 = vmatprep.subr.mxu0 0.0
    %538 = vmatpush1.msra.mxu0 %v96
    %539 = vmatprep.subr.mxu0 0.0
    %540 = vmatpush1.msra.mxu0 %v97
    %541 = vmatprep.subr.mxu0 0.0
    %542 = vmatpush1.msra.mxu0 %v98
    %543 = vmatprep.subr.mxu0 0.0
    %544 = vmatpush1.msra.mxu0 %v99
    %545 = vmatprep.subr.mxu0 0.0
    %546 = vmatpush1.msra.mxu0 0.0
    %547 = vmatprep.subr.mxu0 0.0
    %548 = vmatpush1.msra.mxu0 0.0
    %549 = vmatprep.subr.mxu0 0.0
    %550 = vmatpush1.msra.mxu0 0.0
    %551 = vmatprep.subr.mxu0 0.0
    %552 = vmatpush1.msra.mxu0 0.0
    %553 = vmatprep.subr.mxu0 0.0
    %554 = vmatpush1.msra.mxu0 0.0
    %555 = vmatprep.subr.mxu0 0.0
    %556 = vmatpush1.msra.mxu0 0.0
    %557 = vmatprep.subr.mxu0 0.0
    %558 = vmatpush1.msra.mxu0 0.0
    %559 = vmatprep.subr.mxu0 0.0
    %560 = vmatpush1.msra.mxu0 0.0
    %561 = vmatprep.subr.mxu0 0.0
    %562 = vmatpush1.msra.mxu0 0.0
    %563 = vmatprep.subr.mxu0 0.0
    %564 = vmatpush1.msra.mxu0 0.0
    %565 = vmatprep.subr.mxu0 0.0
    %566 = vmatpush1.msra.mxu0 0.0
    %567 = vmatprep.subr.mxu0 0.0
    %568 = vmatpush1.msra.mxu0 0.0
    %569 = vmatprep.subr.mxu0 0.0
    %570 = vmatpush1.msra.mxu0 0.0
    %571 = vmatprep.subr.mxu0 0.0
    %572 = vmatpush1.msra.mxu0 0.0
    %573 = vmatprep.subr.mxu0 0.0
    %574 = vmatpush1.msra.mxu0 0.0
    %575 = vmatprep.subr.mxu0 0.0
    %576 = vmatpush1.msra.mxu0 0.0
    %577 = vmatprep.mubr.f32.mxu0 0.0
    %578 = vmatmul.mubr.f32.gmra.mrb[0].mxu0 %v507
    %v579 = vpop.f32.mrb[0].mxu0
    %v580 = vadd.f32 0.0, %v579
    %v581 = vpop.f32.mrb[0].mxu0
    %582 = vdwg.mxu0
    %v583 = vmul.f32 %v512, %v580
    %v584 = vsub.f32 %v583, %v507
    %v585 = vmul.f32 %v584, 0.05
    %v586 = vadd.f32 %v510, %v585
    %v587 = vtanh.pop %v586
    %588 = vmatprep.subr.mxu0 0.0
    %589 = vmatpush1.xpose.msra.mxu0 %v100
    %590 = vmatprep.subr.mxu0 0.0
    %591 = vmatpush1.xpose.msra.mxu0 %v101
    %592 = vmatprep.subr.mxu0 0.0
    %593 = vmatpush1.xpose.msra.mxu0 %v102
    %594 = vmatprep.subr.mxu0 0.0
    %595 = vmatpush1.xpose.msra.mxu0 %v103
    %596 = vmatprep.subr.mxu0 0.0
    %597 = vmatpush1.xpose.msra.mxu0 %v104
    %598 = vmatprep.subr.mxu0 0.0
    %599 = vmatpush1.xpose.msra.mxu0 %v105
    %600 = vmatprep.subr.mxu0 0.0
    %601 = vmatpush1.xpose.msra.mxu0 %v106
    %602 = vmatprep.subr.mxu0 0.0
    %603 = vmatpush1.xpose.msra.mxu0 %v107
    %604 = vmatprep.subr.mxu0 0.0
    %605 = vmatpush1.xpose.msra.mxu0 %v108
    %606 = vmatprep.subr.mxu0 0.0
    %607 = vmatpush1.xpose.msra.mxu0 %v109
    %608 = vmatprep.subr.mxu0 0.0
    %609 = vmatpush1.xpose.msra.mxu0 %v110
    %610 = vmatprep.subr.mxu0 0.0
    %611 = vmatpush1.xpose.msra.mxu0 %v111
    %612 = vmatprep.subr.mxu0 0.0
    %613 = vmatpush1.xpose.msra.mxu0 %v112
    %614 = vmatprep.subr.mxu0 0.0
    %615 = vmatpush1.xpose.msra.mxu0 %v113
    %616 = vmatprep.subr.mxu0 0.0
    %617 = vmatpush1.xpose.msra.mxu0 %v114
    %618 = vmatprep.subr.mxu0 0.0
    %619 = vmatpush1.xpose.msra.mxu0 %v115
    %620 = vmatprep.subr.mxu0 0.0
    %621 = vmatpush1.xpose.msra.mxu0 0.0
    %622 = vmatprep.subr.mxu0 0.0
    %623 = vmatpush1.xpose.msra.mxu0 0.0
    %624 = vmatprep.subr.mxu0 0.0
    %625 = vmatpush1.xpose.msra.mxu0 0.0
    %626 = vmatprep.subr.mxu0 0.0
    %627 = vmatpush1.xpose.msra.mxu0 0.0
    %628 = vmatprep.subr.mxu0 0.0
    %629 = vmatpush1.xpose.msra.mxu0 0.0
    %630 = vmatprep.subr.mxu0 0.0
    %631 = vmatpush1.xpose.msra.mxu0 0.0
    %632 = vmatprep.subr.mxu0 0.0
    %633 = vmatpush1.xpose.msra.mxu0 0.0
    %634 = vmatprep.subr.mxu0 0.0
    %635 = vmatpush1.xpose.msra.mxu0 0.0
    %636 = vmatprep.subr.mxu0 0.0
    %637 = vmatpush1.xpose.msra.mxu0 0.0
    %638 = vmatprep.subr.mxu0 0.0
    %639 = vmatpush1.xpose.msra.mxu0 0.0
    %640 = vmatprep.subr.mxu0 0.0
    %641 = vmatpush1.xpose.msra.mxu0 0.0
    %642 = vmatprep.subr.mxu0 0.0
    %643 = vmatpush1.xpose.msra.mxu0 0.0
    %644 = vmatprep.subr.mxu0 0.0
    %645 = vmatpush1.xpose.msra.mxu0 0.0
    %646 = vmatprep.subr.mxu0 0.0
    %647 = vmatpush1.xpose.msra.mxu0 0.0
    %648 = vmatprep.subr.mxu0 0.0
    %649 = vmatpush1.xpose.msra.mxu0 0.0
    %650 = vmatprep.subr.mxu0 0.0
    %651 = vmatpush1.xpose.msra.mxu0 0.0
    %652 = vmatprep.mubr.f32.mxu0 0.0
    %653 = vmatmul.mubr.f32.gmra.mrb[0].mxu0 %v587
    %v654 = vpop.f32.mrb[0].mxu0
    %v655 = vadd.f32 %v128, %v654
    %v656 = vpop.f32.mrb[0].mxu0
    %657 = vdwg.mxu0
    %s658 = scalar_lea.vmem [#allocation4], 8
    %v659 = vld [vmem:[%s658] sm:$0xff]
    %v660 = vsub.f32 %v655, %v659
    %s661 = scalar_lea.vmem [#allocation12], 8
    %662 = vst [vmem:[%s661] sm:$0xff] %v660
    %v663 = vmul.f32 %v587, %v587
    %v664 = vsub.f32 1.0, %v663
    %v665 = vmul.f32 %v664, 0.05
    %666 = vmatprep.subr.mxu0 0.0
    %667 = vmatpush1.msra.mxu0 %v100
    %668 = vmatprep.subr.mxu0 0.0
    %669 = vmatpush1.msra.mxu0 %v101
    %670 = vmatprep.subr.mxu0 0.0
    %671 = vmatpush1.msra.mxu0 %v102
    %672 = vmatprep.subr.mxu0 0.0
    %673 = vmatpush1.msra.mxu0 %v103
    %674 = vmatprep.subr.mxu0 0.0
    %675 = vmatpush1.msra.mxu0 %v104
    %676 = vmatprep.subr.mxu0 0.0
    %677 = vmatpush1.msra.mxu0 %v105
    %678 = vmatprep.subr.mxu0 0.0
    %679 = vmatpush1.msra.mxu0 %v106
    %680 = vmatprep.subr.mxu0 0.0
    %681 = vmatpush1.msra.mxu0 %v107
    %682 = vmatprep.subr.mxu0 0.0
    %683 = vmatpush1.msra.mxu0 %v108
    %684 = vmatprep.subr.mxu0 0.0
    %685 = vmatpush1.msra.mxu0 %v109
    %686 = vmatprep.subr.mxu0 0.0
    %687 = vmatpush1.msra.mxu0 %v110
    %688 = vmatprep.subr.mxu0 0.0
    %689 = vmatpush1.msra.mxu0 %v111
    %690 = vmatprep.subr.mxu0 0.0
    %691 = vmatpush1.msra.mxu0 %v112
    %692 = vmatprep.subr.mxu0 0.0
    %693 = vmatpush1.msra.mxu0 %v113
    %694 = vmatprep.subr.mxu0 0.0
    %695 = vmatpush1.msra.mxu0 %v114
    %696 = vmatprep.subr.mxu0 0.0
    %697 = vmatpush1.msra.mxu0 %v115
    %698 = vmatprep.subr.mxu0 0.0
    %699 = vmatpush1.msra.mxu0 0.0
    %700 = vmatprep.subr.mxu0 0.0
    %701 = vmatpush1.msra.mxu0 0.0
    %702 = vmatprep.subr.mxu0 0.0
    %703 = vmatpush1.msra.mxu0 0.0
    %704 = vmatprep.subr.mxu0 0.0
    %705 = vmatpush1.msra.mxu0 0.0
    %706 = vmatprep.subr.mxu0 0.0
    %707 = vmatpush1.msra.mxu0 0.0
    %708 = vmatprep.subr.mxu0 0.0
    %709 = vmatpush1.msra.mxu0 0.0
    %710 = vmatprep.subr.mxu0 0.0
    %711 = vmatpush1.msra.mxu0 0.0
    %712 = vmatprep.subr.mxu0 0.0
    %713 = vmatpush1.msra.mxu0 0.0
    %714 = vmatprep.subr.mxu0 0.0
    %715 = vmatpush1.msra.mxu0 0.0
    %716 = vmatprep.subr.mxu0 0.0
    %717 = vmatpush1.msra.mxu0 0.0
    %718 = vmatprep.subr.mxu0 0.0
    %719 = vmatpush1.msra.mxu0 0.0
    %720 = vmatprep.subr.mxu0 0.0
    %721 = vmatpush1.msra.mxu0 0.0
    %722 = vmatprep.subr.mxu0 0.0
    %723 = vmatpush1.msra.mxu0 0.0
    %724 = vmatprep.subr.mxu0 0.0
    %725 = vmatpush1.msra.mxu0 0.0
    %726 = vmatprep.subr.mxu0 0.0
    %727 = vmatpush1.msra.mxu0 0.0
    %728 = vmatprep.subr.mxu0 0.0
    %729 = vmatpush1.msra.mxu0 0.0
    %730 = vmatprep.mubr.f32.mxu0 0.0
    %731 = vmatmul.mubr.f32.gmra.mrb[0].mxu0 %v660
    %v732 = vpop.f32.mrb[0].mxu0
    %v733 = vadd.f32 0.0, %v732
    %v734 = vpop.f32.mrb[0].mxu0
    %735 = vdwg.mxu0
    %v736 = vmul.f32 %v665, %v733
    %v737 = vsub.f32 %v586, %v736
    %v738 = vtanh.pop %v737
    %739 = vmatprep.subr.mxu0 0.0
    %740 = vmatpush1.xpose.msra.mxu0 %v84
    %741 = vmatprep.subr.mxu0 0.0
    %742 = vmatpush1.xpose.msra.mxu0 %v85
    %743 = vmatprep.subr.mxu0 0.0
    %744 = vmatpush1.xpose.msra.mxu0 %v86
    %745 = vmatprep.subr.mxu0 0.0
    %746 = vmatpush1.xpose.msra.mxu0 %v87
    %747 = vmatprep.subr.mxu0 0.0
    %748 = vmatpush1.xpose.msra.mxu0 %v88
    %749 = vmatprep.subr.mxu0 0.0
    %750 = vmatpush1.xpose.msra.mxu0 %v89
    %751 = vmatprep.subr.mxu0 0.0
    %752 = vmatpush1.xpose.msra.mxu0 %v90
    %753 = vmatprep.subr.mxu0 0.0
    %754 = vmatpush1.xpose.msra.mxu0 %v91
    %755 = vmatprep.subr.mxu0 0.0
    %756 = vmatpush1.xpose.msra.mxu0 %v92
    %757 = vmatprep.subr.mxu0 0.0
    %758 = vmatpush1.xpose.msra.mxu0 %v93
    %759 = vmatprep.subr.mxu0 0.0
    %760 = vmatpush1.xpose.msra.mxu0 %v94
    %761 = vmatprep.subr.mxu0 0.0
    %762 = vmatpush1.xpose.msra.mxu0 %v95
    %763 = vmatprep.subr.mxu0 0.0
    %764 = vmatpush1.xpose.msra.mxu0 %v96
    %765 = vmatprep.subr.mxu0 0.0
    %766 = vmatpush1.xpose.msra.mxu0 %v97
    %767 = vmatprep.subr.mxu0 0.0
    %768 = vmatpush1.xpose.msra.mxu0 %v98
    %769 = vmatprep.subr.mxu0 0.0
    %770 = vmatpush1.xpose.msra.mxu0 %v99
    %771 = vmatprep.subr.mxu0 0.0
    %772 = vmatpush1.xpose.msra.mxu0 0.0
    %773 = vmatprep.subr.mxu0 0.0
    %774 = vmatpush1.xpose.msra.mxu0 0.0
    %775 = vmatprep.subr.mxu0 0.0
    %776 = vmatpush1.xpose.msra.mxu0 0.0
    %777 = vmatprep.subr.mxu0 0.0
    %778 = vmatpush1.xpose.msra.mxu0 0.0
    %779 = vmatprep.subr.mxu0 0.0
    %780 = vmatpush1.xpose.msra.mxu0 0.0
    %781 = vmatprep.subr.mxu0 0.0
    %782 = vmatpush1.xpose.msra.mxu0 0.0
    %783 = vmatprep.subr.mxu0 0.0
    %784 = vmatpush1.xpose.msra.mxu0 0.0
    %785 = vmatprep.subr.mxu0 0.0
    %786 = vmatpush1.xpose.msra.mxu0 0.0
    %787 = vmatprep.subr.mxu0 0.0
    %788 = vmatpush1.xpose.msra.mxu0 0.0
    %789 = vmatprep.subr.mxu0 0.0
    %790 = vmatpush1.xpose.msra.mxu0 0.0
    %791 = vmatprep.subr.mxu0 0.0
    %792 = vmatpush1.xpose.msra.mxu0 0.0
    %793 = vmatprep.subr.mxu0 0.0
    %794 = vmatpush1.xpose.msra.mxu0 0.0
    %795 = vmatprep.subr.mxu0 0.0
    %796 = vmatpush1.xpose.msra.mxu0 0.0
    %797 = vmatprep.subr.mxu0 0.0
    %798 = vmatpush1.xpose.msra.mxu0 0.0
    %799 = vmatprep.subr.mxu0 0.0
    %800 = vmatpush1.xpose.msra.mxu0 0.0
    %801 = vmatprep.subr.mxu0 0.0
    %802 = vmatpush1.xpose.msra.mxu0 0.0
    %803 = vmatprep.mubr.f32.mxu0 0.0
    %804 = vmatmul.mubr.f32.gmra.mrb[0].mxu0 %v738
    %v805 = vpop.f32.mrb[0].mxu0
    %v806 = vadd.f32 %v121, %v805
    %v807 = vpop.f32.mrb[0].mxu0
    %808 = vdwg.mxu0
    %v809 = vsub.f32 %v806, %v737
    %v810 = vmul.f32 %v809, 0.5
    %v811 = vsub.f32 %v509, %v810
    %v812 = vmul.f32 %v811, 0.1
    %v813 = vsub.f32 %v509, %v812
    %v814 = vadd.f32 %v737, %v813
    %v815 = vmul.f32 %v738, %v738
    %v816 = vsub.f32 1.0, %v815
    %817 = vmatprep.subr.mxu0 0.0
    %818 = vmatpush1.msra.mxu0 %v84
    %819 = vmatprep.subr.mxu0 0.0
    %820 = vmatpush1.msra.mxu0 %v85
    %821 = vmatprep.subr.mxu0 0.0
    %822 = vmatpush1.msra.mxu0 %v86
    %823 = vmatprep.subr.mxu0 0.0
    %824 = vmatpush1.msra.mxu0 %v87
    %825 = vmatprep.subr.mxu0 0.0
    %826 = vmatpush1.msra.mxu0 %v88
    %827 = vmatprep.subr.mxu0 0.0
    %828 = vmatpush1.msra.mxu0 %v89
    %829 = vmatprep.subr.mxu0 0.0
    %830 = vmatpush1.msra.mxu0 %v90
    %831 = vmatprep.subr.mxu0 0.0
    %832 = vmatpush1.msra.mxu0 %v91
    %833 = vmatprep.subr.mxu0 0.0
    %834 = vmatpush1.msra.mxu0 %v92
    %835 = vmatprep.subr.mxu0 0.0
    %836 = vmatpush1.msra.mxu0 %v93
    %837 = vmatprep.subr.mxu0 0.0
    %838 = vmatpush1.msra.mxu0 %v94
    %839 = vmatprep.subr.mxu0 0.0
    %840 = vmatpush1.msra.mxu0 %v95
    %841 = vmatprep.subr.mxu0 0.0
    %842 = vmatpush1.msra.mxu0 %v96
    %843 = vmatprep.subr.mxu0 0.0
    %844 = vmatpush1.msra.mxu0 %v97
    %845 = vmatprep.subr.mxu0 0.0
    %846 = vmatpush1.msra.mxu0 %v98
    %847 = vmatprep.subr.mxu0 0.0
    %848 = vmatpush1.msra.mxu0 %v99
    %849 = vmatprep.subr.mxu0 0.0
    %850 = vmatpush1.msra.mxu0 0.0
    %851 = vmatprep.subr.mxu0 0.0
    %852 = vmatpush1.msra.mxu0 0.0
    %853 = vmatprep.subr.mxu0 0.0
    %854 = vmatpush1.msra.mxu0 0.0
    %855 = vmatprep.subr.mxu0 0.0
    %856 = vmatpush1.msra.mxu0 0.0
    %857 = vmatprep.subr.mxu0 0.0
    %858 = vmatpush1.msra.mxu0 0.0
    %859 = vmatprep.subr.mxu0 0.0
    %860 = vmatpush1.msra.mxu0 0.0
    %861 = vmatprep.subr.mxu0 0.0
    %862 = vmatpush1.msra.mxu0 0.0
    %863 = vmatprep.subr.mxu0 0.0
    %864 = vmatpush1.msra.mxu0 0.0
    %865 = vmatprep.subr.mxu0 0.0
    %866 = vmatpush1.msra.mxu0 0.0
    %867 = vmatprep.subr.mxu0 0.0
    %868 = vmatpush1.msra.mxu0 0.0
    %869 = vmatprep.subr.mxu0 0.0
    %870 = vmatpush1.msra.mxu0 0.0
    %871 = vmatprep.subr.mxu0 0.0
    %872 = vmatpush1.msra.mxu0 0.0
    %873 = vmatprep.subr.mxu0 0.0
    %874 = vmatpush1.msra.mxu0 0.0
    %875 = vmatprep.subr.mxu0 0.0
    %876 = vmatpush1.msra.mxu0 0.0
    %877 = vmatprep.subr.mxu0 0.0
    %878 = vmatpush1.msra.mxu0 0.0
    %879 = vmatprep.subr.mxu0 0.0
    %880 = vmatpush1.msra.mxu0 0.0
    %881 = vmatprep.mubr.f32.mxu0 0.0
    %882 = vmatmul.mubr.f32.gmra.mrb[0].mxu0 %v811
    %v883 = vpop.f32.mrb[0].mxu0
    %v884 = vadd.f32 0.0, %v883
    %v885 = vpop.f32.mrb[0].mxu0
    %886 = vdwg.mxu0
    %v887 = vmul.f32 %v816, %v884
    %v888 = vsub.f32 %v887, %v811
    %v889 = vmul.f32 %v888, 0.05
    %v890 = vadd.f32 %v814, %v889
    %v891 = vtanh.pop %v890
    %892 = vmatprep.subr.mxu0 0.0
    %893 = vmatpush1.xpose.msra.mxu0 %v100
    %894 = vmatprep.subr.mxu0 0.0
    %895 = vmatpush1.xpose.msra.mxu0 %v101
    %896 = vmatprep.subr.mxu0 0.0
    %897 = vmatpush1.xpose.msra.mxu0 %v102
    %898 = vmatprep.subr.mxu0 0.0
    %899 = vmatpush1.xpose.msra.mxu0 %v103
    %900 = vmatprep.subr.mxu0 0.0
    %901 = vmatpush1.xpose.msra.mxu0 %v104
    %902 = vmatprep.subr.mxu0 0.0
    %903 = vmatpush1.xpose.msra.mxu0 %v105
    %904 = vmatprep.subr.mxu0 0.0
    %905 = vmatpush1.xpose.msra.mxu0 %v106
    %906 = vmatprep.subr.mxu0 0.0
    %907 = vmatpush1.xpose.msra.mxu0 %v107
    %908 = vmatprep.subr.mxu0 0.0
    %909 = vmatpush1.xpose.msra.mxu0 %v108
    %910 = vmatprep.subr.mxu0 0.0
    %911 = vmatpush1.xpose.msra.mxu0 %v109
    %912 = vmatprep.subr.mxu0 0.0
    %913 = vmatpush1.xpose.msra.mxu0 %v110
    %914 = vmatprep.subr.mxu0 0.0
    %915 = vmatpush1.xpose.msra.mxu0 %v111
    %916 = vmatprep.subr.mxu0 0.0
    %917 = vmatpush1.xpose.msra.mxu0 %v112
    %918 = vmatprep.subr.mxu0 0.0
    %919 = vmatpush1.xpose.msra.mxu0 %v113
    %920 = vmatprep.subr.mxu0 0.0
    %921 = vmatpush1.xpose.msra.mxu0 %v114
    %922 = vmatprep.subr.mxu0 0.0
    %923 = vmatpush1.xpose.msra.mxu0 %v115
    %924 = vmatprep.subr.mxu0 0.0
    %925 = vmatpush1.xpose.msra.mxu0 0.0
    %926 = vmatprep.subr.mxu0 0.0
    %927 = vmatpush1.xpose.msra.mxu0 0.0
    %928 = vmatprep.subr.mxu0 0.0
    %929 = vmatpush1.xpose.msra.mxu0 0.0
    %930 = vmatprep.subr.mxu0 0.0
    %931 = vmatpush1.xpose.msra.mxu0 0.0
    %932 = vmatprep.subr.mxu0 0.0
    %933 = vmatpush1.xpose.msra.mxu0 0.0
    %934 = vmatprep.subr.mxu0 0.0
    %935 = vmatpush1.xpose.msra.mxu0 0.0
    %936 = vmatprep.subr.mxu0 0.0
    %937 = vmatpush1.xpose.msra.mxu0 0.0
    %938 = vmatprep.subr.mxu0 0.0
    %939 = vmatpush1.xpose.msra.mxu0 0.0
    %940 = vmatprep.subr.mxu0 0.0
    %941 = vmatpush1.xpose.msra.mxu0 0.0
    %942 = vmatprep.subr.mxu0 0.0
    %943 = vmatpush1.xpose.msra.mxu0 0.0
    %944 = vmatprep.subr.mxu0 0.0
    %945 = vmatpush1.xpose.msra.mxu0 0.0
    %946 = vmatprep.subr.mxu0 0.0
    %947 = vmatpush1.xpose.msra.mxu0 0.0
    %948 = vmatprep.subr.mxu0 0.0
    %949 = vmatpush1.xpose.msra.mxu0 0.0
    %950 = vmatprep.subr.mxu0 0.0
    %951 = vmatpush1.xpose.msra.mxu0 0.0
    %952 = vmatprep.subr.mxu0 0.0
    %953 = vmatpush1.xpose.msra.mxu0 0.0
    %954 = vmatprep.subr.mxu0 0.0
    %955 = vmatpush1.xpose.msra.mxu0 0.0
    %956 = vmatprep.mubr.f32.mxu0 0.0
    %957 = vmatmul.mubr.f32.gmra.mrb[0].mxu0 %v891
    %v958 = vpop.f32.mrb[0].mxu0
    %v959 = vadd.f32 %v128, %v958
    %v960 = vpop.f32.mrb[0].mxu0
    %961 = vdwg.mxu0
    %s962 = scalar_lea.vmem [#allocation4], 16
    %v963 = vld [vmem:[%s962] sm:$0xff]
    %v964 = vsub.f32 %v959, %v963
    %s965 = scalar_lea.vmem [#allocation12], 16
    %966 = vst [vmem:[%s965] sm:$0xff] %v964
    %v967 = vmul.f32 %v891, %v891
    %v968 = vsub.f32 1.0, %v967
    %v969 = vmul.f32 %v968, 0.05
    %970 = vmatprep.subr.mxu0 0.0
    %971 = vmatpush1.msra.mxu0 %v100
    %972 = vmatprep.subr.mxu0 0.0
    %973 = vmatpush1.msra.mxu0 %v101
    %974 = vmatprep.subr.mxu0 0.0
    %975 = vmatpush1.msra.mxu0 %v102
    %976 = vmatprep.subr.mxu0 0.0
    %977 = vmatpush1.msra.mxu0 %v103
    %978 = vmatprep.subr.mxu0 0.0
    %979 = vmatpush1.msra.mxu0 %v104
    %980 = vmatprep.subr.mxu0 0.0
    %981 = vmatpush1.msra.mxu0 %v105
    %982 = vmatprep.subr.mxu0 0.0
    %983 = vmatpush1.msra.mxu0 %v106
    %984 = vmatprep.subr.mxu0 0.0
    %985 = vmatpush1.msra.mxu0 %v107
    %986 = vmatprep.subr.mxu0 0.0
    %987 = vmatpush1.msra.mxu0 %v108
    %988 = vmatprep.subr.mxu0 0.0
    %989 = vmatpush1.msra.mxu0 %v109
    %990 = vmatprep.subr.mxu0 0.0
    %991 = vmatpush1.msra.mxu0 %v110
    %992 = vmatprep.subr.mxu0 0.0
    %993 = vmatpush1.msra.mxu0 %v111
    %994 = vmatprep.subr.mxu0 0.0
    %995 = vmatpush1.msra.mxu0 %v112
    %996 = vmatprep.subr.mxu0 0.0
    %997 = vmatpush1.msra.mxu0 %v113
    %998 = vmatprep.subr.mxu0 0.0
    %999 = vmatpush1.msra.mxu0 %v114
    %1000 = vmatprep.subr.mxu0 0.0
    %1001 = vmatpush1.msra.mxu0 %v115
    %1002 = vmatprep.subr.mxu0 0.0
    %1003 = vmatpush1.msra.mxu0 0.0
    %1004 = vmatprep.subr.mxu0 0.0
    %1005 = vmatpush1.msra.mxu0 0.0
    %1006 = vmatprep.subr.mxu0 0.0
    %1007 = vmatpush1.msra.mxu0 0.0
    %1008 = vmatprep.subr.mxu0 0.0
    %1009 = vmatpush1.msra.mxu0 0.0
    %1010 = vmatprep.subr.mxu0 0.0
    %1011 = vmatpush1.msra.mxu0 0.0
    %1012 = vmatprep.subr.mxu0 0.0
    %1013 = vmatpush1.msra.mxu0 0.0
    %1014 = vmatprep.subr.mxu0 0.0
    %1015 = vmatpush1.msra.mxu0 0.0
    %1016 = vmatprep.subr.mxu0 0.0
    %1017 = vmatpush1.msra.mxu0 0.0
    %1018 = vmatprep.subr.mxu0 0.0
    %1019 = vmatpush1.msra.mxu0 0.0
    %1020 = vmatprep.subr.mxu0 0.0
    %1021 = vmatpush1.msra.mxu0 0.0
    %1022 = vmatprep.subr.mxu0 0.0
    %1023 = vmatpush1.msra.mxu0 0.0
    %1024 = vmatprep.subr.mxu0 0.0
    %1025 = vmatpush1.msra.mxu0 0.0
    %1026 = vmatprep.subr.mxu0 0.0
    %1027 = vmatpush1.msra.mxu0 0.0
    %1028 = vmatprep.subr.mxu0 0.0
    %1029 = vmatpush1.msra.mxu0 0.0
    %1030 = vmatprep.subr.mxu0 0.0
    %1031 = vmatpush1.msra.mxu0 0.0
    %1032 = vmatprep.subr.mxu0 0.0
    %1033 = vmatpush1.msra.mxu0 0.0
    %1034 = vmatprep.mubr.f32.mxu0 0.0
    %1035 = vmatmul.mubr.f32.gmra.mrb[0].mxu0 %v964
    %v1036 = vpop.f32.mrb[0].mxu0
    %v1037 = vadd.f32 0.0, %v1036
    %v1038 = vpop.f32.mrb[0].mxu0
    %1039 = vdwg.mxu0
    %v1040 = vmul.f32 %v969, %v1037
    %v1041 = vsub.f32 %v890, %v1040
    %v1042 = vtanh.pop %v1041
    %1043 = vmatprep.subr.mxu0 0.0
    %1044 = vmatpush1.xpose.msra.mxu0 %v84
    %1045 = vmatprep.subr.mxu0 0.0
    %1046 = vmatpush1.xpose.msra.mxu0 %v85
    %1047 = vmatprep.subr.mxu0 0.0
    %1048 = vmatpush1.xpose.msra.mxu0 %v86
    %1049 = vmatprep.subr.mxu0 0.0
    %1050 = vmatpush1.xpose.msra.mxu0 %v87
    %1051 = vmatprep.subr.mxu0 0.0
    %1052 = vmatpush1.xpose.msra.mxu0 %v88
    %1053 = vmatprep.subr.mxu0 0.0
    %1054 = vmatpush1.xpose.msra.mxu0 %v89
    %1055 = vmatprep.subr.mxu0 0.0
    %1056 = vmatpush1.xpose.msra.mxu0 %v90
    %1057 = vmatprep.subr.mxu0 0.0
    %1058 = vmatpush1.xpose.msra.mxu0 %v91
    %1059 = vmatprep.subr.mxu0 0.0
    %1060 = vmatpush1.xpose.msra.mxu0 %v92
    %1061 = vmatprep.subr.mxu0 0.0
    %1062 = vmatpush1.xpose.msra.mxu0 %v93
    %1063 = vmatprep.subr.mxu0 0.0
    %1064 = vmatpush1.xpose.msra.mxu0 %v94
    %1065 = vmatprep.subr.mxu0 0.0
    %1066 = vmatpush1.xpose.msra.mxu0 %v95
    %1067 = vmatprep.subr.mxu0 0.0
    %1068 = vmatpush1.xpose.msra.mxu0 %v96
    %1069 = vmatprep.subr.mxu0 0.0
    %1070 = vmatpush1.xpose.msra.mxu0 %v97
    %1071 = vmatprep.subr.mxu0 0.0
    %1072 = vmatpush1.xpose.msra.mxu0 %v98
    %1073 = vmatprep.subr.mxu0 0.0
    %1074 = vmatpush1.xpose.msra.mxu0 %v99
    %1075 = vmatprep.subr.mxu0 0.0
    %1076 = vmatpush1.xpose.msra.mxu0 0.0
    %1077 = vmatprep.subr.mxu0 0.0
    %1078 = vmatpush1.xpose.msra.mxu0 0.0
    %1079 = vmatprep.subr.mxu0 0.0
    %1080 = vmatpush1.xpose.msra.mxu0 0.0
    %1081 = vmatprep.subr.mxu0 0.0
    %1082 = vmatpush1.xpose.msra.mxu0 0.0
    %1083 = vmatprep.subr.mxu0 0.0
    %1084 = vmatpush1.xpose.msra.mxu0 0.0
    %1085 = vmatprep.subr.mxu0 0.0
    %1086 = vmatpush1.xpose.msra.mxu0 0.0
    %1087 = vmatprep.subr.mxu0 0.0
    %1088 = vmatpush1.xpose.msra.mxu0 0.0
    %1089 = vmatprep.subr.mxu0 0.0
    %1090 = vmatpush1.xpose.msra.mxu0 0.0
    %1091 = vmatprep.subr.mxu0 0.0
    %1092 = vmatpush1.xpose.msra.mxu0 0.0
    %1093 = vmatprep.subr.mxu0 0.0
    %1094 = vmatpush1.xpose.msra.mxu0 0.0
    %1095 = vmatprep.subr.mxu0 0.0
    %1096 = vmatpush1.xpose.msra.mxu0 0.0
    %1097 = vmatprep.subr.mxu0 0.0
    %1098 = vmatpush1.xpose.msra.mxu0 0.0
    %1099 = vmatprep.subr.mxu0 0.0
    %1100 = vmatpush1.xpose.msra.mxu0 0.0
    %1101 = vmatprep.subr.mxu0 0.0
    %1102 = vmatpush1.xpose.msra.mxu0 0.0
    %1103 = vmatprep.subr.mxu0 0.0
    %1104 = vmatpush1.xpose.msra.mxu0 0.0
    %1105 = vmatprep.subr.mxu0 0.0
    %1106 = vmatpush1.xpose.msra.mxu0 0.0
    %1107 = vmatprep.mubr.f32.mxu0 0.0
    %1108 = vmatmul.mubr.f32.gmra.mrb[0].mxu0 %v1042
    %v1109 = vpop.f32.mrb[0].mxu0
    %v1110 = vadd.f32 %v121, %v1109
    %v1111 = vpop.f32.mrb[0].mxu0
    %1112 = vdwg.mxu0
    %v1113 = vsub.f32 %v1110, %v1041
    %v1114 = vmul.f32 %v1113, 0.5
    %v1115 = vsub.f32 %v813, %v1114
    %v1116 = vmul.f32 %v1115, 0.1
    %v1117 = vsub.f32 %v813, %v1116
    %v1118 = vadd.f32 %v1041, %v1117
    %v1119 = vmul.f32 %v1042, %v1042
    %v1120 = vsub.f32 1.0, %v1119
    %1121 = vmatprep.subr.mxu0 0.0
    %1122 = vmatpush1.msra.mxu0 %v84
    %1123 = vmatprep.subr.mxu0 0.0
    %1124 = vmatpush1.msra.mxu0 %v85
    %1125 = vmatprep.subr.mxu0 0.0
    %1126 = vmatpush1.msra.mxu0 %v86
    %1127 = vmatprep.subr.mxu0 0.0
    %1128 = vmatpush1.msra.mxu0 %v87
    %1129 = vmatprep.subr.mxu0 0.0
    %1130 = vmatpush1.msra.mxu0 %v88
    %1131 = vmatprep.subr.mxu0 0.0
    %1132 = vmatpush1.msra.mxu0 %v89
    %1133 = vmatprep.subr.mxu0 0.0
    %1134 = vmatpush1.msra.mxu0 %v90
    %1135 = vmatprep.subr.mxu0 0.0
    %1136 = vmatpush1.msra.mxu0 %v91
    %1137 = vmatprep.subr.mxu0 0.0
    %1138 = vmatpush1.msra.mxu0 %v92
    %1139 = vmatprep.subr.mxu0 0.0
    %1140 = vmatpush1.msra.mxu0 %v93
    %1141 = vmatprep.subr.mxu0 0.0
    %1142 = vmatpush1.msra.mxu0 %v94
    %1143 = vmatprep.subr.mxu0 0.0
    %1144 = vmatpush1.msra.mxu0 %v95
    %1145 = vmatprep.subr.mxu0 0.0
    %1146 = vmatpush1.msra.mxu0 %v96
    %1147 = vmatprep.subr.mxu0 0.0
    %1148 = vmatpush1.msra.mxu0 %v97
    %1149 = vmatprep.subr.mxu0 0.0
    %1150 = vmatpush1.msra.mxu0 %v98
    %1151 = vmatprep.subr.mxu0 0.0
    %1152 = vmatpush1.msra.mxu0 %v99
    %1153 = vmatprep.subr.mxu0 0.0
    %1154 = vmatpush1.msra.mxu0 0.0
    %1155 = vmatprep.subr.mxu0 0.0
    %1156 = vmatpush1.msra.mxu0 0.0
    %1157 = vmatprep.subr.mxu0 0.0
    %1158 = vmatpush1.msra.mxu0 0.0
    %1159 = vmatprep.subr.mxu0 0.0
    %1160 = vmatpush1.msra.mxu0 0.0
    %1161 = vmatprep.subr.mxu0 0.0
    %1162 = vmatpush1.msra.mxu0 0.0
    %1163 = vmatprep.subr.mxu0 0.0
    %1164 = vmatpush1.msra.mxu0 0.0
    %1165 = vmatprep.subr.mxu0 0.0
    %1166 = vmatpush1.msra.mxu0 0.0
    %1167 = vmatprep.subr.mxu0 0.0
    %1168 = vmatpush1.msra.mxu0 0.0
    %1169 = vmatprep.subr.mxu0 0.0
    %1170 = vmatpush1.msra.mxu0 0.0
    %1171 = vmatprep.subr.mxu0 0.0
    %1172 = vmatpush1.msra.mxu0 0.0
    %1173 = vmatprep.subr.mxu0 0.0
    %1174 = vmatpush1.msra.mxu0 0.0
    %1175 = vmatprep.subr.mxu0 0.0
    %1176 = vmatpush1.msra.mxu0 0.0
    %1177 = vmatprep.subr.mxu0 0.0
    %1178 = vmatpush1.msra.mxu0 0.0
    %1179 = vmatprep.subr.mxu0 0.0
    %1180 = vmatpush1.msra.mxu0 0.0
    %1181 = vmatprep.subr.mxu0 0.0
    %1182 = vmatpush1.msra.mxu0 0.0
    %1183 = vmatprep.subr.mxu0 0.0
    %1184 = vmatpush1.msra.mxu0 0.0
    %1185 = vmatprep.mubr.f32.mxu0 0.0
    %1186 = vmatmul.mubr.f32.gmra.mrb[0].mxu0 %v1115
    %v1187 = vpop.f32.mrb[0].mxu0
    %v1188 = vadd.f32 0.0, %v1187
    %v1189 = vpop.f32.mrb[0].mxu0
    %1190 = vdwg.mxu0
    %v1191 = vmul.f32 %v1120, %v1188
    %v1192 = vsub.f32 %v1191, %v1115
    %v1193 = vmul.f32 %v1192, 0.05
    %v1194 = vadd.f32 %v1118, %v1193
    %v1195 = vtanh.pop %v1194
    %1196 = vmatprep.subr.mxu0 0.0
    %1197 = vmatpush1.xpose.msra.mxu0 %v100
    %1198 = vmatprep.subr.mxu0 0.0
    %1199 = vmatpush1.xpose.msra.mxu0 %v101
    %1200 = vmatprep.subr.mxu0 0.0
    %1201 = vmatpush1.xpose.msra.mxu0 %v102
    %1202 = vmatprep.subr.mxu0 0.0
    %1203 = vmatpush1.xpose.msra.mxu0 %v103
    %1204 = vmatprep.subr.mxu0 0.0
    %1205 = vmatpush1.xpose.msra.mxu0 %v104
    %1206 = vmatprep.subr.mxu0 0.0
    %1207 = vmatpush1.xpose.msra.mxu0 %v105
    %1208 = vmatprep.subr.mxu0 0.0
    %1209 = vmatpush1.xpose.msra.mxu0 %v106
    %1210 = vmatprep.subr.mxu0 0.0
    %1211 = vmatpush1.xpose.msra.mxu0 %v107
    %1212 = vmatprep.subr.mxu0 0.0
    %1213 = vmatpush1.xpose.msra.mxu0 %v108
    %1214 = vmatprep.subr.mxu0 0.0
    %1215 = vmatpush1.xpose.msra.mxu0 %v109
    %1216 = vmatprep.subr.mxu0 0.0
    %1217 = vmatpush1.xpose.msra.mxu0 %v110
    %1218 = vmatprep.subr.mxu0 0.0
    %1219 = vmatpush1.xpose.msra.mxu0 %v111
    %1220 = vmatprep.subr.mxu0 0.0
    %1221 = vmatpush1.xpose.msra.mxu0 %v112
    %1222 = vmatprep.subr.mxu0 0.0
    %1223 = vmatpush1.xpose.msra.mxu0 %v113
    %1224 = vmatprep.subr.mxu0 0.0
    %1225 = vmatpush1.xpose.msra.mxu0 %v114
    %1226 = vmatprep.subr.mxu0 0.0
    %1227 = vmatpush1.xpose.msra.mxu0 %v115
    %1228 = vmatprep.subr.mxu0 0.0
    %1229 = vmatpush1.xpose.msra.mxu0 0.0
    %1230 = vmatprep.subr.mxu0 0.0
    %1231 = vmatpush1.xpose.msra.mxu0 0.0
    %1232 = vmatprep.subr.mxu0 0.0
    %1233 = vmatpush1.xpose.msra.mxu0 0.0
    %1234 = vmatprep.subr.mxu0 0.0
    %1235 = vmatpush1.xpose.msra.mxu0 0.0
    %1236 = vmatprep.subr.mxu0 0.0
    %1237 = vmatpush1.xpose.msra.mxu0 0.0
    %1238 = vmatprep.subr.mxu0 0.0
    %1239 = vmatpush1.xpose.msra.mxu0 0.0
    %1240 = vmatprep.subr.mxu0 0.0
    %1241 = vmatpush1.xpose.msra.mxu0 0.0
    %1242 = vmatprep.subr.mxu0 0.0
    %1243 = vmatpush1.xpose.msra.mxu0 0.0
    %1244 = vmatprep.subr.mxu0 0.0
    %1245 = vmatpush1.xpose.msra.mxu0 0.0
    %1246 = vmatprep.subr.mxu0 0.0
    %1247 = vmatpush1.xpose.msra.mxu0 0.0
    %1248 = vmatprep.subr.mxu0 0.0
    %1249 = vmatpush1.xpose.msra.mxu0 0.0
    %1250 = vmatprep.subr.mxu0 0.0
    %1251 = vmatpush1.xpose.msra.mxu0 0.0
    %1252 = vmatprep.subr.mxu0 0.0
    %1253 = vmatpush1.xpose.msra.mxu0 0.0
    %1254 = vmatprep.subr.mxu0 0.0
    %1255 = vmatpush1.xpose.msra.mxu0 0.0
    %1256 = vmatprep.subr.mxu0 0.0
    %1257 = vmatpush1.xpose.msra.mxu0 0.0
    %1258 = vmatprep.subr.mxu0 0.0
    %1259 = vmatpush1.xpose.msra.mxu0 0.0
    %1260 = vmatprep.mubr.f32.mxu0 0.0
    %1261 = vmatmul.mubr.f32.gmra.mrb[0].mxu0 %v1195
    %v1262 = vpop.f32.mrb[0].mxu0
    %v1263 = vadd.f32 %v128, %v1262
    %v1264 = vpop.f32.mrb[0].mxu0
    %1265 = vdwg.mxu0
    %s1266 = scalar_lea.vmem [#allocation4], 24
    %v1267 = vld [vmem:[%s1266] sm:$0xff]
    %v1268 = vsub.f32 %v1263, %v1267
    %s1269 = scalar_lea.vmem [#allocation12], 24
    %1270 = vst [vmem:[%s1269] sm:$0xff] %v1268
    %v1271 = vmul.f32 %v1195, %v1195
    %v1272 = vsub.f32 1.0, %v1271
    %v1273 = vmul.f32 %v1272, 0.05
    %1274 = vmatprep.subr.mxu0 0.0
    %1275 = vmatpush1.msra.mxu0 %v100
    %1276 = vmatprep.subr.mxu0 0.0
    %1277 = vmatpush1.msra.mxu0 %v101
    %1278 = vmatprep.subr.mxu0 0.0
    %1279 = vmatpush1.msra.mxu0 %v102
    %1280 = vmatprep.subr.mxu0 0.0
    %1281 = vmatpush1.msra.mxu0 %v103
    %1282 = vmatprep.subr.mxu0 0.0
    %1283 = vmatpush1.msra.mxu0 %v104
    %1284 = vmatprep.subr.mxu0 0.0
    %1285 = vmatpush1.msra.mxu0 %v105
    %1286 = vmatprep.subr.mxu0 0.0
    %1287 = vmatpush1.msra.mxu0 %v106
    %1288 = vmatprep.subr.mxu0 0.0
    %1289 = vmatpush1.msra.mxu0 %v107
    %1290 = vmatprep.subr.mxu0 0.0
    %1291 = vmatpush1.msra.mxu0 %v108
    %1292 = vmatprep.subr.mxu0 0.0
    %1293 = vmatpush1.msra.mxu0 %v109
    %1294 = vmatprep.subr.mxu0 0.0
    %1295 = vmatpush1.msra.mxu0 %v110
    %1296 = vmatprep.subr.mxu0 0.0
    %1297 = vmatpush1.msra.mxu0 %v111
    %1298 = vmatprep.subr.mxu0 0.0
    %1299 = vmatpush1.msra.mxu0 %v112
    %1300 = vmatprep.subr.mxu0 0.0
    %1301 = vmatpush1.msra.mxu0 %v113
    %1302 = vmatprep.subr.mxu0 0.0
    %1303 = vmatpush1.msra.mxu0 %v114
    %1304 = vmatprep.subr.mxu0 0.0
    %1305 = vmatpush1.msra.mxu0 %v115
    %1306 = vmatprep.subr.mxu0 0.0
    %1307 = vmatpush1.msra.mxu0 0.0
    %1308 = vmatprep.subr.mxu0 0.0
    %1309 = vmatpush1.msra.mxu0 0.0
    %1310 = vmatprep.subr.mxu0 0.0
    %1311 = vmatpush1.msra.mxu0 0.0
    %1312 = vmatprep.subr.mxu0 0.0
    %1313 = vmatpush1.msra.mxu0 0.0
    %1314 = vmatprep.subr.mxu0 0.0
    %1315 = vmatpush1.msra.mxu0 0.0
    %1316 = vmatprep.subr.mxu0 0.0
    %1317 = vmatpush1.msra.mxu0 0.0
    %1318 = vmatprep.subr.mxu0 0.0
    %1319 = vmatpush1.msra.mxu0 0.0
    %1320 = vmatprep.subr.mxu0 0.0
    %1321 = vmatpush1.msra.mxu0 0.0
    %1322 = vmatprep.subr.mxu0 0.0
    %1323 = vmatpush1.msra.mxu0 0.0
    %1324 = vmatprep.subr.mxu0 0.0
    %1325 = vmatpush1.msra.mxu0 0.0
    %1326 = vmatprep.subr.mxu0 0.0
    %1327 = vmatpush1.msra.mxu0 0.0
    %1328 = vmatprep.subr.mxu0 0.0
    %1329 = vmatpush1.msra.mxu0 0.0
    %1330 = vmatprep.subr.mxu0 0.0
    %1331 = vmatpush1.msra.mxu0 0.0
    %1332 = vmatprep.subr.mxu0 0.0
    %1333 = vmatpush1.msra.mxu0 0.0
    %1334 = vmatprep.subr.mxu0 0.0
    %1335 = vmatpush1.msra.mxu0 0.0
    %1336 = vmatprep.subr.mxu0 0.0
    %1337 = vmatpush1.msra.mxu0 0.0
    %1338 = vmatprep.mubr.f32.mxu0 0.0
    %1339 = vmatmul.mubr.f32.gmra.mrb[0].mxu0 %v1268
    %v1340 = vpop.f32.mrb[0].mxu0
    %v1341 = vadd.f32 0.0, %v1340
    %v1342 = vpop.f32.mrb[0].mxu0
    %1343 = vdwg.mxu0
    %v1344 = vmul.f32 %v1273, %v1341
    %v1345 = vsub.f32 %v1194, %v1344
    %v1346 = vtanh.pop %v1345
    %1347 = vmatprep.subr.mxu0 0.0
    %1348 = vmatpush1.xpose.msra.mxu0 %v84
    %1349 = vmatprep.subr.mxu0 0.0
    %1350 = vmatpush1.xpose.msra.mxu0 %v85
    %1351 = vmatprep.subr.mxu0 0.0
    %1352 = vmatpush1.xpose.msra.mxu0 %v86
    %1353 = vmatprep.subr.mxu0 0.0
    %1354 = vmatpush1.xpose.msra.mxu0 %v87
    %1355 = vmatprep.subr.mxu0 0.0
    %1356 = vmatpush1.xpose.msra.mxu0 %v88
    %1357 = vmatprep.subr.mxu0 0.0
    %1358 = vmatpush1.xpose.msra.mxu0 %v89
    %1359 = vmatprep.subr.mxu0 0.0
    %1360 = vmatpush1.xpose.msra.mxu0 %v90
    %1361 = vmatprep.subr.mxu0 0.0
    %1362 = vmatpush1.xpose.msra.mxu0 %v91
    %1363 = vmatprep.subr.mxu0 0.0
    %1364 = vmatpush1.xpose.msra.mxu0 %v92
    %1365 = vmatprep.subr.mxu0 0.0
    %1366 = vmatpush1.xpose.msra.mxu0 %v93
    %1367 = vmatprep.subr.mxu0 0.0
    %1368 = vmatpush1.xpose.msra.mxu0 %v94
    %1369 = vmatprep.subr.mxu0 0.0
    %1370 = vmatpush1.xpose.msra.mxu0 %v95
    %1371 = vmatprep.subr.mxu0 0.0
    %1372 = vmatpush1.xpose.msra.mxu0 %v96
    %1373 = vmatprep.subr.mxu0 0.0
    %1374 = vmatpush1.xpose.msra.mxu0 %v97
    %1375 = vmatprep.subr.mxu0 0.0
    %1376 = vmatpush1.xpose.msra.mxu0 %v98
    %1377 = vmatprep.subr.mxu0 0.0
    %1378 = vmatpush1.xpose.msra.mxu0 %v99
    %1379 = vmatprep.subr.mxu0 0.0
    %1380 = vmatpush1.xpose.msra.mxu0 0.0
    %1381 = vmatprep.subr.mxu0 0.0
    %1382 = vmatpush1.xpose.msra.mxu0 0.0
    %1383 = vmatprep.subr.mxu0 0.0
    %1384 = vmatpush1.xpose.msra.mxu0 0.0
    %1385 = vmatprep.subr.mxu0 0.0
    %1386 = vmatpush1.xpose.msra.mxu0 0.0
    %1387 = vmatprep.subr.mxu0 0.0
    %1388 = vmatpush1.xpose.msra.mxu0 0.0
    %1389 = vmatprep.subr.mxu0 0.0
    %1390 = vmatpush1.xpose.msra.mxu0 0.0
    %1391 = vmatprep.subr.mxu0 0.0
    %1392 = vmatpush1.xpose.msra.mxu0 0.0
    %1393 = vmatprep.subr.mxu0 0.0
    %1394 = vmatpush1.xpose.msra.mxu0 0.0
    %1395 = vmatprep.subr.mxu0 0.0
    %1396 = vmatpush1.xpose.msra.mxu0 0.0
    %1397 = vmatprep.subr.mxu0 0.0
    %1398 = vmatpush1.xpose.msra.mxu0 0.0
    %1399 = vmatprep.subr.mxu0 0.0
    %1400 = vmatpush1.xpose.msra.mxu0 0.0
    %1401 = vmatprep.subr.mxu0 0.0
    %1402 = vmatpush1.xpose.msra.mxu0 0.0
    %1403 = vmatprep.subr.mxu0 0.0
    %1404 = vmatpush1.xpose.msra.mxu0 0.0
    %1405 = vmatprep.subr.mxu0 0.0
    %1406 = vmatpush1.xpose.msra.mxu0 0.0
    %1407 = vmatprep.subr.mxu0 0.0
    %1408 = vmatpush1.xpose.msra.mxu0 0.0
    %1409 = vmatprep.subr.mxu0 0.0
    %1410 = vmatpush1.xpose.msra.mxu0 0.0
    %1411 = vmatprep.mubr.f32.mxu0 0.0
    %1412 = vmatmul.mubr.f32.gmra.mrb[0].mxu0 %v1346
    %v1413 = vpop.f32.mrb[0].mxu0
    %v1414 = vadd.f32 %v121, %v1413
    %v1415 = vpop.f32.mrb[0].mxu0
    %1416 = vdwg.mxu0
    %v1417 = vsub.f32 %v1414, %v1345
    %v1418 = vmul.f32 %v1417, 0.5
    %v1419 = vsub.f32 %v1117, %v1418
    %v1420 = vmul.f32 %v1419, 0.1
    %v1421 = vsub.f32 %v1117, %v1420
    %v1422 = vadd.f32 %v1345, %v1421
    %v1423 = vmul.f32 %v1346, %v1346
    %v1424 = vsub.f32 1.0, %v1423
    %1425 = vmatprep.subr.mxu0 0.0
    %1426 = vmatpush1.msra.mxu0 %v84
    %1427 = vmatprep.subr.mxu0 0.0
    %1428 = vmatpush1.msra.mxu0 %v85
    %1429 = vmatprep.subr.mxu0 0.0
    %1430 = vmatpush1.msra.mxu0 %v86
    %1431 = vmatprep.subr.mxu0 0.0
    %1432 = vmatpush1.msra.mxu0 %v87
    %1433 = vmatprep.subr.mxu0 0.0
    %1434 = vmatpush1.msra.mxu0 %v88
    %1435 = vmatprep.subr.mxu0 0.0
    %1436 = vmatpush1.msra.mxu0 %v89
    %1437 = vmatprep.subr.mxu0 0.0
    %1438 = vmatpush1.msra.mxu0 %v90
    %1439 = vmatprep.subr.mxu0 0.0
    %1440 = vmatpush1.msra.mxu0 %v91
    %1441 = vmatprep.subr.mxu0 0.0
    %1442 = vmatpush1.msra.mxu0 %v92
    %1443 = vmatprep.subr.mxu0 0.0
    %1444 = vmatpush1.msra.mxu0 %v93
    %1445 = vmatprep.subr.mxu0 0.0
    %1446 = vmatpush1.msra.mxu0 %v94
    %1447 = vmatprep.subr.mxu0 0.0
    %1448 = vmatpush1.msra.mxu0 %v95
    %1449 = vmatprep.subr.mxu0 0.0
    %1450 = vmatpush1.msra.mxu0 %v96
    %1451 = vmatprep.subr.mxu0 0.0
    %1452 = vmatpush1.msra.mxu0 %v97
    %1453 = vmatprep.subr.mxu0 0.0
    %1454 = vmatpush1.msra.mxu0 %v98
    %1455 = vmatprep.subr.mxu0 0.0
    %1456 = vmatpush1.msra.mxu0 %v99
    %1457 = vmatprep.subr.mxu0 0.0
    %1458 = vmatpush1.msra.mxu0 0.0
    %1459 = vmatprep.subr.mxu0 0.0
    %1460 = vmatpush1.msra.mxu0 0.0
    %1461 = vmatprep.subr.mxu0 0.0
    %1462 = vmatpush1.msra.mxu0 0.0
    %1463 = vmatprep.subr.mxu0 0.0
    %1464 = vmatpush1.msra.mxu0 0.0
    %1465 = vmatprep.subr.mxu0 0.0
    %1466 = vmatpush1.msra.mxu0 0.0
    %1467 = vmatprep.subr.mxu0 0.0
    %1468 = vmatpush1.msra.mxu0 0.0
    %1469 = vmatprep.subr.mxu0 0.0
    %1470 = vmatpush1.msra.mxu0 0.0
    %1471 = vmatprep.subr.mxu0 0.0
    %1472 = vmatpush1.msra.mxu0 0.0
    %1473 = vmatprep.subr.mxu0 0.0
    %1474 = vmatpush1.msra.mxu0 0.0
    %1475 = vmatprep.subr.mxu0 0.0
    %1476 = vmatpush1.msra.mxu0 0.0
    %1477 = vmatprep.subr.mxu0 0.0
    %1478 = vmatpush1.msra.mxu0 0.0
    %1479 = vmatprep.subr.mxu0 0.0
    %1480 = vmatpush1.msra.mxu0 0.0
    %1481 = vmatprep.subr.mxu0 0.0
    %1482 = vmatpush1.msra.mxu0 0.0
    %1483 = vmatprep.subr.mxu0 0.0
    %1484 = vmatpush1.msra.mxu0 0.0
    %1485 = vmatprep.subr.mxu0 0.0
    %1486 = vmatpush1.msra.mxu0 0.0
    %1487 = vmatprep.subr.mxu0 0.0
    %1488 = vmatpush1.msra.mxu0 0.0
    %1489 = vmatprep.mubr.f32.mxu0 0.0
    %1490 = vmatmul.mubr.f32.gmra.mrb[0].mxu0 %v1419
    %v1491 = vpop.f32.mrb[0].mxu0
    %v1492 = vadd.f32 0.0, %v1491
    %v1493 = vpop.f32.mrb[0].mxu0
    %1494 = vdwg.mxu0
    %v1495 = vmul.f32 %v1424, %v1492
    %v1496 = vsub.f32 %v1495, %v1419
    %v1497 = vmul.f32 %v1496, 0.05
    %v1498 = vadd.f32 %v1422, %v1497
    %v1499 = vtanh.pop %v1498
    %1500 = vmatprep.subr.mxu0 0.0
    %1501 = vmatpush1.xpose.msra.mxu0 %v100
    %1502 = vmatprep.subr.mxu0 0.0
    %1503 = vmatpush1.xpose.msra.mxu0 %v101
    %1504 = vmatprep.subr.mxu0 0.0
    %1505 = vmatpush1.xpose.msra.mxu0 %v102
    %1506 = vmatprep.subr.mxu0 0.0
    %1507 = vmatpush1.xpose.msra.mxu0 %v103
    %1508 = vmatprep.subr.mxu0 0.0
    %1509 = vmatpush1.xpose.msra.mxu0 %v104
    %1510 = vmatprep.subr.mxu0 0.0
    %1511 = vmatpush1.xpose.msra.mxu0 %v105
    %1512 = vmatprep.subr.mxu0 0.0
    %1513 = vmatpush1.xpose.msra.mxu0 %v106
    %1514 = vmatprep.subr.mxu0 0.0
    %1515 = vmatpush1.xpose.msra.mxu0 %v107
    %1516 = vmatprep.subr.mxu0 0.0
    %1517 = vmatpush1.xpose.msra.mxu0 %v108
    %1518 = vmatprep.subr.mxu0 0.0
    %1519 = vmatpush1.xpose.msra.mxu0 %v109
    %1520 = vmatprep.subr.mxu0 0.0
    %1521 = vmatpush1.xpose.msra.mxu0 %v110
    %1522 = vmatprep.subr.mxu0 0.0
    %1523 = vmatpush1.xpose.msra.mxu0 %v111
    %1524 = vmatprep.subr.mxu0 0.0
    %1525 = vmatpush1.xpose.msra.mxu0 %v112
    %1526 = vmatprep.subr.mxu0 0.0
    %1527 = vmatpush1.xpose.msra.mxu0 %v113
    %1528 = vmatprep.subr.mxu0 0.0
    %1529 = vmatpush1.xpose.msra.mxu0 %v114
    %1530 = vmatprep.subr.mxu0 0.0
    %1531 = vmatpush1.xpose.msra.mxu0 %v115
    %1532 = vmatprep.subr.mxu0 0.0
    %1533 = vmatpush1.xpose.msra.mxu0 0.0
    %1534 = vmatprep.subr.mxu0 0.0
    %1535 = vmatpush1.xpose.msra.mxu0 0.0
    %1536 = vmatprep.subr.mxu0 0.0
    %1537 = vmatpush1.xpose.msra.mxu0 0.0
    %1538 = vmatprep.subr.mxu0 0.0
    %1539 = vmatpush1.xpose.msra.mxu0 0.0
    %1540 = vmatprep.subr.mxu0 0.0
    %1541 = vmatpush1.xpose.msra.mxu0 0.0
    %1542 = vmatprep.subr.mxu0 0.0
    %1543 = vmatpush1.xpose.msra.mxu0 0.0
    %1544 = vmatprep.subr.mxu0 0.0
    %1545 = vmatpush1.xpose.msra.mxu0 0.0
    %1546 = vmatprep.subr.mxu0 0.0
    %1547 = vmatpush1.xpose.msra.mxu0 0.0
    %1548 = vmatprep.subr.mxu0 0.0
    %1549 = vmatpush1.xpose.msra.mxu0 0.0
    %1550 = vmatprep.subr.mxu0 0.0
    %1551 = vmatpush1.xpose.msra.mxu0 0.0
    %1552 = vmatprep.subr.mxu0 0.0
    %1553 = vmatpush1.xpose.msra.mxu0 0.0
    %1554 = vmatprep.subr.mxu0 0.0
    %1555 = vmatpush1.xpose.msra.mxu0 0.0
    %1556 = vmatprep.subr.mxu0 0.0
    %1557 = vmatpush1.xpose.msra.mxu0 0.0
    %1558 = vmatprep.subr.mxu0 0.0
    %1559 = vmatpush1.xpose.msra.mxu0 0.0
    %1560 = vmatprep.subr.mxu0 0.0
    %1561 = vmatpush1.xpose.msra.mxu0 0.0
    %1562 = vmatprep.subr.mxu0 0.0
    %1563 = vmatpush1.xpose.msra.mxu0 0.0
    %1564 = vmatprep.mubr.f32.mxu0 0.0
    %1565 = vmatmul.mubr.f32.gmra.mrb[0].mxu0 %v1499
    %v1566 = vpop.f32.mrb[0].mxu0
    %v1567 = vadd.f32 %v128, %v1566
    %v1568 = vpop.f32.mrb[0].mxu0
    %1569 = vdwg.mxu0
    %s1570 = scalar_lea.vmem [#allocation4], 32
    %v1571 = vld [vmem:[%s1570] sm:$0xff]
    %v1572 = vsub.f32 %v1567, %v1571
    %s1573 = scalar_lea.vmem [#allocation12], 32
    %1574 = vst [vmem:[%s1573] sm:$0xff] %v1572
    %v1575 = vmul.f32 %v1499, %v1499
    %v1576 = vsub.f32 1.0, %v1575
    %v1577 = vmul.f32 %v1576, 0.05
    %1578 = vmatprep.subr.mxu0 0.0
    %1579 = vmatpush1.msra.mxu0 %v100
    %1580 = vmatprep.subr.mxu0 0.0
    %1581 = vmatpush1.msra.mxu0 %v101
    %1582 = vmatprep.subr.mxu0 0.0
    %1583 = vmatpush1.msra.mxu0 %v102
    %1584 = vmatprep.subr.mxu0 0.0
    %1585 = vmatpush1.msra.mxu0 %v103
    %1586 = vmatprep.subr.mxu0 0.0
    %1587 = vmatpush1.msra.mxu0 %v104
    %1588 = vmatprep.subr.mxu0 0.0
    %1589 = vmatpush1.msra.mxu0 %v105
    %1590 = vmatprep.subr.mxu0 0.0
    %1591 = vmatpush1.msra.mxu0 %v106
    %1592 = vmatprep.subr.mxu0 0.0
    %1593 = vmatpush1.msra.mxu0 %v107
    %1594 = vmatprep.subr.mxu0 0.0
    %1595 = vmatpush1.msra.mxu0 %v108
    %1596 = vmatprep.subr.mxu0 0.0
    %1597 = vmatpush1.msra.mxu0 %v109
    %1598 = vmatprep.subr.mxu0 0.0
    %1599 = vmatpush1.msra.mxu0 %v110
    %1600 = vmatprep.subr.mxu0 0.0
    %1601 = vmatpush1.msra.mxu0 %v111
    %1602 = vmatprep.subr.mxu0 0.0
    %1603 = vmatpush1.msra.mxu0 %v112
    %1604 = vmatprep.subr.mxu0 0.0
    %1605 = vmatpush1.msra.mxu0 %v113
    %1606 = vmatprep.subr.mxu0 0.0
    %1607 = vmatpush1.msra.mxu0 %v114
    %1608 = vmatprep.subr.mxu0 0.0
    %1609 = vmatpush1.msra.mxu0 %v115
    %1610 = vmatprep.subr.mxu0 0.0
    %1611 = vmatpush1.msra.mxu0 0.0
    %1612 = vmatprep.subr.mxu0 0.0
    %1613 = vmatpush1.msra.mxu0 0.0
    %1614 = vmatprep.subr.mxu0 0.0
    %1615 = vmatpush1.msra.mxu0 0.0
    %1616 = vmatprep.subr.mxu0 0.0
    %1617 = vmatpush1.msra.mxu0 0.0
    %1618 = vmatprep.subr.mxu0 0.0
    %1619 = vmatpush1.msra.mxu0 0.0
    %1620 = vmatprep.subr.mxu0 0.0
    %1621 = vmatpush1.msra.mxu0 0.0
    %1622 = vmatprep.subr.mxu0 0.0
    %1623 = vmatpush1.msra.mxu0 0.0
    %1624 = vmatprep.subr.mxu0 0.0
    %1625 = vmatpush1.msra.mxu0 0.0
    %1626 = vmatprep.subr.mxu0 0.0
    %1627 = vmatpush1.msra.mxu0 0.0
    %1628 = vmatprep.subr.mxu0 0.0
    %1629 = vmatpush1.msra.mxu0 0.0
    %1630 = vmatprep.subr.mxu0 0.0
    %1631 = vmatpush1.msra.mxu0 0.0
    %1632 = vmatprep.subr.mxu0 0.0
    %1633 = vmatpush1.msra.mxu0 0.0
    %1634 = vmatprep.subr.mxu0 0.0
    %1635 = vmatpush1.msra.mxu0 0.0
    %1636 = vmatprep.subr.mxu0 0.0
    %1637 = vmatpush1.msra.mxu0 0.0
    %1638 = vmatprep.subr.mxu0 0.0
    %1639 = vmatpush1.msra.mxu0 0.0
    %1640 = vmatprep.subr.mxu0 0.0
    %1641 = vmatpush1.msra.mxu0 0.0
    %1642 = vmatprep.mubr.f32.mxu0 0.0
    %1643 = vmatmul.mubr.f32.gmra.mrb[0].mxu0 %v1572
    %v1644 = vpop.f32.mrb[0].mxu0
    %v1645 = vadd.f32 0.0, %v1644
    %v1646 = vpop.f32.mrb[0].mxu0
    %1647 = vdwg.mxu0
    %v1648 = vmul.f32 %v1577, %v1645
    %v1649 = vsub.f32 %v1498, %v1648
    %v1650 = vtanh.pop %v1649
    %1651 = vmatprep.subr.mxu0 0.0
    %1652 = vmatpush1.xpose.msra.mxu0 %v84
    %1653 = vmatprep.subr.mxu0 0.0
    %1654 = vmatpush1.xpose.msra.mxu0 %v85
    %1655 = vmatprep.subr.mxu0 0.0
    %1656 = vmatpush1.xpose.msra.mxu0 %v86
    %1657 = vmatprep.subr.mxu0 0.0
    %1658 = vmatpush1.xpose.msra.mxu0 %v87
    %1659 = vmatprep.subr.mxu0 0.0
    %1660 = vmatpush1.xpose.msra.mxu0 %v88
    %1661 = vmatprep.subr.mxu0 0.0
    %1662 = vmatpush1.xpose.msra.mxu0 %v89
    %1663 = vmatprep.subr.mxu0 0.0
    %1664 = vmatpush1.xpose.msra.mxu0 %v90
    %1665 = vmatprep.subr.mxu0 0.0
    %1666 = vmatpush1.xpose.msra.mxu0 %v91
    %1667 = vmatprep.subr.mxu0 0.0
    %1668 = vmatpush1.xpose.msra.mxu0 %v92
    %1669 = vmatprep.subr.mxu0 0.0
    %1670 = vmatpush1.xpose.msra.mxu0 %v93
    %1671 = vmatprep.subr.mxu0 0.0
    %1672 = vmatpush1.xpose.msra.mxu0 %v94
    %1673 = vmatprep.subr.mxu0 0.0
    %1674 = vmatpush1.xpose.msra.mxu0 %v95
    %1675 = vmatprep.subr.mxu0 0.0
    %1676 = vmatpush1.xpose.msra.mxu0 %v96
    %1677 = vmatprep.subr.mxu0 0.0
    %1678 = vmatpush1.xpose.msra.mxu0 %v97
    %1679 = vmatprep.subr.mxu0 0.0
    %1680 = vmatpush1.xpose.msra.mxu0 %v98
    %1681 = vmatprep.subr.mxu0 0.0
    %1682 = vmatpush1.xpose.msra.mxu0 %v99
    %1683 = vmatprep.subr.mxu0 0.0
    %1684 = vmatpush1.xpose.msra.mxu0 0.0
    %1685 = vmatprep.subr.mxu0 0.0
    %1686 = vmatpush1.xpose.msra.mxu0 0.0
    %1687 = vmatprep.subr.mxu0 0.0
    %1688 = vmatpush1.xpose.msra.mxu0 0.0
    %1689 = vmatprep.subr.mxu0 0.0
    %1690 = vmatpush1.xpose.msra.mxu0 0.0
    %1691 = vmatprep.subr.mxu0 0.0
    %1692 = vmatpush1.xpose.msra.mxu0 0.0
    %1693 = vmatprep.subr.mxu0 0.0
    %1694 = vmatpush1.xpose.msra.mxu0 0.0
    %1695 = vmatprep.subr.mxu0 0.0
    %1696 = vmatpush1.xpose.msra.mxu0 0.0
    %1697 = vmatprep.subr.mxu0 0.0
    %1698 = vmatpush1.xpose.msra.mxu0 0.0
    %1699 = vmatprep.subr.mxu0 0.0
    %1700 = vmatpush1.xpose.msra.mxu0 0.0
    %1701 = vmatprep.subr.mxu0 0.0
    %1702 = vmatpush1.xpose.msra.mxu0 0.0
    %1703 = vmatprep.subr.mxu0 0.0
    %1704 = vmatpush1.xpose.msra.mxu0 0.0
    %1705 = vmatprep.subr.mxu0 0.0
    %1706 = vmatpush1.xpose.msra.mxu0 0.0
    %1707 = vmatprep.subr.mxu0 0.0
    %1708 = vmatpush1.xpose.msra.mxu0 0.0
    %1709 = vmatprep.subr.mxu0 0.0
    %1710 = vmatpush1.xpose.msra.mxu0 0.0
    %1711 = vmatprep.subr.mxu0 0.0
    %1712 = vmatpush1.xpose.msra.mxu0 0.0
    %1713 = vmatprep.subr.mxu0 0.0
    %1714 = vmatpush1.xpose.msra.mxu0 0.0
    %1715 = vmatprep.mubr.f32.mxu0 0.0
    %1716 = vmatmul.mubr.f32.gmra.mrb[0].mxu0 %v1650
    %v1717 = vpop.f32.mrb[0].mxu0
    %v1718 = vadd.f32 %v121, %v1717
    %v1719 = vpop.f32.mrb[0].mxu0
    %1720 = vdwg.mxu0
    %v1721 = vsub.f32 %v1718, %v1649
    %v1722 = vmul.f32 %v1721, 0.5
    %v1723 = vsub.f32 %v1421, %v1722
    %v1724 = vmul.f32 %v1723, 0.1
    %v1725 = vsub.f32 %v1421, %v1724
    %v1726 = vadd.f32 %v1649, %v1725
    %v1727 = vmul.f32 %v1650, %v1650
    %v1728 = vsub.f32 1.0, %v1727
    %1729 = vmatprep.subr.mxu0 0.0
    %1730 = vmatpush1.msra.mxu0 %v84
    %1731 = vmatprep.subr.mxu0 0.0
    %1732 = vmatpush1.msra.mxu0 %v85
    %1733 = vmatprep.subr.mxu0 0.0
    %1734 = vmatpush1.msra.mxu0 %v86
    %1735 = vmatprep.subr.mxu0 0.0
    %1736 = vmatpush1.msra.mxu0 %v87
    %1737 = vmatprep.subr.mxu0 0.0
    %1738 = vmatpush1.msra.mxu0 %v88
    %1739 = vmatprep.subr.mxu0 0.0
    %1740 = vmatpush1.msra.mxu0 %v89
    %1741 = vmatprep.subr.mxu0 0.0
    %1742 = vmatpush1.msra.mxu0 %v90
    %1743 = vmatprep.subr.mxu0 0.0
    %1744 = vmatpush1.msra.mxu0 %v91
    %1745 = vmatprep.subr.mxu0 0.0
    %1746 = vmatpush1.msra.mxu0 %v92
    %1747 = vmatprep.subr.mxu0 0.0
    %1748 = vmatpush1.msra.mxu0 %v93
    %1749 = vmatprep.subr.mxu0 0.0
    %1750 = vmatpush1.msra.mxu0 %v94
    %1751 = vmatprep.subr.mxu0 0.0
    %1752 = vmatpush1.msra.mxu0 %v95
    %1753 = vmatprep.subr.mxu0 0.0
    %1754 = vmatpush1.msra.mxu0 %v96
    %1755 = vmatprep.subr.mxu0 0.0
    %1756 = vmatpush1.msra.mxu0 %v97
    %1757 = vmatprep.subr.mxu0 0.0
    %1758 = vmatpush1.msra.mxu0 %v98
    %1759 = vmatprep.subr.mxu0 0.0
    %1760 = vmatpush1.msra.mxu0 %v99
    %1761 = vmatprep.subr.mxu0 0.0
    %1762 = vmatpush1.msra.mxu0 0.0
    %1763 = vmatprep.subr.mxu0 0.0
    %1764 = vmatpush1.msra.mxu0 0.0
    %1765 = vmatprep.subr.mxu0 0.0
    %1766 = vmatpush1.msra.mxu0 0.0
    %1767 = vmatprep.subr.mxu0 0.0
    %1768 = vmatpush1.msra.mxu0 0.0
    %1769 = vmatprep.subr.mxu0 0.0
    %1770 = vmatpush1.msra.mxu0 0.0
    %1771 = vmatprep.subr.mxu0 0.0
    %1772 = vmatpush1.msra.mxu0 0.0
    %1773 = vmatprep.subr.mxu0 0.0
    %1774 = vmatpush1.msra.mxu0 0.0
    %1775 = vmatprep.subr.mxu0 0.0
    %1776 = vmatpush1.msra.mxu0 0.0
    %1777 = vmatprep.subr.mxu0 0.0
    %1778 = vmatpush1.msra.mxu0 0.0
    %1779 = vmatprep.subr.mxu0 0.0
    %1780 = vmatpush1.msra.mxu0 0.0
    %1781 = vmatprep.subr.mxu0 0.0
    %1782 = vmatpush1.msra.mxu0 0.0
    %1783 = vmatprep.subr.mxu0 0.0
    %1784 = vmatpush1.msra.mxu0 0.0
    %1785 = vmatprep.subr.mxu0 0.0
    %1786 = vmatpush1.msra.mxu0 0.0
    %1787 = vmatprep.subr.mxu0 0.0
    %1788 = vmatpush1.msra.mxu0 0.0
    %1789 = vmatprep.subr.mxu0 0.0
    %1790 = vmatpush1.msra.mxu0 0.0
    %1791 = vmatprep.subr.mxu0 0.0
    %1792 = vmatpush1.msra.mxu0 0.0
    %1793 = vmatprep.mubr.f32.mxu0 0.0
    %1794 = vmatmul.mubr.f32.gmra.mrb[0].mxu0 %v1723
    %v1795 = vpop.f32.mrb[0].mxu0
    %v1796 = vadd.f32 0.0, %v1795
    %v1797 = vpop.f32.mrb[0].mxu0
    %1798 = vdwg.mxu0
    %v1799 = vmul.f32 %v1728, %v1796
    %v1800 = vsub.f32 %v1799, %v1723
    %v1801 = vmul.f32 %v1800, 0.05
    %v1802 = vadd.f32 %v1726, %v1801
    %v1803 = vtanh.pop %v1802
    %1804 = vmatprep.subr.mxu0 0.0
    %1805 = vmatpush1.xpose.msra.mxu0 %v100
    %1806 = vmatprep.subr.mxu0 0.0
    %1807 = vmatpush1.xpose.msra.mxu0 %v101
    %1808 = vmatprep.subr.mxu0 0.0
    %1809 = vmatpush1.xpose.msra.mxu0 %v102
    %1810 = vmatprep.subr.mxu0 0.0
    %1811 = vmatpush1.xpose.msra.mxu0 %v103
    %1812 = vmatprep.subr.mxu0 0.0
    %1813 = vmatpush1.xpose.msra.mxu0 %v104
    %1814 = vmatprep.subr.mxu0 0.0
    %1815 = vmatpush1.xpose.msra.mxu0 %v105
    %1816 = vmatprep.subr.mxu0 0.0
    %1817 = vmatpush1.xpose.msra.mxu0 %v106
    %1818 = vmatprep.subr.mxu0 0.0
    %1819 = vmatpush1.xpose.msra.mxu0 %v107
    %1820 = vmatprep.subr.mxu0 0.0
    %1821 = vmatpush1.xpose.msra.mxu0 %v108
    %1822 = vmatprep.subr.mxu0 0.0
    %1823 = vmatpush1.xpose.msra.mxu0 %v109
    %1824 = vmatprep.subr.mxu0 0.0
    %1825 = vmatpush1.xpose.msra.mxu0 %v110
    %1826 = vmatprep.subr.mxu0 0.0
    %1827 = vmatpush1.xpose.msra.mxu0 %v111
    %1828 = vmatprep.subr.mxu0 0.0
    %1829 = vmatpush1.xpose.msra.mxu0 %v112
    %1830 = vmatprep.subr.mxu0 0.0
    %1831 = vmatpush1.xpose.msra.mxu0 %v113
    %1832 = vmatprep.subr.mxu0 0.0
    %1833 = vmatpush1.xpose.msra.mxu0 %v114
    %1834 = vmatprep.subr.mxu0 0.0
    %1835 = vmatpush1.xpose.msra.mxu0 %v115
    %1836 = vmatprep.subr.mxu0 0.0
    %1837 = vmatpush1.xpose.msra.mxu0 0.0
    %1838 = vmatprep.subr.mxu0 0.0
    %1839 = vmatpush1.xpose.msra.mxu0 0.0
    %1840 = vmatprep.subr.mxu0 0.0
    %1841 = vmatpush1.xpose.msra.mxu0 0.0
    %1842 = vmatprep.subr.mxu0 0.0
    %1843 = vmatpush1.xpose.msra.mxu0 0.0
    %1844 = vmatprep.subr.mxu0 0.0
    %1845 = vmatpush1.xpose.msra.mxu0 0.0
    %1846 = vmatprep.subr.mxu0 0.0
    %1847 = vmatpush1.xpose.msra.mxu0 0.0
    %1848 = vmatprep.subr.mxu0 0.0
    %1849 = vmatpush1.xpose.msra.mxu0 0.0
    %1850 = vmatprep.subr.mxu0 0.0
    %1851 = vmatpush1.xpose.msra.mxu0 0.0
    %1852 = vmatprep.subr.mxu0 0.0
    %1853 = vmatpush1.xpose.msra.mxu0 0.0
    %1854 = vmatprep.subr.mxu0 0.0
    %1855 = vmatpush1.xpose.msra.mxu0 0.0
    %1856 = vmatprep.subr.mxu0 0.0
    %1857 = vmatpush1.xpose.msra.mxu0 0.0
    %1858 = vmatprep.subr.mxu0 0.0
    %1859 = vmatpush1.xpose.msra.mxu0 0.0
    %1860 = vmatprep.subr.mxu0 0.0
    %1861 = vmatpush1.xpose.msra.mxu0 0.0
    %1862 = vmatprep.subr.mxu0 0.0
    %1863 = vmatpush1.xpose.msra.mxu0 0.0
    %1864 = vmatprep.subr.mxu0 0.0
    %1865 = vmatpush1.xpose.msra.mxu0 0.0
    %1866 = vmatprep.subr.mxu0 0.0
    %1867 = vmatpush1.xpose.msra.mxu0 0.0
    %1868 = vmatprep.mubr.f32.mxu0 0.0
    %1869 = vmatmul.mubr.f32.gmra.mrb[0].mxu0 %v1803
    %v1870 = vpop.f32.mrb[0].mxu0
    %v1871 = vadd.f32 %v128, %v1870
    %v1872 = vpop.f32.mrb[0].mxu0
    %1873 = vdwg.mxu0
    %s1874 = scalar_lea.vmem [#allocation4], 40
    %v1875 = vld [vmem:[%s1874] sm:$0xff]
    %v1876 = vsub.f32 %v1871, %v1875
    %s1877 = scalar_lea.vmem [#allocation12], 40
    %1878 = vst [vmem:[%s1877] sm:$0xff] %v1876
    %v1879 = vmul.f32 %v1803, %v1803
    %v1880 = vsub.f32 1.0, %v1879
    %v1881 = vmul.f32 %v1880, 0.05
    %1882 = vmatprep.subr.mxu0 0.0
    %1883 = vmatpush1.msra.mxu0 %v100
    %1884 = vmatprep.subr.mxu0 0.0
    %1885 = vmatpush1.msra.mxu0 %v101
    %1886 = vmatprep.subr.mxu0 0.0
    %1887 = vmatpush1.msra.mxu0 %v102
    %1888 = vmatprep.subr.mxu0 0.0
    %1889 = vmatpush1.msra.mxu0 %v103
    %1890 = vmatprep.subr.mxu0 0.0
    %1891 = vmatpush1.msra.mxu0 %v104
    %1892 = vmatprep.subr.mxu0 0.0
    %1893 = vmatpush1.msra.mxu0 %v105
    %1894 = vmatprep.subr.mxu0 0.0
    %1895 = vmatpush1.msra.mxu0 %v106
    %1896 = vmatprep.subr.mxu0 0.0
    %1897 = vmatpush1.msra.mxu0 %v107
    %1898 = vmatprep.subr.mxu0 0.0
    %1899 = vmatpush1.msra.mxu0 %v108
    %1900 = vmatprep.subr.mxu0 0.0
    %1901 = vmatpush1.msra.mxu0 %v109
    %1902 = vmatprep.subr.mxu0 0.0
    %1903 = vmatpush1.msra.mxu0 %v110
    %1904 = vmatprep.subr.mxu0 0.0
    %1905 = vmatpush1.msra.mxu0 %v111
    %1906 = vmatprep.subr.mxu0 0.0
    %1907 = vmatpush1.msra.mxu0 %v112
    %1908 = vmatprep.subr.mxu0 0.0
    %1909 = vmatpush1.msra.mxu0 %v113
    %1910 = vmatprep.subr.mxu0 0.0
    %1911 = vmatpush1.msra.mxu0 %v114
    %1912 = vmatprep.subr.mxu0 0.0
    %1913 = vmatpush1.msra.mxu0 %v115
    %1914 = vmatprep.subr.mxu0 0.0
    %1915 = vmatpush1.msra.mxu0 0.0
    %1916 = vmatprep.subr.mxu0 0.0
    %1917 = vmatpush1.msra.mxu0 0.0
    %1918 = vmatprep.subr.mxu0 0.0
    %1919 = vmatpush1.msra.mxu0 0.0
    %1920 = vmatprep.subr.mxu0 0.0
    %1921 = vmatpush1.msra.mxu0 0.0
    %1922 = vmatprep.subr.mxu0 0.0
    %1923 = vmatpush1.msra.mxu0 0.0
    %1924 = vmatprep.subr.mxu0 0.0
    %1925 = vmatpush1.msra.mxu0 0.0
    %1926 = vmatprep.subr.mxu0 0.0
    %1927 = vmatpush1.msra.mxu0 0.0
    %1928 = vmatprep.subr.mxu0 0.0
    %1929 = vmatpush1.msra.mxu0 0.0
    %1930 = vmatprep.subr.mxu0 0.0
    %1931 = vmatpush1.msra.mxu0 0.0
    %1932 = vmatprep.subr.mxu0 0.0
    %1933 = vmatpush1.msra.mxu0 0.0
    %1934 = vmatprep.subr.mxu0 0.0
    %1935 = vmatpush1.msra.mxu0 0.0
    %1936 = vmatprep.subr.mxu0 0.0
    %1937 = vmatpush1.msra.mxu0 0.0
    %1938 = vmatprep.subr.mxu0 0.0
    %1939 = vmatpush1.msra.mxu0 0.0
    %1940 = vmatprep.subr.mxu0 0.0
    %1941 = vmatpush1.msra.mxu0 0.0
    %1942 = vmatprep.subr.mxu0 0.0
    %1943 = vmatpush1.msra.mxu0 0.0
    %1944 = vmatprep.subr.mxu0 0.0
    %1945 = vmatpush1.msra.mxu0 0.0
    %1946 = vmatprep.mubr.f32.mxu0 0.0
    %1947 = vmatmul.mubr.f32.gmra.mrb[0].mxu0 %v1876
    %v1948 = vpop.f32.mrb[0].mxu0
    %v1949 = vadd.f32 0.0, %v1948
    %v1950 = vpop.f32.mrb[0].mxu0
    %1951 = vdwg.mxu0
    %v1952 = vmul.f32 %v1881, %v1949
    %v1953 = vsub.f32 %v1802, %v1952
    %v1954 = vtanh.pop %v1953
    %1955 = vmatprep.subr.mxu0 0.0
    %1956 = vmatpush1.xpose.msra.mxu0 %v84
    %1957 = vmatprep.subr.mxu0 0.0
    %1958 = vmatpush1.xpose.msra.mxu0 %v85
    %1959 = vmatprep.subr.mxu0 0.0
    %1960 = vmatpush1.xpose.msra.mxu0 %v86
    %1961 = vmatprep.subr.mxu0 0.0
    %1962 = vmatpush1.xpose.msra.mxu0 %v87
    %1963 = vmatprep.subr.mxu0 0.0
    %1964 = vmatpush1.xpose.msra.mxu0 %v88
    %1965 = vmatprep.subr.mxu0 0.0
    %1966 = vmatpush1.xpose.msra.mxu0 %v89
    %1967 = vmatprep.subr.mxu0 0.0
    %1968 = vmatpush1.xpose.msra.mxu0 %v90
    %1969 = vmatprep.subr.mxu0 0.0
    %1970 = vmatpush1.xpose.msra.mxu0 %v91
    %1971 = vmatprep.subr.mxu0 0.0
    %1972 = vmatpush1.xpose.msra.mxu0 %v92
    %1973 = vmatprep.subr.mxu0 0.0
    %1974 = vmatpush1.xpose.msra.mxu0 %v93
    %1975 = vmatprep.subr.mxu0 0.0
    %1976 = vmatpush1.xpose.msra.mxu0 %v94
    %1977 = vmatprep.subr.mxu0 0.0
    %1978 = vmatpush1.xpose.msra.mxu0 %v95
    %1979 = vmatprep.subr.mxu0 0.0
    %1980 = vmatpush1.xpose.msra.mxu0 %v96
    %1981 = vmatprep.subr.mxu0 0.0
    %1982 = vmatpush1.xpose.msra.mxu0 %v97
    %1983 = vmatprep.subr.mxu0 0.0
    %1984 = vmatpush1.xpose.msra.mxu0 %v98
    %1985 = vmatprep.subr.mxu0 0.0
    %1986 = vmatpush1.xpose.msra.mxu0 %v99
    %1987 = vmatprep.subr.mxu0 0.0
    %1988 = vmatpush1.xpose.msra.mxu0 0.0
    %1989 = vmatprep.subr.mxu0 0.0
    %1990 = vmatpush1.xpose.msra.mxu0 0.0
    %1991 = vmatprep.subr.mxu0 0.0
    %1992 = vmatpush1.xpose.msra.mxu0 0.0
    %1993 = vmatprep.subr.mxu0 0.0
    %1994 = vmatpush1.xpose.msra.mxu0 0.0
    %1995 = vmatprep.subr.mxu0 0.0
    %1996 = vmatpush1.xpose.msra.mxu0 0.0
    %1997 = vmatprep.subr.mxu0 0.0
    %1998 = vmatpush1.xpose.msra.mxu0 0.0
    %1999 = vmatprep.subr.mxu0 0.0
    %2000 = vmatpush1.xpose.msra.mxu0 0.0
    %2001 = vmatprep.subr.mxu0 0.0
    %2002 = vmatpush1.xpose.msra.mxu0 0.0
    %2003 = vmatprep.subr.mxu0 0.0
    %2004 = vmatpush1.xpose.msra.mxu0 0.0
    %2005 = vmatprep.subr.mxu0 0.0
    %2006 = vmatpush1.xpose.msra.mxu0 0.0
    %2007 = vmatprep.subr.mxu0 0.0
    %2008 = vmatpush1.xpose.msra.mxu0 0.0
    %2009 = vmatprep.subr.mxu0 0.0
    %2010 = vmatpush1.xpose.msra.mxu0 0.0
    %2011 = vmatprep.subr.mxu0 0.0
    %2012 = vmatpush1.xpose.msra.mxu0 0.0
    %2013 = vmatprep.subr.mxu0 0.0
    %2014 = vmatpush1.xpose.msra.mxu0 0.0
    %2015 = vmatprep.subr.mxu0 0.0
    %2016 = vmatpush1.xpose.msra.mxu0 0.0
    %2017 = vmatprep.subr.mxu0 0.0
    %2018 = vmatpush1.xpose.msra.mxu0 0.0
    %2019 = vmatprep.mubr.f32.mxu0 0.0
    %2020 = vmatmul.mubr.f32.gmra.mrb[0].mxu0 %v1954
    %v2021 = vpop.f32.mrb[0].mxu0
    %v2022 = vadd.f32 %v121, %v2021
    %v2023 = vpop.f32.mrb[0].mxu0
    %2024 = vdwg.mxu0
    %v2025 = vsub.f32 %v2022, %v1953
    %v2026 = vmul.f32 %v2025, 0.5
    %v2027 = vsub.f32 %v1725, %v2026
    %v2028 = vmul.f32 %v2027, 0.1
    %v2029 = vsub.f32 %v1725, %v2028
    %v2030 = vadd.f32 %v1953, %v2029
    %v2031 = vmul.f32 %v1954, %v1954
    %v2032 = vsub.f32 1.0, %v2031
    %2033 = vmatprep.subr.mxu0 0.0
    %2034 = vmatpush1.msra.mxu0 %v84
    %2035 = vmatprep.subr.mxu0 0.0
    %2036 = vmatpush1.msra.mxu0 %v85
    %2037 = vmatprep.subr.mxu0 0.0
    %2038 = vmatpush1.msra.mxu0 %v86
    %2039 = vmatprep.subr.mxu0 0.0
    %2040 = vmatpush1.msra.mxu0 %v87
    %2041 = vmatprep.subr.mxu0 0.0
    %2042 = vmatpush1.msra.mxu0 %v88
    %2043 = vmatprep.subr.mxu0 0.0
    %2044 = vmatpush1.msra.mxu0 %v89
    %2045 = vmatprep.subr.mxu0 0.0
    %2046 = vmatpush1.msra.mxu0 %v90
    %2047 = vmatprep.subr.mxu0 0.0
    %2048 = vmatpush1.msra.mxu0 %v91
    %2049 = vmatprep.subr.mxu0 0.0
    %2050 = vmatpush1.msra.mxu0 %v92
    %2051 = vmatprep.subr.mxu0 0.0
    %2052 = vmatpush1.msra.mxu0 %v93
    %2053 = vmatprep.subr.mxu0 0.0
    %2054 = vmatpush1.msra.mxu0 %v94
    %2055 = vmatprep.subr.mxu0 0.0
    %2056 = vmatpush1.msra.mxu0 %v95
    %2057 = vmatprep.subr.mxu0 0.0
    %2058 = vmatpush1.msra.mxu0 %v96
    %2059 = vmatprep.subr.mxu0 0.0
    %2060 = vmatpush1.msra.mxu0 %v97
    %2061 = vmatprep.subr.mxu0 0.0
    %2062 = vmatpush1.msra.mxu0 %v98
    %2063 = vmatprep.subr.mxu0 0.0
    %2064 = vmatpush1.msra.mxu0 %v99
    %2065 = vmatprep.subr.mxu0 0.0
    %2066 = vmatpush1.msra.mxu0 0.0
    %2067 = vmatprep.subr.mxu0 0.0
    %2068 = vmatpush1.msra.mxu0 0.0
    %2069 = vmatprep.subr.mxu0 0.0
    %2070 = vmatpush1.msra.mxu0 0.0
    %2071 = vmatprep.subr.mxu0 0.0
    %2072 = vmatpush1.msra.mxu0 0.0
    %2073 = vmatprep.subr.mxu0 0.0
    %2074 = vmatpush1.msra.mxu0 0.0
    %2075 = vmatprep.subr.mxu0 0.0
    %2076 = vmatpush1.msra.mxu0 0.0
    %2077 = vmatprep.subr.mxu0 0.0
    %2078 = vmatpush1.msra.mxu0 0.0
    %2079 = vmatprep.subr.mxu0 0.0
    %2080 = vmatpush1.msra.mxu0 0.0
    %2081 = vmatprep.subr.mxu0 0.0
    %2082 = vmatpush1.msra.mxu0 0.0
    %2083 = vmatprep.subr.mxu0 0.0
    %2084 = vmatpush1.msra.mxu0 0.0
    %2085 = vmatprep.subr.mxu0 0.0
    %2086 = vmatpush1.msra.mxu0 0.0
    %2087 = vmatprep.subr.mxu0 0.0
    %2088 = vmatpush1.msra.mxu0 0.0
    %2089 = vmatprep.subr.mxu0 0.0
    %2090 = vmatpush1.msra.mxu0 0.0
    %2091 = vmatprep.subr.mxu0 0.0
    %2092 = vmatpush1.msra.mxu0 0.0
    %2093 = vmatprep.subr.mxu0 0.0
    %2094 = vmatpush1.msra.mxu0 0.0
    %2095 = vmatprep.subr.mxu0 0.0
    %2096 = vmatpush1.msra.mxu0 0.0
    %2097 = vmatprep.mubr.f32.mxu0 0.0
    %2098 = vmatmul.mubr.f32.gmra.mrb[0].mxu0 %v2027
    %v2099 = vpop.f32.mrb[0].mxu0
    %v2100 = vadd.f32 0.0, %v2099
    %v2101 = vpop.f32.mrb[0].mxu0
    %2102 = vdwg.mxu0
    %v2103 = vmul.f32 %v2032, %v2100
    %v2104 = vsub.f32 %v2103, %v2027
    %v2105 = vmul.f32 %v2104, 0.05
    %v2106 = vadd.f32 %v2030, %v2105
    %v2107 = vtanh.pop %v2106
    %2108 = vmatprep.subr.mxu0 0.0
    %2109 = vmatpush1.xpose.msra.mxu0 %v100
    %2110 = vmatprep.subr.mxu0 0.0
    %2111 = vmatpush1.xpose.msra.mxu0 %v101
    %2112 = vmatprep.subr.mxu0 0.0
    %2113 = vmatpush1.xpose.msra.mxu0 %v102
    %2114 = vmatprep.subr.mxu0 0.0
    %2115 = vmatpush1.xpose.msra.mxu0 %v103
    %2116 = vmatprep.subr.mxu0 0.0
    %2117 = vmatpush1.xpose.msra.mxu0 %v104
    %2118 = vmatprep.subr.mxu0 0.0
    %2119 = vmatpush1.xpose.msra.mxu0 %v105
    %2120 = vmatprep.subr.mxu0 0.0
    %2121 = vmatpush1.xpose.msra.mxu0 %v106
    %2122 = vmatprep.subr.mxu0 0.0
    %2123 = vmatpush1.xpose.msra.mxu0 %v107
    %2124 = vmatprep.subr.mxu0 0.0
    %2125 = vmatpush1.xpose.msra.mxu0 %v108
    %2126 = vmatprep.subr.mxu0 0.0
    %2127 = vmatpush1.xpose.msra.mxu0 %v109
    %2128 = vmatprep.subr.mxu0 0.0
    %2129 = vmatpush1.xpose.msra.mxu0 %v110
    %2130 = vmatprep.subr.mxu0 0.0
    %2131 = vmatpush1.xpose.msra.mxu0 %v111
    %2132 = vmatprep.subr.mxu0 0.0
    %2133 = vmatpush1.xpose.msra.mxu0 %v112
    %2134 = vmatprep.subr.mxu0 0.0
    %2135 = vmatpush1.xpose.msra.mxu0 %v113
    %2136 = vmatprep.subr.mxu0 0.0
    %2137 = vmatpush1.xpose.msra.mxu0 %v114
    %2138 = vmatprep.subr.mxu0 0.0
    %2139 = vmatpush1.xpose.msra.mxu0 %v115
    %2140 = vmatprep.subr.mxu0 0.0
    %2141 = vmatpush1.xpose.msra.mxu0 0.0
    %2142 = vmatprep.subr.mxu0 0.0
    %2143 = vmatpush1.xpose.msra.mxu0 0.0
    %2144 = vmatprep.subr.mxu0 0.0
    %2145 = vmatpush1.xpose.msra.mxu0 0.0
    %2146 = vmatprep.subr.mxu0 0.0
    %2147 = vmatpush1.xpose.msra.mxu0 0.0
    %2148 = vmatprep.subr.mxu0 0.0
    %2149 = vmatpush1.xpose.msra.mxu0 0.0
    %2150 = vmatprep.subr.mxu0 0.0
    %2151 = vmatpush1.xpose.msra.mxu0 0.0
    %2152 = vmatprep.subr.mxu0 0.0
    %2153 = vmatpush1.xpose.msra.mxu0 0.0
    %2154 = vmatprep.subr.mxu0 0.0
    %2155 = vmatpush1.xpose.msra.mxu0 0.0
    %2156 = vmatprep.subr.mxu0 0.0
    %2157 = vmatpush1.xpose.msra.mxu0 0.0
    %2158 = vmatprep.subr.mxu0 0.0
    %2159 = vmatpush1.xpose.msra.mxu0 0.0
    %2160 = vmatprep.subr.mxu0 0.0
    %2161 = vmatpush1.xpose.msra.mxu0 0.0
    %2162 = vmatprep.subr.mxu0 0.0
    %2163 = vmatpush1.xpose.msra.mxu0 0.0
    %2164 = vmatprep.subr.mxu0 0.0
    %2165 = vmatpush1.xpose.msra.mxu0 0.0
    %2166 = vmatprep.subr.mxu0 0.0
    %2167 = vmatpush1.xpose.msra.mxu0 0.0
    %2168 = vmatprep.subr.mxu0 0.0
    %2169 = vmatpush1.xpose.msra.mxu0 0.0
    %2170 = vmatprep.subr.mxu0 0.0
    %2171 = vmatpush1.xpose.msra.mxu0 0.0
    %2172 = vmatprep.mubr.f32.mxu0 0.0
    %2173 = vmatmul.mubr.f32.gmra.mrb[0].mxu0 %v2107
    %v2174 = vpop.f32.mrb[0].mxu0
    %v2175 = vadd.f32 %v128, %v2174
    %v2176 = vpop.f32.mrb[0].mxu0
    %2177 = vdwg.mxu0
    %s2178 = scalar_lea.vmem [#allocation4], 48
    %v2179 = vld [vmem:[%s2178] sm:$0xff]
    %v2180 = vsub.f32 %v2175, %v2179
    %s2181 = scalar_lea.vmem [#allocation12], 48
    %2182 = vst [vmem:[%s2181] sm:$0xff] %v2180
    %v2183 = vmul.f32 %v2107, %v2107
    %v2184 = vsub.f32 1.0, %v2183
    %v2185 = vmul.f32 %v2184, 0.05
    %2186 = vmatprep.subr.mxu0 0.0
    %2187 = vmatpush1.msra.mxu0 %v100
    %2188 = vmatprep.subr.mxu0 0.0
    %2189 = vmatpush1.msra.mxu0 %v101
    %2190 = vmatprep.subr.mxu0 0.0
    %2191 = vmatpush1.msra.mxu0 %v102
    %2192 = vmatprep.subr.mxu0 0.0
    %2193 = vmatpush1.msra.mxu0 %v103
    %2194 = vmatprep.subr.mxu0 0.0
    %2195 = vmatpush1.msra.mxu0 %v104
    %2196 = vmatprep.subr.mxu0 0.0
    %2197 = vmatpush1.msra.mxu0 %v105
    %2198 = vmatprep.subr.mxu0 0.0
    %2199 = vmatpush1.msra.mxu0 %v106
    %2200 = vmatprep.subr.mxu0 0.0
    %2201 = vmatpush1.msra.mxu0 %v107
    %2202 = vmatprep.subr.mxu0 0.0
    %2203 = vmatpush1.msra.mxu0 %v108
    %2204 = vmatprep.subr.mxu0 0.0
    %2205 = vmatpush1.msra.mxu0 %v109
    %2206 = vmatprep.subr.mxu0 0.0
    %2207 = vmatpush1.msra.mxu0 %v110
    %2208 = vmatprep.subr.mxu0 0.0
    %2209 = vmatpush1.msra.mxu0 %v111
    %2210 = vmatprep.subr.mxu0 0.0
    %2211 = vmatpush1.msra.mxu0 %v112
    %2212 = vmatprep.subr.mxu0 0.0
    %2213 = vmatpush1.msra.mxu0 %v113
    %2214 = vmatprep.subr.mxu0 0.0
    %2215 = vmatpush1.msra.mxu0 %v114
    %2216 = vmatprep.subr.mxu0 0.0
    %2217 = vmatpush1.msra.mxu0 %v115
    %2218 = vmatprep.subr.mxu0 0.0
    %2219 = vmatpush1.msra.mxu0 0.0
    %2220 = vmatprep.subr.mxu0 0.0
    %2221 = vmatpush1.msra.mxu0 0.0
    %2222 = vmatprep.subr.mxu0 0.0
    %2223 = vmatpush1.msra.mxu0 0.0
    %2224 = vmatprep.subr.mxu0 0.0
    %2225 = vmatpush1.msra.mxu0 0.0
    %2226 = vmatprep.subr.mxu0 0.0
    %2227 = vmatpush1.msra.mxu0 0.0
    %2228 = vmatprep.subr.mxu0 0.0
    %2229 = vmatpush1.msra.mxu0 0.0
    %2230 = vmatprep.subr.mxu0 0.0
    %2231 = vmatpush1.msra.mxu0 0.0
    %2232 = vmatprep.subr.mxu0 0.0
    %2233 = vmatpush1.msra.mxu0 0.0
    %2234 = vmatprep.subr.mxu0 0.0
    %2235 = vmatpush1.msra.mxu0 0.0
    %2236 = vmatprep.subr.mxu0 0.0
    %2237 = vmatpush1.msra.mxu0 0.0
    %2238 = vmatprep.subr.mxu0 0.0
    %2239 = vmatpush1.msra.mxu0 0.0
    %2240 = vmatprep.subr.mxu0 0.0
    %2241 = vmatpush1.msra.mxu0 0.0
    %2242 = vmatprep.subr.mxu0 0.0
    %2243 = vmatpush1.msra.mxu0 0.0
    %2244 = vmatprep.subr.mxu0 0.0
    %2245 = vmatpush1.msra.mxu0 0.0
    %2246 = vmatprep.subr.mxu0 0.0
    %2247 = vmatpush1.msra.mxu0 0.0
    %2248 = vmatprep.subr.mxu0 0.0
    %2249 = vmatpush1.msra.mxu0 0.0
    %2250 = vmatprep.mubr.f32.mxu0 0.0
    %2251 = vmatmul.mubr.f32.gmra.mrb[0].mxu0 %v2180
    %v2252 = vpop.f32.mrb[0].mxu0
    %v2253 = vadd.f32 0.0, %v2252
    %v2254 = vpop.f32.mrb[0].mxu0
    %2255 = vdwg.mxu0
    %v2256 = vmul.f32 %v2185, %v2253
    %v2257 = vsub.f32 %v2106, %v2256
    %v2258 = vtanh.pop %v2257
    %2259 = vmatprep.subr.mxu0 0.0
    %2260 = vmatpush1.xpose.msra.mxu0 %v84
    %2261 = vmatprep.subr.mxu0 0.0
    %2262 = vmatpush1.xpose.msra.mxu0 %v85
    %2263 = vmatprep.subr.mxu0 0.0
    %2264 = vmatpush1.xpose.msra.mxu0 %v86
    %2265 = vmatprep.subr.mxu0 0.0
    %2266 = vmatpush1.xpose.msra.mxu0 %v87
    %2267 = vmatprep.subr.mxu0 0.0
    %2268 = vmatpush1.xpose.msra.mxu0 %v88
    %2269 = vmatprep.subr.mxu0 0.0
    %2270 = vmatpush1.xpose.msra.mxu0 %v89
    %2271 = vmatprep.subr.mxu0 0.0
    %2272 = vmatpush1.xpose.msra.mxu0 %v90
    %2273 = vmatprep.subr.mxu0 0.0
    %2274 = vmatpush1.xpose.msra.mxu0 %v91
    %2275 = vmatprep.subr.mxu0 0.0
    %2276 = vmatpush1.xpose.msra.mxu0 %v92
    %2277 = vmatprep.subr.mxu0 0.0
    %2278 = vmatpush1.xpose.msra.mxu0 %v93
    %2279 = vmatprep.subr.mxu0 0.0
    %2280 = vmatpush1.xpose.msra.mxu0 %v94
    %2281 = vmatprep.subr.mxu0 0.0
    %2282 = vmatpush1.xpose.msra.mxu0 %v95
    %2283 = vmatprep.subr.mxu0 0.0
    %2284 = vmatpush1.xpose.msra.mxu0 %v96
    %2285 = vmatprep.subr.mxu0 0.0
    %2286 = vmatpush1.xpose.msra.mxu0 %v97
    %2287 = vmatprep.subr.mxu0 0.0
    %2288 = vmatpush1.xpose.msra.mxu0 %v98
    %2289 = vmatprep.subr.mxu0 0.0
    %2290 = vmatpush1.xpose.msra.mxu0 %v99
    %2291 = vmatprep.subr.mxu0 0.0
    %2292 = vmatpush1.xpose.msra.mxu0 0.0
    %2293 = vmatprep.subr.mxu0 0.0
    %2294 = vmatpush1.xpose.msra.mxu0 0.0
    %2295 = vmatprep.subr.mxu0 0.0
    %2296 = vmatpush1.xpose.msra.mxu0 0.0
    %2297 = vmatprep.subr.mxu0 0.0
    %2298 = vmatpush1.xpose.msra.mxu0 0.0
    %2299 = vmatprep.subr.mxu0 0.0
    %2300 = vmatpush1.xpose.msra.mxu0 0.0
    %2301 = vmatprep.subr.mxu0 0.0
    %2302 = vmatpush1.xpose.msra.mxu0 0.0
    %2303 = vmatprep.subr.mxu0 0.0
    %2304 = vmatpush1.xpose.msra.mxu0 0.0
    %2305 = vmatprep.subr.mxu0 0.0
    %2306 = vmatpush1.xpose.msra.mxu0 0.0
    %2307 = vmatprep.subr.mxu0 0.0
    %2308 = vmatpush1.xpose.msra.mxu0 0.0
    %2309 = vmatprep.subr.mxu0 0.0
    %2310 = vmatpush1.xpose.msra.mxu0 0.0
    %2311 = vmatprep.subr.mxu0 0.0
    %2312 = vmatpush1.xpose.msra.mxu0 0.0
    %2313 = vmatprep.subr.mxu0 0.0
    %2314 = vmatpush1.xpose.msra.mxu0 0.0
    %2315 = vmatprep.subr.mxu0 0.0
    %2316 = vmatpush1.xpose.msra.mxu0 0.0
    %2317 = vmatprep.subr.mxu0 0.0
    %2318 = vmatpush1.xpose.msra.mxu0 0.0
    %2319 = vmatprep.subr.mxu0 0.0
    %2320 = vmatpush1.xpose.msra.mxu0 0.0
    %2321 = vmatprep.subr.mxu0 0.0
    %2322 = vmatpush1.xpose.msra.mxu0 0.0
    %2323 = vmatprep.mubr.f32.mxu0 0.0
    %2324 = vmatmul.mubr.f32.gmra.mrb[0].mxu0 %v2258
    %v2325 = vpop.f32.mrb[0].mxu0
    %v2326 = vadd.f32 %v121, %v2325
    %v2327 = vpop.f32.mrb[0].mxu0
    %2328 = vdwg.mxu0
    %v2329 = vsub.f32 %v2326, %v2257
    %v2330 = vmul.f32 %v2329, 0.5
    %v2331 = vsub.f32 %v2029, %v2330
    %v2332 = vmul.f32 %v2331, 0.1
    %v2333 = vsub.f32 %v2029, %v2332
    %v2334 = vadd.f32 %v2257, %v2333
    %v2335 = vmul.f32 %v2258, %v2258
    %v2336 = vsub.f32 1.0, %v2335
    %2337 = vmatprep.subr.mxu0 0.0
    %2338 = vmatpush1.msra.mxu0 %v84
    %2339 = vmatprep.subr.mxu0 0.0
    %2340 = vmatpush1.msra.mxu0 %v85
    %2341 = vmatprep.subr.mxu0 0.0
    %2342 = vmatpush1.msra.mxu0 %v86
    %2343 = vmatprep.subr.mxu0 0.0
    %2344 = vmatpush1.msra.mxu0 %v87
    %2345 = vmatprep.subr.mxu0 0.0
    %2346 = vmatpush1.msra.mxu0 %v88
    %2347 = vmatprep.subr.mxu0 0.0
    %2348 = vmatpush1.msra.mxu0 %v89
    %2349 = vmatprep.subr.mxu0 0.0
    %2350 = vmatpush1.msra.mxu0 %v90
    %2351 = vmatprep.subr.mxu0 0.0
    %2352 = vmatpush1.msra.mxu0 %v91
    %2353 = vmatprep.subr.mxu0 0.0
    %2354 = vmatpush1.msra.mxu0 %v92
    %2355 = vmatprep.subr.mxu0 0.0
    %2356 = vmatpush1.msra.mxu0 %v93
    %2357 = vmatprep.subr.mxu0 0.0
    %2358 = vmatpush1.msra.mxu0 %v94
    %2359 = vmatprep.subr.mxu0 0.0
    %2360 = vmatpush1.msra.mxu0 %v95
    %2361 = vmatprep.subr.mxu0 0.0
    %2362 = vmatpush1.msra.mxu0 %v96
    %2363 = vmatprep.subr.mxu0 0.0
    %2364 = vmatpush1.msra.mxu0 %v97
    %2365 = vmatprep.subr.mxu0 0.0
    %2366 = vmatpush1.msra.mxu0 %v98
    %2367 = vmatprep.subr.mxu0 0.0
    %2368 = vmatpush1.msra.mxu0 %v99
    %2369 = vmatprep.subr.mxu0 0.0
    %2370 = vmatpush1.msra.mxu0 0.0
    %2371 = vmatprep.subr.mxu0 0.0
    %2372 = vmatpush1.msra.mxu0 0.0
    %2373 = vmatprep.subr.mxu0 0.0
    %2374 = vmatpush1.msra.mxu0 0.0
    %2375 = vmatprep.subr.mxu0 0.0
    %2376 = vmatpush1.msra.mxu0 0.0
    %2377 = vmatprep.subr.mxu0 0.0
    %2378 = vmatpush1.msra.mxu0 0.0
    %2379 = vmatprep.subr.mxu0 0.0
    %2380 = vmatpush1.msra.mxu0 0.0
    %2381 = vmatprep.subr.mxu0 0.0
    %2382 = vmatpush1.msra.mxu0 0.0
    %2383 = vmatprep.subr.mxu0 0.0
    %2384 = vmatpush1.msra.mxu0 0.0
    %2385 = vmatprep.subr.mxu0 0.0
    %2386 = vmatpush1.msra.mxu0 0.0
    %2387 = vmatprep.subr.mxu0 0.0
    %2388 = vmatpush1.msra.mxu0 0.0
    %2389 = vmatprep.subr.mxu0 0.0
    %2390 = vmatpush1.msra.mxu0 0.0
    %2391 = vmatprep.subr.mxu0 0.0
    %2392 = vmatpush1.msra.mxu0 0.0
    %2393 = vmatprep.subr.mxu0 0.0
    %2394 = vmatpush1.msra.mxu0 0.0
    %2395 = vmatprep.subr.mxu0 0.0
    %2396 = vmatpush1.msra.mxu0 0.0
    %2397 = vmatprep.subr.mxu0 0.0
    %2398 = vmatpush1.msra.mxu0 0.0
    %2399 = vmatprep.subr.mxu0 0.0
    %2400 = vmatpush1.msra.mxu0 0.0
    %2401 = vmatprep.mubr.f32.mxu0 0.0
    %2402 = vmatmul.mubr.f32.gmra.mrb[0].mxu0 %v2331
    %v2403 = vpop.f32.mrb[0].mxu0
    %v2404 = vadd.f32 0.0, %v2403
    %v2405 = vpop.f32.mrb[0].mxu0
    %2406 = vdwg.mxu0
    %v2407 = vmul.f32 %v2336, %v2404
    %v2408 = vsub.f32 %v2407, %v2331
    %v2409 = vmul.f32 %v2408, 0.05
    %v2410 = vadd.f32 %v2334, %v2409
    %v2411 = vtanh.pop %v2410
    %2412 = vmatprep.subr.mxu0 0.0
    %2413 = vmatpush1.xpose.msra.mxu0 %v100
    %2414 = vmatprep.subr.mxu0 0.0
    %2415 = vmatpush1.xpose.msra.mxu0 %v101
    %2416 = vmatprep.subr.mxu0 0.0
    %2417 = vmatpush1.xpose.msra.mxu0 %v102
    %2418 = vmatprep.subr.mxu0 0.0
    %2419 = vmatpush1.xpose.msra.mxu0 %v103
    %2420 = vmatprep.subr.mxu0 0.0
    %2421 = vmatpush1.xpose.msra.mxu0 %v104
    %2422 = vmatprep.subr.mxu0 0.0
    %2423 = vmatpush1.xpose.msra.mxu0 %v105
    %2424 = vmatprep.subr.mxu0 0.0
    %2425 = vmatpush1.xpose.msra.mxu0 %v106
    %2426 = vmatprep.subr.mxu0 0.0
    %2427 = vmatpush1.xpose.msra.mxu0 %v107
    %2428 = vmatprep.subr.mxu0 0.0
    %2429 = vmatpush1.xpose.msra.mxu0 %v108
    %2430 = vmatprep.subr.mxu0 0.0
    %2431 = vmatpush1.xpose.msra.mxu0 %v109
    %2432 = vmatprep.subr.mxu0 0.0
    %2433 = vmatpush1.xpose.msra.mxu0 %v110
    %2434 = vmatprep.subr.mxu0 0.0
    %2435 = vmatpush1.xpose.msra.mxu0 %v111
    %2436 = vmatprep.subr.mxu0 0.0
    %2437 = vmatpush1.xpose.msra.mxu0 %v112
    %2438 = vmatprep.subr.mxu0 0.0
    %2439 = vmatpush1.xpose.msra.mxu0 %v113
    %2440 = vmatprep.subr.mxu0 0.0
    %2441 = vmatpush1.xpose.msra.mxu0 %v114
    %2442 = vmatprep.subr.mxu0 0.0
    %2443 = vmatpush1.xpose.msra.mxu0 %v115
    %2444 = vmatprep.subr.mxu0 0.0
    %2445 = vmatpush1.xpose.msra.mxu0 0.0
    %2446 = vmatprep.subr.mxu0 0.0
    %2447 = vmatpush1.xpose.msra.mxu0 0.0
    %2448 = vmatprep.subr.mxu0 0.0
    %2449 = vmatpush1.xpose.msra.mxu0 0.0
    %2450 = vmatprep.subr.mxu0 0.0
    %2451 = vmatpush1.xpose.msra.mxu0 0.0
    %2452 = vmatprep.subr.mxu0 0.0
    %2453 = vmatpush1.xpose.msra.mxu0 0.0
    %2454 = vmatprep.subr.mxu0 0.0
    %2455 = vmatpush1.xpose.msra.mxu0 0.0
    %2456 = vmatprep.subr.mxu0 0.0
    %2457 = vmatpush1.xpose.msra.mxu0 0.0
    %2458 = vmatprep.subr.mxu0 0.0
    %2459 = vmatpush1.xpose.msra.mxu0 0.0
    %2460 = vmatprep.subr.mxu0 0.0
    %2461 = vmatpush1.xpose.msra.mxu0 0.0
    %2462 = vmatprep.subr.mxu0 0.0
    %2463 = vmatpush1.xpose.msra.mxu0 0.0
    %2464 = vmatprep.subr.mxu0 0.0
    %2465 = vmatpush1.xpose.msra.mxu0 0.0
    %2466 = vmatprep.subr.mxu0 0.0
    %2467 = vmatpush1.xpose.msra.mxu0 0.0
    %2468 = vmatprep.subr.mxu0 0.0
    %2469 = vmatpush1.xpose.msra.mxu0 0.0
    %2470 = vmatprep.subr.mxu0 0.0
    %2471 = vmatpush1.xpose.msra.mxu0 0.0
    %2472 = vmatprep.subr.mxu0 0.0
    %2473 = vmatpush1.xpose.msra.mxu0 0.0
    %2474 = vmatprep.subr.mxu0 0.0
    %2475 = vmatpush1.xpose.msra.mxu0 0.0
    %2476 = vmatprep.mubr.f32.mxu0 0.0
    %2477 = vmatmul.mubr.f32.gmra.mrb[0].mxu0 %v2411
    %v2478 = vpop.f32.mrb[0].mxu0
    %v2479 = vadd.f32 %v128, %v2478
    %v2480 = vpop.f32.mrb[0].mxu0
    %2481 = vdwg.mxu0
    %s2482 = scalar_lea.vmem [#allocation4], 56
    %v2483 = vld [vmem:[%s2482] sm:$0xff]
    %v2484 = vsub.f32 %v2479, %v2483
    %s2485 = scalar_lea.vmem [#allocation12], 56
    %2486 = vst [vmem:[%s2485] sm:$0xff] %v2484
    %v2487 = vmul.f32 %v2411, %v2411
    %v2488 = vsub.f32 1.0, %v2487
    %v2489 = vmul.f32 %v2488, 0.05
    %2490 = vmatprep.subr.mxu0 0.0
    %2491 = vmatpush1.msra.mxu0 %v100
    %2492 = vmatprep.subr.mxu0 0.0
    %2493 = vmatpush1.msra.mxu0 %v101
    %2494 = vmatprep.subr.mxu0 0.0
    %2495 = vmatpush1.msra.mxu0 %v102
    %2496 = vmatprep.subr.mxu0 0.0
    %2497 = vmatpush1.msra.mxu0 %v103
    %2498 = vmatprep.subr.mxu0 0.0
    %2499 = vmatpush1.msra.mxu0 %v104
    %2500 = vmatprep.subr.mxu0 0.0
    %2501 = vmatpush1.msra.mxu0 %v105
    %2502 = vmatprep.subr.mxu0 0.0
    %2503 = vmatpush1.msra.mxu0 %v106
    %2504 = vmatprep.subr.mxu0 0.0
    %2505 = vmatpush1.msra.mxu0 %v107
    %2506 = vmatprep.subr.mxu0 0.0
    %2507 = vmatpush1.msra.mxu0 %v108
    %2508 = vmatprep.subr.mxu0 0.0
    %2509 = vmatpush1.msra.mxu0 %v109
    %2510 = vmatprep.subr.mxu0 0.0
    %2511 = vmatpush1.msra.mxu0 %v110
    %2512 = vmatprep.subr.mxu0 0.0
    %2513 = vmatpush1.msra.mxu0 %v111
    %2514 = vmatprep.subr.mxu0 0.0
    %2515 = vmatpush1.msra.mxu0 %v112
    %2516 = vmatprep.subr.mxu0 0.0
    %2517 = vmatpush1.msra.mxu0 %v113
    %2518 = vmatprep.subr.mxu0 0.0
    %2519 = vmatpush1.msra.mxu0 %v114
    %2520 = vmatprep.subr.mxu0 0.0
    %2521 = vmatpush1.msra.mxu0 %v115
    %2522 = vmatprep.subr.mxu0 0.0
    %2523 = vmatpush1.msra.mxu0 0.0
    %2524 = vmatprep.subr.mxu0 0.0
    %2525 = vmatpush1.msra.mxu0 0.0
    %2526 = vmatprep.subr.mxu0 0.0
    %2527 = vmatpush1.msra.mxu0 0.0
    %2528 = vmatprep.subr.mxu0 0.0
    %2529 = vmatpush1.msra.mxu0 0.0
    %2530 = vmatprep.subr.mxu0 0.0
    %2531 = vmatpush1.msra.mxu0 0.0
    %2532 = vmatprep.subr.mxu0 0.0
    %2533 = vmatpush1.msra.mxu0 0.0
    %2534 = vmatprep.subr.mxu0 0.0
    %2535 = vmatpush1.msra.mxu0 0.0
    %2536 = vmatprep.subr.mxu0 0.0
    %2537 = vmatpush1.msra.mxu0 0.0
    %2538 = vmatprep.subr.mxu0 0.0
    %2539 = vmatpush1.msra.mxu0 0.0
    %2540 = vmatprep.subr.mxu0 0.0
    %2541 = vmatpush1.msra.mxu0 0.0
    %2542 = vmatprep.subr.mxu0 0.0
    %2543 = vmatpush1.msra.mxu0 0.0
    %2544 = vmatprep.subr.mxu0 0.0
    %2545 = vmatpush1.msra.mxu0 0.0
    %2546 = vmatprep.subr.mxu0 0.0
    %2547 = vmatpush1.msra.mxu0 0.0
    %2548 = vmatprep.subr.mxu0 0.0
    %2549 = vmatpush1.msra.mxu0 0.0
    %2550 = vmatprep.subr.mxu0 0.0
    %2551 = vmatpush1.msra.mxu0 0.0
    %2552 = vmatprep.subr.mxu0 0.0
    %2553 = vmatpush1.msra.mxu0 0.0
    %2554 = vmatprep.mubr.f32.mxu0 0.0
    %2555 = vmatmul.mubr.f32.gmra.mrb[0].mxu0 %v2484
    %v2556 = vpop.f32.mrb[0].mxu0
    %v2557 = vadd.f32 0.0, %v2556
    %v2558 = vpop.f32.mrb[0].mxu0
    %2559 = vdwg.mxu0
    %v2560 = vmul.f32 %v2489, %v2557
    %v2561 = vsub.f32 %v2410, %v2560
    %2562 = vst [vmem:[#allocation2] sm:$0xff] %v2561
    %2563 = vst [vmem:[#allocation3] sm:$0xff] %v2333
    // Predicated region
    $region46: #{tpu_custom_call.1} parent=1 // pred_check
      _
    $region47: #{tpu_custom_call.1} parent=1 // pred_check_branch
      %2565 = sbr.rel (0) target = $region49
    $region48: #{tpu_custom_call.1} parent=1 // pred_region
      %s2567 = ssub.s32 1024, 1024
      %2568 = vsyncadd [#allocation6], %s2567
      %s2569 = sshll.u32 [#allocation12], 4
      %s2570 = int_to_ptr.vmem [resolvable:$true] %s2569
      %2575 = dma.vmem_to_hbm [thread:$0]  %s2570, 1024, %s6, [#allocation6], 128, 128, 8
    $region49: #{tpu_custom_call.1} parent=1 // pred_fallthru
      _
    // Predicated region
    $region50: #{tpu_custom_call.1} parent=1 // pred_check
      _
    $region51: #{tpu_custom_call.1} parent=1 // pred_check_branch
      %2577 = sbr.rel (0) target = $region53
    $region52: #{tpu_custom_call.1} parent=1 // pred_region
      %2578 = dma.done [#allocation6], 1024
    $region53: #{tpu_custom_call.1} parent=1 // pred_fallthru
      _
    %2579 = vsyncpa [#allocation5], 1
    %2580 = vsyncpa [#allocation8], 1
    %2581 = vsyncpa [#allocation11], 1
    %2582 = vsyncpa [#allocation6], 1

</llo_original>
